<compile_context>
chip_gen: v5e
topology: v5e:2x2
jax: 0.10.0
libtpu: 0.0.40
codegen_flags: <defaults>
</compile_context>

<pallas_src>
import jax
import jax.numpy as jnp
from jax import lax
from jax.experimental import pallas as pl
from jax.experimental.pallas import tpu as pltpu

_TILE_ROWS = 256          # rows gathered per grid step (VMEM-resident path)
_DMA_TILE_ROWS = 128      # rows gathered per grid step (HBM row-DMA path)
_MIN_PALLAS_ROWS = 64     # below this a plain XLA gather beats any Pallas launch
_MAX_ROWS_PER_CALL = 131072  # flat i32 indices live in SMEM; bound per-call size
_ONEHOT_MAX_VOCAB = 512   # one-hot MXU gather only pays off for small vocabs


def _round_up(x, m):
    return ((x + m - 1) // m) * m


def _vmem_capacity_bytes():
    """Generation-aware VMEM capacity (128 MiB v5e/v6e, 64 MiB/TC v7x)."""
    try:
        return int(pltpu.get_tpu_info().vmem_capacity_bytes)
    except Exception:
        return 64 * 1024 * 1024  # conservative default (v7x per-TensorCore)


# --------------------------------------------------------------------------
# Kernels
# --------------------------------------------------------------------------
def _make_resident_gather_kernel(rows):
    """Fast path: table VMEM-resident; gather `rows` rows per grid step."""
    n_groups = rows // 8

    def kernel(idx_ref, emb_ref, out_ref):
        # idx_ref: (total_pad,) int32 in SMEM (scalar prefetch)
        # emb_ref: (V, D) VMEM-resident table (constant block index -> one DMA)
        # out_ref: (rows, D) output tile (lane-dense; D is the full last dim)
        base = pl.program_id(0) * rows
        for g in range(n_groups):           # static unroll over 8-row groups
            rows8 = []
            for r in range(8):
                row_idx = idx_ref[base + g * 8 + r]           # SMEM scalar read
                rows8.append(emb_ref[pl.ds(row_idx, 1), :])   # (1, D) row read
            tile = jnp.concatenate(rows8, axis=0)             # (8, D) full tile
            # f32 tanh on the EUP (no-op cast for f32 tables; bf16 tables could
            # run tanh natively in bf16 on v6e/v7x -- minor, kept in f32).
            out_ref[pl.ds(g * 8, 8), :] = jnp.tanh(
                tile.astype(jnp.float32)).astype(out_ref.dtype)
        # NOTE: if D is not a multiple of 128 the stores become masked vst.msk;
        # fold rows into the lane axis in that case for full lane density.

    return kernel


def _make_onehot_gather_kernel(rows, vocab):
    """Vectorized gather via a one-hot (rows, V) @ (V, D) MXU matmul.

    Only used when the table dtype is MXU-native (bf16) and V is small, so the
    gather is exact and the iota/compare cost stays negligible.
    """

    def kernel(idx_ref, emb_ref, out_ref):
        idx = idx_ref[...]                                          # (rows, 1)
        iota = lax.broadcasted_iota(jnp.int32, (rows, vocab), 1)    # (rows, V)
        onehot = (iota == idx).astype(emb_ref.dtype)                # exact 0/1
        tile = jnp.dot(onehot, emb_ref[...],
                       preferred_element_type=jnp.float32)          # MXU gather
        out_ref[...] = jnp.tanh(tile).astype(out_ref.dtype)

    return kernel


def _make_dma_gather_kernel(rows):
    """Fallback: table stays in HBM; batched, double-buffered row DMAs."""

    def kernel(idx_ref, emb_hbm, out_ref, buf, sems):
        # idx_ref: (total_pad,) int32 in SMEM; emb_hbm: (V, D) in HBM (pl.ANY)
        # buf:  (2, rows, D) VMEM double buffer;  sems: (2, rows) DMA semaphores
        i = pl.program_id(0)
        n = pl.num_programs(0)
        slot = lax.rem(i, 2)

        def issue(step, s):
            base = step * rows
            for r in range(rows):
                pltpu.make_async_copy(
                    emb_hbm.at[pl.ds(idx_ref[base + r], 1), :],
                    buf.at[s, pl.ds(r, 1), :],
                    sems.at[s, r],
                ).start()

        @pl.when(i == 0)
        def _():
            issue(0, 0)          # prime slot 0 on the first step

        # Prefetch next step's rows into the other slot BEFORE any .wait()
        # (SMEM reads issued before waits keep sst->sld forwarding).
        @pl.when(i + 1 < n)
        def _():
            issue(i + 1, 1 - slot)

        for r in range(rows):    # wait for the current slot's row DMAs
            pltpu.make_async_copy(
                emb_hbm.at[pl.ds(0, 1), :],
                buf.at[slot, pl.ds(r, 1), :],
                sems.at[slot, r],
            ).wait()

        out_ref[...] = jnp.tanh(
            buf[slot].astype(jnp.float32)).astype(out_ref.dtype)

    return kernel


# --------------------------------------------------------------------------
# Wrapper
# --------------------------------------------------------------------------
def _gather_tanh_chunk(embeddings, idx, total):
    """One pallas_call over a clamped index chunk of length `total`."""
    V, D = embeddings.shape
    dtype = embeddings.dtype
    itemsize = int(jnp.dtype(dtype).itemsize)
    capacity = _vmem_capacity_bytes()
    table_bytes = V * D * itemsize

    # Resident budget assumes worst-case 2x buffering of the table plus the
    # double-buffered output tile (~51 MiB on v5e/v6e, ~25 MiB on v7x).
    # pl.Buffered(1) on the table spec could halve that footprint but is not
    # relied upon here for portability of the top-level pipeline.
    resident = table_bytes <= int(0.4 * capacity)

    rows = _TILE_ROWS if resident else _DMA_TILE_ROWS
    if total < rows:
        rows = max(8, _round_up(total, 8))
    total_pad = _round_up(total, rows)
    n_steps = total_pad // rows

    if total_pad != total:
        idx = jnp.pad(idx, (0, total_pad - total))   # pad rows gather index 0

    out_shape = jax.ShapeDtypeStruct((total_pad, D), dtype)
    cost = pl.CostEstimate(
        flops=0,
        transcendentals=total_pad * D,
        bytes_accessed=table_bytes + total_pad * 4 + total_pad * D * itemsize,
    )

    out_tile_bytes = rows * D * max(itemsize, 4)
    if resident:
        need = 2 * table_bytes + 2 * out_tile_bytes + (2 << 20)
    else:
        need = 2 * (2 * out_tile_bytes) + (4 << 20)
    vmem_limit = int(min(max(need, 16 << 20), capacity - (2 << 20)))

    grid_sem = ("parallel" if n_steps >= 4 else "arbitrary",)

    if resident and V <= _ONEHOT_MAX_VOCAB and dtype == jnp.bfloat16:
        # Vectorized one-hot MXU gather (exact only for MXU-native bf16 tables).
        out = pl.pallas_call(
            _make_onehot_gather_kernel(rows, V),
            out_shape=out_shape,
            grid_spec=pltpu.PrefetchScalarGridSpec(
                num_scalar_prefetch=0,
                grid=(n_steps,),
                in_specs=[
                    pl.BlockSpec((rows, 1), lambda i: (i, 0)),     # step indices
                    pl.BlockSpec((V, D), lambda i: (0, 0)),        # resident table
                ],
                out_specs=pl.BlockSpec((rows, D), lambda i: (i, 0)),
            ),
            compiler_params=pltpu.CompilerParams(
                dimension_semantics=grid_sem,
                vmem_limit_bytes=vmem_limit,
            ),
            cost_estimate=cost,
        )(idx.reshape(total_pad, 1), embeddings)
    elif resident:
        # Exact sublane gather from the VMEM-resident table, 256 rows/step.
        out = pl.pallas_call(
            _make_resident_gather_kernel(rows),
            out_shape=out_shape,
            grid_spec=pltpu.PrefetchScalarGridSpec(
                num_scalar_prefetch=1,                             # indices -> SMEM
                grid=(n_steps,),
                in_specs=[pl.BlockSpec((V, D), lambda i, idx_ref: (0, 0))],
                out_specs=pl.BlockSpec((rows, D), lambda i, idx_ref: (i, 0)),
            ),
            compiler_params=pltpu.CompilerParams(
                dimension_semantics=grid_sem,
                vmem_limit_bytes=vmem_limit,
            ),
            cost_estimate=cost,
        )(idx, embeddings)
    else:
        # Table too large for VMEM: double-buffered batched row-DMA gather.
        out = pl.pallas_call(
            _make_dma_gather_kernel(rows),
            out_shape=out_shape,
            grid_spec=pltpu.PrefetchScalarGridSpec(
                num_scalar_prefetch=1,
                grid=(n_steps,),
                in_specs=[pl.BlockSpec(memory_space=pl.ANY)],      # raw HBM ref
                out_specs=pl.BlockSpec((rows, D), lambda i, idx_ref: (i, 0)),
                scratch_shapes=[
                    pltpu.VMEM((2, rows, D), dtype),
                    pltpu.SemaphoreType.DMA((2, rows)),
                ],
            ),
            compiler_params=pltpu.CompilerParams(
                dimension_semantics=("arbitrary",),  # slot reuse couples steps
                vmem_limit_bytes=vmem_limit,
            ),
            cost_estimate=cost,
        )(idx, embeddings)

    return out[:total] if total_pad != total else out


def gather_tanh(embeddings: jax.Array, flat_idx: jax.Array) -> jax.Array:
    """Return tanh(embeddings[flat_idx]) as a (len(flat_idx), D) array."""
    V, _ = embeddings.shape
    total = int(flat_idx.shape[0])
    # PyTorch's index_select raises on OOB; TPU block DMAs are unchecked, so we
    # clamp instead (documented semantic difference).
    idx = jnp.clip(flat_idx.astype(jnp.int32), 0, V - 1)

    if total < _MIN_PALLAS_ROWS:
        # A Pallas launch cannot beat a plain XLA gather for a handful of rows.
        return jnp.tanh(embeddings[idx])

    if total > _MAX_ROWS_PER_CALL:
        # Keep the scalar-prefetched index vector within SMEM limits.
        chunks = []
        for s in range(0, total, _MAX_ROWS_PER_CALL):
            e = min(s + _MAX_ROWS_PER_CALL, total)
            chunks.append(_gather_tanh_chunk(embeddings, idx[s:e], e - s))
        return jnp.concatenate(chunks, axis=0)

    return _gather_tanh_chunk(embeddings, idx, total)


# --------------------------------------------------------------------------
# Model
# --------------------------------------------------------------------------
class ModelPallas:
    """JAX/Pallas port of the PyTorch Model."""

    def __init__(self, emb_size, classes_num, key):
        k_emb, k_w, k_b = jax.random.split(key, 3)
        # nn.Parameter(torch.randn(*emb_size))
        self.embeddings = jax.random.normal(k_emb, emb_size, dtype=jnp.float32)
        # nn.Linear(emb_size[1], classes_num)  (unused in forward, kept for parity)
        bound = 1.0 / (emb_size[1] ** 0.5)
        self.fc_w = jax.random.uniform(
            k_w, (classes_num, emb_size[1]), minval=-bound, maxval=bound)
        self.fc_b = jax.random.uniform(
            k_b, (classes_num,), minval=-bound, maxval=bound)

    def forward(self, inputs):
        # inputs: list of int32 index vectors, each of shape (N,)
        num_inputs = len(inputs)
        n = inputs[0].shape[0]

        # Interleave so row (t*num_inputs + j) == tanh(emb[inputs[j][t]]), i.e.
        # the kernel output is already in torch.stack(dim=1) memory order and
        # the (N, num_inputs, D) result is a free reshape (no extra HBM pass).
        idx_stacked = jnp.stack(
            [i.astype(jnp.int32) for i in inputs], axis=1).reshape(-1)

        gathered = gather_tanh(self.embeddings, idx_stacked)   # (n*num_inputs, D)
        emb_tensor = gathered.reshape(n, num_inputs, -1)        # free reshape
        emb_list = [emb_tensor[:, j, :] for j in range(num_inputs)]
        return emb_list, emb_tensor

    def feed_fc(self, x):
        # plain-JAX helper (not part of forward's hot path)
        out = x @ self.fc_w.T + self.fc_b
        return jax.nn.log_softmax(out, axis=1)


if __name__ == "__main__":
    key = jax.random.PRNGKey(0)
    k_model, k_i0, k_i1 = jax.random.split(key, 3)

    VOCAB, EMB_DIM, CLASSES = 1000, 128, 10
    N = 512  # indices per input tensor -> 1024 gathered rows, 4 grid steps of 256

    model = ModelPallas((VOCAB, EMB_DIM), CLASSES, k_model)

    inp0 = jax.random.randint(k_i0, (N,), 0, VOCAB, dtype=jnp.int32)
    inp1 = jax.random.randint(k_i1, (N,), 0, VOCAB, dtype=jnp.int32)
    inputs = [inp0, inp1]

    emb_list, emb_tensor = model.forward(inputs)
    emb_tensor = jax.block_until_ready(emb_tensor)

    # Reference check against plain-JAX gather + tanh.
    ref_list = [jnp.tanh(model.embeddings[i]) for i in inputs]
    ref_tensor = jnp.stack(ref_list, axis=1)
    assert emb_tensor.shape == (N, len(inputs), EMB_DIM)
    assert jnp.allclose(emb_tensor, ref_tensor, atol=1e-5, rtol=1e-5)
    for got, ref in zip(emb_list, ref_list):
        assert jnp.allclose(got, ref, atol=1e-5, rtol=1e-5)

    print("KERNEL_OK")
</pallas_src>

<mosaic_0001>
module attributes {stable_mosaic.version = 11 : i64} {
  func.func @kernel(%arg0: i32, %arg1: memref<1024xi32, #tpu.memory_space<smem>>, %arg2: memref<1000x128xf32, #tpu.memory_space<vmem>>, %arg3: memref<256x128xf32, #tpu.memory_space<vmem>>) attributes {dimension_semantics = [#tpu.dimension_semantics<parallel>], iteration_bounds = array<i64: 4>, scalar_prefetch = 1 : i64, scratch_operands = 0 : i64, tpu.core_type = #tpu.core_type<tc>, window_params = [{pipeline_mode = #tpu.pipeline_mode<synchronous>, transform_indices = @transform_0, window_bounds = array<i64: 1000, 128>}, {transform_indices = @transform_1, window_bounds = array<i64: 256, 128>}]} {
    %c256_i32 = arith.constant 256 : i32
    %0 = arith.muli %arg0, %c256_i32 : i32
    %c0_i32 = arith.constant 0 : i32
    %1 = arith.addi %0, %c0_i32 : i32
    %c0_i32_0 = arith.constant 0 : i32
    %2 = arith.addi %1, %c0_i32_0 : i32
    %3 = arith.index_cast %2 : i32 to index
    %4 = memref.load %arg1[%3] : memref<1024xi32, #tpu.memory_space<smem>>
    %5 = arith.index_cast %4 : i32 to index
    %c0 = arith.constant 0 : index
    %6 = vector.load %arg2[%5, %c0] : memref<1000x128xf32, #tpu.memory_space<vmem>>, vector<1x128xf32>
    %c0_i32_1 = arith.constant 0 : i32
    %7 = arith.addi %0, %c0_i32_1 : i32
    %c1_i32 = arith.constant 1 : i32
    %8 = arith.addi %7, %c1_i32 : i32
    %9 = arith.index_cast %8 : i32 to index
    %10 = memref.load %arg1[%9] : memref<1024xi32, #tpu.memory_space<smem>>
    %11 = arith.index_cast %10 : i32 to index
    %c0_2 = arith.constant 0 : index
    %12 = vector.load %arg2[%11, %c0_2] : memref<1000x128xf32, #tpu.memory_space<vmem>>, vector<1x128xf32>
    %c0_i32_3 = arith.constant 0 : i32
    %13 = arith.addi %0, %c0_i32_3 : i32
    %c2_i32 = arith.constant 2 : i32
    %14 = arith.addi %13, %c2_i32 : i32
    %15 = arith.index_cast %14 : i32 to index
    %16 = memref.load %arg1[%15] : memref<1024xi32, #tpu.memory_space<smem>>
    %17 = arith.index_cast %16 : i32 to index
    %c0_4 = arith.constant 0 : index
    %18 = vector.load %arg2[%17, %c0_4] : memref<1000x128xf32, #tpu.memory_space<vmem>>, vector<1x128xf32>
    %c0_i32_5 = arith.constant 0 : i32
    %19 = arith.addi %0, %c0_i32_5 : i32
    %c3_i32 = arith.constant 3 : i32
    %20 = arith.addi %19, %c3_i32 : i32
    %21 = arith.index_cast %20 : i32 to index
    %22 = memref.load %arg1[%21] : memref<1024xi32, #tpu.memory_space<smem>>
    %23 = arith.index_cast %22 : i32 to index
    %c0_6 = arith.constant 0 : index
    %24 = vector.load %arg2[%23, %c0_6] : memref<1000x128xf32, #tpu.memory_space<vmem>>, vector<1x128xf32>
    %c0_i32_7 = arith.constant 0 : i32
    %25 = arith.addi %0, %c0_i32_7 : i32
    %c4_i32 = arith.constant 4 : i32
    %26 = arith.addi %25, %c4_i32 : i32
    %27 = arith.index_cast %26 : i32 to index
    %28 = memref.load %arg1[%27] : memref<1024xi32, #tpu.memory_space<smem>>
    %29 = arith.index_cast %28 : i32 to index
    %c0_8 = arith.constant 0 : index
    %30 = vector.load %arg2[%29, %c0_8] : memref<1000x128xf32, #tpu.memory_space<vmem>>, vector<1x128xf32>
    %c0_i32_9 = arith.constant 0 : i32
    %31 = arith.addi %0, %c0_i32_9 : i32
    %c5_i32 = arith.constant 5 : i32
    %32 = arith.addi %31, %c5_i32 : i32
    %33 = arith.index_cast %32 : i32 to index
    %34 = memref.load %arg1[%33] : memref<1024xi32, #tpu.memory_space<smem>>
    %35 = arith.index_cast %34 : i32 to index
    %c0_10 = arith.constant 0 : index
    %36 = vector.load %arg2[%35, %c0_10] : memref<1000x128xf32, #tpu.memory_space<vmem>>, vector<1x128xf32>
    %c0_i32_11 = arith.constant 0 : i32
    %37 = arith.addi %0, %c0_i32_11 : i32
    %c6_i32 = arith.constant 6 : i32
    %38 = arith.addi %37, %c6_i32 : i32
    %39 = arith.index_cast %38 : i32 to index
    %40 = memref.load %arg1[%39] : memref<1024xi32, #tpu.memory_space<smem>>
    %41 = arith.index_cast %40 : i32 to index
    %c0_12 = arith.constant 0 : index
    %42 = vector.load %arg2[%41, %c0_12] : memref<1000x128xf32, #tpu.memory_space<vmem>>, vector<1x128xf32>
    %c0_i32_13 = arith.constant 0 : i32
    %43 = arith.addi %0, %c0_i32_13 : i32
    %c7_i32 = arith.constant 7 : i32
    %44 = arith.addi %43, %c7_i32 : i32
    %45 = arith.index_cast %44 : i32 to index
    %46 = memref.load %arg1[%45] : memref<1024xi32, #tpu.memory_space<smem>>
    %47 = arith.index_cast %46 : i32 to index
    %c0_14 = arith.constant 0 : index
    %48 = vector.load %arg2[%47, %c0_14] : memref<1000x128xf32, #tpu.memory_space<vmem>>, vector<1x128xf32>
    %49 = tpu.concatenate %6, %12, %18, %24, %30, %36, %42, %48 in 0 : vector<1x128xf32>, vector<1x128xf32>, vector<1x128xf32>, vector<1x128xf32>, vector<1x128xf32>, vector<1x128xf32>, vector<1x128xf32>, vector<1x128xf32> -> vector<8x128xf32>
    %50 = math.tanh %49 : vector<8x128xf32>
    %c0_15 = arith.constant 0 : index
    %c0_16 = arith.constant 0 : index
    %51 = vector.load %arg3[%c0_15, %c0_16] : memref<256x128xf32, #tpu.memory_space<vmem>>, vector<8x128xf32>
    tpu.vector_store %arg3[%c0_15, %c0_16], %50 {strides = array<i32>} : memref<256x128xf32, #tpu.memory_space<vmem>>, vector<8x128xf32>,
    %c8_i32 = arith.constant 8 : i32
    %52 = arith.addi %0, %c8_i32 : i32
    %c0_i32_17 = arith.constant 0 : i32
    %53 = arith.addi %52, %c0_i32_17 : i32
    %54 = arith.index_cast %53 : i32 to index
    %55 = memref.load %arg1[%54] : memref<1024xi32, #tpu.memory_space<smem>>
    %56 = arith.index_cast %55 : i32 to index
    %c0_18 = arith.constant 0 : index
    %57 = vector.load %arg2[%56, %c0_18] : memref<1000x128xf32, #tpu.memory_space<vmem>>, vector<1x128xf32>
    %c8_i32_19 = arith.constant 8 : i32
    %58 = arith.addi %0, %c8_i32_19 : i32
    %c1_i32_20 = arith.constant 1 : i32
    %59 = arith.addi %58, %c1_i32_20 : i32
    %60 = arith.index_cast %59 : i32 to index
    %61 = memref.load %arg1[%60] : memref<1024xi32, #tpu.memory_space<smem>>
    %62 = arith.index_cast %61 : i32 to index
    %c0_21 = arith.constant 0 : index
    %63 = vector.load %arg2[%62, %c0_21] : memref<1000x128xf32, #tpu.memory_space<vmem>>, vector<1x128xf32>
    %c8_i32_22 = arith.constant 8 : i32
    %64 = arith.addi %0, %c8_i32_22 : i32
    %c2_i32_23 = arith.constant 2 : i32
    %65 = arith.addi %64, %c2_i32_23 : i32
    %66 = arith.index_cast %65 : i32 to index
    %67 = memref.load %arg1[%66] : memref<1024xi32, #tpu.memory_space<smem>>
    %68 = arith.index_cast %67 : i32 to index
    %c0_24 = arith.constant 0 : index
    %69 = vector.load %arg2[%68, %c0_24] : memref<1000x128xf32, #tpu.memory_space<vmem>>, vector<1x128xf32>
    %c8_i32_25 = arith.constant 8 : i32
    %70 = arith.addi %0, %c8_i32_25 : i32
    %c3_i32_26 = arith.constant 3 : i32
    %71 = arith.addi %70, %c3_i32_26 : i32
    %72 = arith.index_cast %71 : i32 to index
    %73 = memref.load %arg1[%72] : memref<1024xi32, #tpu.memory_space<smem>>
    %74 = arith.index_cast %73 : i32 to index
    %c0_27 = arith.constant 0 : index
    %75 = vector.load %arg2[%74, %c0_27] : memref<1000x128xf32, #tpu.memory_space<vmem>>, vector<1x128xf32>
    %c8_i32_28 = arith.constant 8 : i32
    %76 = arith.addi %0, %c8_i32_28 : i32
    %c4_i32_29 = arith.constant 4 : i32
    %77 = arith.addi %76, %c4_i32_29 : i32
    %78 = arith.index_cast %77 : i32 to index
    %79 = memref.load %arg1[%78] : memref<1024xi32, #tpu.memory_space<smem>>
    %80 = arith.index_cast %79 : i32 to index
    %c0_30 = arith.constant 0 : index
    %81 = vector.load %arg2[%80, %c0_30] : memref<1000x128xf32, #tpu.memory_space<vmem>>, vector<1x128xf32>
    %c8_i32_31 = arith.constant 8 : i32
    %82 = arith.addi %0, %c8_i32_31 : i32
    %c5_i32_32 = arith.constant 5 : i32
    %83 = arith.addi %82, %c5_i32_32 : i32
    %84 = arith.index_cast %83 : i32 to index
    %85 = memref.load %arg1[%84] : memref<1024xi32, #tpu.memory_space<smem>>
    %86 = arith.index_cast %85 : i32 to index
    %c0_33 = arith.constant 0 : index
    %87 = vector.load %arg2[%86, %c0_33] : memref<1000x128xf32, #tpu.memory_space<vmem>>, vector<1x128xf32>
    %c8_i32_34 = arith.constant 8 : i32
    %88 = arith.addi %0, %c8_i32_34 : i32
    %c6_i32_35 = arith.constant 6 : i32
    %89 = arith.addi %88, %c6_i32_35 : i32
    %90 = arith.index_cast %89 : i32 to index
    %91 = memref.load %arg1[%90] : memref<1024xi32, #tpu.memory_space<smem>>
    %92 = arith.index_cast %91 : i32 to index
    %c0_36 = arith.constant 0 : index
    %93 = vector.load %arg2[%92, %c0_36] : memref<1000x128xf32, #tpu.memory_space<vmem>>, vector<1x128xf32>
    %c8_i32_37 = arith.constant 8 : i32
    %94 = arith.addi %0, %c8_i32_37 : i32
    %c7_i32_38 = arith.constant 7 : i32
    %95 = arith.addi %94, %c7_i32_38 : i32
    %96 = arith.index_cast %95 : i32 to index
    %97 = memref.load %arg1[%96] : memref<1024xi32, #tpu.memory_space<smem>>
    %98 = arith.index_cast %97 : i32 to index
    %c0_39 = arith.constant 0 : index
    %99 = vector.load %arg2[%98, %c0_39] : memref<1000x128xf32, #tpu.memory_space<vmem>>, vector<1x128xf32>
    %100 = tpu.concatenate %57, %63, %69, %75, %81, %87, %93, %99 in 0 : vector<1x128xf32>, vector<1x128xf32>, vector<1x128xf32>, vector<1x128xf32>, vector<1x128xf32>, vector<1x128xf32>, vector<1x128xf32>, vector<1x128xf32> -> vector<8x128xf32>
    %101 = math.tanh %100 : vector<8x128xf32>
    %c8 = arith.constant 8 : index
    %c0_40 = arith.constant 0 : index
    %102 = vector.load %arg3[%c8, %c0_40] : memref<256x128xf32, #tpu.memory_space<vmem>>, vector<8x128xf32>
    tpu.vector_store %arg3[%c8, %c0_40], %101 {strides = array<i32>} : memref<256x128xf32, #tpu.memory_space<vmem>>, vector<8x128xf32>,
    %c16_i32 = arith.constant 16 : i32
    %103 = arith.addi %0, %c16_i32 : i32
    %c0_i32_41 = arith.constant 0 : i32
    %104 = arith.addi %103, %c0_i32_41 : i32
    %105 = arith.index_cast %104 : i32 to index
    %106 = memref.load %arg1[%105] : memref<1024xi32, #tpu.memory_space<smem>>
    %107 = arith.index_cast %106 : i32 to index
    %c0_42 = arith.constant 0 : index
    %108 = vector.load %arg2[%107, %c0_42] : memref<1000x128xf32, #tpu.memory_space<vmem>>, vector<1x128xf32>
    %c16_i32_43 = arith.constant 16 : i32
    %109 = arith.addi %0, %c16_i32_43 : i32
    %c1_i32_44 = arith.constant 1 : i32
    %110 = arith.addi %109, %c1_i32_44 : i32
    %111 = arith.index_cast %110 : i32 to index
    %112 = memref.load %arg1[%111] : memref<1024xi32, #tpu.memory_space<smem>>
    %113 = arith.index_cast %112 : i32 to index
    %c0_45 = arith.constant 0 : index
    %114 = vector.load %arg2[%113, %c0_45] : memref<1000x128xf32, #tpu.memory_space<vmem>>, vector<1x128xf32>
    %c16_i32_46 = arith.constant 16 : i32
    %115 = arith.addi %0, %c16_i32_46 : i32
    %c2_i32_47 = arith.constant 2 : i32
    %116 = arith.addi %115, %c2_i32_47 : i32
    %117 = arith.index_cast %116 : i32 to index
    %118 = memref.load %arg1[%117] : memref<1024xi32, #tpu.memory_space<smem>>
    %119 = arith.index_cast %118 : i32 to index
    %c0_48 = arith.constant 0 : index
    %120 = vector.load %arg2[%119, %c0_48] : memref<1000x128xf32, #tpu.memory_space<vmem>>, vector<1x128xf32>
    %c16_i32_49 = arith.constant 16 : i32
    %121 = arith.addi %0, %c16_i32_49 : i32
    %c3_i32_50 = arith.constant 3 : i32
    %122 = arith.addi %121, %c3_i32_50 : i32
    %123 = arith.index_cast %122 : i32 to index
    %124 = memref.load %arg1[%123] : memref<1024xi32, #tpu.memory_space<smem>>
    %125 = arith.index_cast %124 : i32 to index
    %c0_51 = arith.constant 0 : index
    %126 = vector.load %arg2[%125, %c0_51] : memref<1000x128xf32, #tpu.memory_space<vmem>>, vector<1x128xf32>
    %c16_i32_52 = arith.constant 16 : i32
    %127 = arith.addi %0, %c16_i32_52 : i32
    %c4_i32_53 = arith.constant 4 : i32
    %128 = arith.addi %127, %c4_i32_53 : i32
    %129 = arith.index_cast %128 : i32 to index
    %130 = memref.load %arg1[%129] : memref<1024xi32, #tpu.memory_space<smem>>
    %131 = arith.index_cast %130 : i32 to index
    %c0_54 = arith.constant 0 : index
    %132 = vector.load %arg2[%131, %c0_54] : memref<1000x128xf32, #tpu.memory_space<vmem>>, vector<1x128xf32>
    %c16_i32_55 = arith.constant 16 : i32
    %133 = arith.addi %0, %c16_i32_55 : i32
    %c5_i32_56 = arith.constant 5 : i32
    %134 = arith.addi %133, %c5_i32_56 : i32
    %135 = arith.index_cast %134 : i32 to index
    %136 = memref.load %arg1[%135] : memref<1024xi32, #tpu.memory_space<smem>>
    %137 = arith.index_cast %136 : i32 to index
    %c0_57 = arith.constant 0 : index
    %138 = vector.load %arg2[%137, %c0_57] : memref<1000x128xf32, #tpu.memory_space<vmem>>, vector<1x128xf32>
    %c16_i32_58 = arith.constant 16 : i32
    %139 = arith.addi %0, %c16_i32_58 : i32
    %c6_i32_59 = arith.constant 6 : i32
    %140 = arith.addi %139, %c6_i32_59 : i32
    %141 = arith.index_cast %140 : i32 to index
    %142 = memref.load %arg1[%141] : memref<1024xi32, #tpu.memory_space<smem>>
    %143 = arith.index_cast %142 : i32 to index
    %c0_60 = arith.constant 0 : index
    %144 = vector.load %arg2[%143, %c0_60] : memref<1000x128xf32, #tpu.memory_space<vmem>>, vector<1x128xf32>
    %c16_i32_61 = arith.constant 16 : i32
    %145 = arith.addi %0, %c16_i32_61 : i32
    %c7_i32_62 = arith.constant 7 : i32
    %146 = arith.addi %145, %c7_i32_62 : i32
    %147 = arith.index_cast %146 : i32 to index
    %148 = memref.load %arg1[%147] : memref<1024xi32, #tpu.memory_space<smem>>
    %149 = arith.index_cast %148 : i32 to index
    %c0_63 = arith.constant 0 : index
    %150 = vector.load %arg2[%149, %c0_63] : memref<1000x128xf32, #tpu.memory_space<vmem>>, vector<1x128xf32>
    %151 = tpu.concatenate %108, %114, %120, %126, %132, %138, %144, %150 in 0 : vector<1x128xf32>, vector<1x128xf32>, vector<1x128xf32>, vector<1x128xf32>, vector<1x128xf32>, vector<1x128xf32>, vector<1x128xf32>, vector<1x128xf32> -> vector<8x128xf32>
    %152 = math.tanh %151 : vector<8x128xf32>
    %c16 = arith.constant 16 : index
    %c0_64 = arith.constant 0 : index
    %153 = vector.load %arg3[%c16, %c0_64] : memref<256x128xf32, #tpu.memory_space<vmem>>, vector<8x128xf32>
    tpu.vector_store %arg3[%c16, %c0_64], %152 {strides = array<i32>} : memref<256x128xf32, #tpu.memory_space<vmem>>, vector<8x128xf32>,
    %c24_i32 = arith.constant 24 : i32
    %154 = arith.addi %0, %c24_i32 : i32
    %c0_i32_65 = arith.constant 0 : i32
    %155 = arith.addi %154, %c0_i32_65 : i32
    %156 = arith.index_cast %155 : i32 to index
    %157 = memref.load %arg1[%156] : memref<1024xi32, #tpu.memory_space<smem>>
    %158 = arith.index_cast %157 : i32 to index
    %c0_66 = arith.constant 0 : index
    %159 = vector.load %arg2[%158, %c0_66] : memref<1000x128xf32, #tpu.memory_space<vmem>>, vector<1x128xf32>
    %c24_i32_67 = arith.constant 24 : i32
    %160 = arith.addi %0, %c24_i32_67 : i32
    %c1_i32_68 = arith.constant 1 : i32
    %161 = arith.addi %160, %c1_i32_68 : i32
    %162 = arith.index_cast %161 : i32 to index
    %163 = memref.load %arg1[%162] : memref<1024xi32, #tpu.memory_space<smem>>
    %164 = arith.index_cast %163 : i32 to index
    %c0_69 = arith.constant 0 : index
    %165 = vector.load %arg2[%164, %c0_69] : memref<1000x128xf32, #tpu.memory_space<vmem>>, vector<1x128xf32>
    %c24_i32_70 = arith.constant 24 : i32
    %166 = arith.addi %0, %c24_i32_70 : i32
    %c2_i32_71 = arith.constant 2 : i32
    %167 = arith.addi %166, %c2_i32_71 : i32
    %168 = arith.index_cast %167 : i32 to index
    %169 = memref.load %arg1[%168] : memref<1024xi32, #tpu.memory_space<smem>>
    %170 = arith.index_cast %169 : i32 to index
    %c0_72 = arith.constant 0 : index
    %171 = vector.load %arg2[%170, %c0_72] : memref<1000x128xf32, #tpu.memory_space<vmem>>, vector<1x128xf32>
    %c24_i32_73 = arith.constant 24 : i32
    %172 = arith.addi %0, %c24_i32_73 : i32
    %c3_i32_74 = arith.constant 3 : i32
    %173 = arith.addi %172, %c3_i32_74 : i32
    %174 = arith.index_cast %173 : i32 to index
    %175 = memref.load %arg1[%174] : memref<1024xi32, #tpu.memory_space<smem>>
    %176 = arith.index_cast %175 : i32 to index
    %c0_75 = arith.constant 0 : index
    %177 = vector.load %arg2[%176, %c0_75] : memref<1000x128xf32, #tpu.memory_space<vmem>>, vector<1x128xf32>
    %c24_i32_76 = arith.constant 24 : i32
    %178 = arith.addi %0, %c24_i32_76 : i32
    %c4_i32_77 = arith.constant 4 : i32
    %179 = arith.addi %178, %c4_i32_77 : i32
    %180 = arith.index_cast %179 : i32 to index
    %181 = memref.load %arg1[%180] : memref<1024xi32, #tpu.memory_space<smem>>
    %182 = arith.index_cast %181 : i32 to index
    %c0_78 = arith.constant 0 : index
    %183 = vector.load %arg2[%182, %c0_78] : memref<1000x128xf32, #tpu.memory_space<vmem>>, vector<1x128xf32>
    %c24_i32_79 = arith.constant 24 : i32
    %184 = arith.addi %0, %c24_i32_79 : i32
    %c5_i32_80 = arith.constant 5 : i32
    %185 = arith.addi %184, %c5_i32_80 : i32
    %186 = arith.index_cast %185 : i32 to index
    %187 = memref.load %arg1[%186] : memref<1024xi32, #tpu.memory_space<smem>>
    %188 = arith.index_cast %187 : i32 to index
    %c0_81 = arith.constant 0 : index
    %189 = vector.load %arg2[%188, %c0_81] : memref<1000x128xf32, #tpu.memory_space<vmem>>, vector<1x128xf32>
    %c24_i32_82 = arith.constant 24 : i32
    %190 = arith.addi %0, %c24_i32_82 : i32
    %c6_i32_83 = arith.constant 6 : i32
    %191 = arith.addi %190, %c6_i32_83 : i32
    %192 = arith.index_cast %191 : i32 to index
    %193 = memref.load %arg1[%192] : memref<1024xi32, #tpu.memory_space<smem>>
    %194 = arith.index_cast %193 : i32 to index
    %c0_84 = arith.constant 0 : index
    %195 = vector.load %arg2[%194, %c0_84] : memref<1000x128xf32, #tpu.memory_space<vmem>>, vector<1x128xf32>
    %c24_i32_85 = arith.constant 24 : i32
    %196 = arith.addi %0, %c24_i32_85 : i32
    %c7_i32_86 = arith.constant 7 : i32
    %197 = arith.addi %196, %c7_i32_86 : i32
    %198 = arith.index_cast %197 : i32 to index
    %199 = memref.load %arg1[%198] : memref<1024xi32, #tpu.memory_space<smem>>
    %200 = arith.index_cast %199 : i32 to index
    %c0_87 = arith.constant 0 : index
    %201 = vector.load %arg2[%200, %c0_87] : memref<1000x128xf32, #tpu.memory_space<vmem>>, vector<1x128xf32>
    %202 = tpu.concatenate %159, %165, %171, %177, %183, %189, %195, %201 in 0 : vector<1x128xf32>, vector<1x128xf32>, vector<1x128xf32>, vector<1x128xf32>, vector<1x128xf32>, vector<1x128xf32>, vector<1x128xf32>, vector<1x128xf32> -> vector<8x128xf32>
    %203 = math.tanh %202 : vector<8x128xf32>
    %c24 = arith.constant 24 : index
    %c0_88 = arith.constant 0 : index
    %204 = vector.load %arg3[%c24, %c0_88] : memref<256x128xf32, #tpu.memory_space<vmem>>, vector<8x128xf32>
    tpu.vector_store %arg3[%c24, %c0_88], %203 {strides = array<i32>} : memref<256x128xf32, #tpu.memory_space<vmem>>, vector<8x128xf32>,
    %c32_i32 = arith.constant 32 : i32
    %205 = arith.addi %0, %c32_i32 : i32
    %c0_i32_89 = arith.constant 0 : i32
    %206 = arith.addi %205, %c0_i32_89 : i32
    %207 = arith.index_cast %206 : i32 to index
    %208 = memref.load %arg1[%207] : memref<1024xi32, #tpu.memory_space<smem>>
    %209 = arith.index_cast %208 : i32 to index
    %c0_90 = arith.constant 0 : index
    %210 = vector.load %arg2[%209, %c0_90] : memref<1000x128xf32, #tpu.memory_space<vmem>>, vector<1x128xf32>
    %c32_i32_91 = arith.constant 32 : i32
    %211 = arith.addi %0, %c32_i32_91 : i32
    %c1_i32_92 = arith.constant 1 : i32
    %212 = arith.addi %211, %c1_i32_92 : i32
    %213 = arith.index_cast %212 : i32 to index
    %214 = memref.load %arg1[%213] : memref<1024xi32, #tpu.memory_space<smem>>
    %215 = arith.index_cast %214 : i32 to index
    %c0_93 = arith.constant 0 : index
    %216 = vector.load %arg2[%215, %c0_93] : memref<1000x128xf32, #tpu.memory_space<vmem>>, vector<1x128xf32>
    %c32_i32_94 = arith.constant 32 : i32
    %217 = arith.addi %0, %c32_i32_94 : i32
    %c2_i32_95 = arith.constant 2 : i32
    %218 = arith.addi %217, %c2_i32_95 : i32
    %219 = arith.index_cast %218 : i32 to index
    %220 = memref.load %arg1[%219] : memref<1024xi32, #tpu.memory_space<smem>>
    %221 = arith.index_cast %220 : i32 to index
    %c0_96 = arith.constant 0 : index
    %222 = vector.load %arg2[%221, %c0_96] : memref<1000x128xf32, #tpu.memory_space<vmem>>, vector<1x128xf32>
    %c32_i32_97 = arith.constant 32 : i32
    %223 = arith.addi %0, %c32_i32_97 : i32
    %c3_i32_98 = arith.constant 3 : i32
    %224 = arith.addi %223, %c3_i32_98 : i32
    %225 = arith.index_cast %224 : i32 to index
    %226 = memref.load %arg1[%225] : memref<1024xi32, #tpu.memory_space<smem>>
    %227 = arith.index_cast %226 : i32 to index
    %c0_99 = arith.constant 0 : index
    %228 = vector.load %arg2[%227, %c0_99] : memref<1000x128xf32, #tpu.memory_space<vmem>>, vector<1x128xf32>
    %c32_i32_100 = arith.constant 32 : i32
    %229 = arith.addi %0, %c32_i32_100 : i32
    %c4_i32_101 = arith.constant 4 : i32
    %230 = arith.addi %229, %c4_i32_101 : i32
    %231 = arith.index_cast %230 : i32 to index
    %232 = memref.load %arg1[%231] : memref<1024xi32, #tpu.memory_space<smem>>
    %233 = arith.index_cast %232 : i32 to index
    %c0_102 = arith.constant 0 : index
    %234 = vector.load %arg2[%233, %c0_102] : memref<1000x128xf32, #tpu.memory_space<vmem>>, vector<1x128xf32>
    %c32_i32_103 = arith.constant 32 : i32
    %235 = arith.addi %0, %c32_i32_103 : i32
    %c5_i32_104 = arith.constant 5 : i32
    %236 = arith.addi %235, %c5_i32_104 : i32
    %237 = arith.index_cast %236 : i32 to index
    %238 = memref.load %arg1[%237] : memref<1024xi32, #tpu.memory_space<smem>>
    %239 = arith.index_cast %238 : i32 to index
    %c0_105 = arith.constant 0 : index
    %240 = vector.load %arg2[%239, %c0_105] : memref<1000x128xf32, #tpu.memory_space<vmem>>, vector<1x128xf32>
    %c32_i32_106 = arith.constant 32 : i32
    %241 = arith.addi %0, %c32_i32_106 : i32
    %c6_i32_107 = arith.constant 6 : i32
    %242 = arith.addi %241, %c6_i32_107 : i32
    %243 = arith.index_cast %242 : i32 to index
    %244 = memref.load %arg1[%243] : memref<1024xi32, #tpu.memory_space<smem>>
    %245 = arith.index_cast %244 : i32 to index
    %c0_108 = arith.constant 0 : index
    %246 = vector.load %arg2[%245, %c0_108] : memref<1000x128xf32, #tpu.memory_space<vmem>>, vector<1x128xf32>
    %c32_i32_109 = arith.constant 32 : i32
    %247 = arith.addi %0, %c32_i32_109 : i32
    %c7_i32_110 = arith.constant 7 : i32
    %248 = arith.addi %247, %c7_i32_110 : i32
    %249 = arith.index_cast %248 : i32 to index
    %250 = memref.load %arg1[%249] : memref<1024xi32, #tpu.memory_space<smem>>
    %251 = arith.index_cast %250 : i32 to index
    %c0_111 = arith.constant 0 : index
    %252 = vector.load %arg2[%251, %c0_111] : memref<1000x128xf32, #tpu.memory_space<vmem>>, vector<1x128xf32>
    %253 = tpu.concatenate %210, %216, %222, %228, %234, %240, %246, %252 in 0 : vector<1x128xf32>, vector<1x128xf32>, vector<1x128xf32>, vector<1x128xf32>, vector<1x128xf32>, vector<1x128xf32>, vector<1x128xf32>, vector<1x128xf32> -> vector<8x128xf32>
    %254 = math.tanh %253 : vector<8x128xf32>
    %c32 = arith.constant 32 : index
    %c0_112 = arith.constant 0 : index
    %255 = vector.load %arg3[%c32, %c0_112] : memref<256x128xf32, #tpu.memory_space<vmem>>, vector<8x128xf32>
    tpu.vector_store %arg3[%c32, %c0_112], %254 {strides = array<i32>} : memref<256x128xf32, #tpu.memory_space<vmem>>, vector<8x128xf32>,
    %c40_i32 = arith.constant 40 : i32
    %256 = arith.addi %0, %c40_i32 : i32
    %c0_i32_113 = arith.constant 0 : i32
    %257 = arith.addi %256, %c0_i32_113 : i32
    %258 = arith.index_cast %257 : i32 to index
    %259 = memref.load %arg1[%258] : memref<1024xi32, #tpu.memory_space<smem>>
    %260 = arith.index_cast %259 : i32 to index
    %c0_114 = arith.constant 0 : index
    %261 = vector.load %arg2[%260, %c0_114] : memref<1000x128xf32, #tpu.memory_space<vmem>>, vector<1x128xf32>
    %c40_i32_115 = arith.constant 40 : i32
    %262 = arith.addi %0, %c40_i32_115 : i32
    %c1_i32_116 = arith.constant 1 : i32
    %263 = arith.addi %262, %c1_i32_116 : i32
    %264 = arith.index_cast %263 : i32 to index
    %265 = memref.load %arg1[%264] : memref<1024xi32, #tpu.memory_space<smem>>
    %266 = arith.index_cast %265 : i32 to index
    %c0_117 = arith.constant 0 : index
    %267 = vector.load %arg2[%266, %c0_117] : memref<1000x128xf32, #tpu.memory_space<vmem>>, vector<1x128xf32>
    %c40_i32_118 = arith.constant 40 : i32
    %268 = arith.addi %0, %c40_i32_118 : i32
    %c2_i32_119 = arith.constant 2 : i32
    %269 = arith.addi %268, %c2_i32_119 : i32
    %270 = arith.index_cast %269 : i32 to index
    %271 = memref.load %arg1[%270] : memref<1024xi32, #tpu.memory_space<smem>>
    %272 = arith.index_cast %271 : i32 to index
    %c0_120 = arith.constant 0 : index
    %273 = vector.load %arg2[%272, %c0_120] : memref<1000x128xf32, #tpu.memory_space<vmem>>, vector<1x128xf32>
    %c40_i32_121 = arith.constant 40 : i32
    %274 = arith.addi %0, %c40_i32_121 : i32
    %c3_i32_122 = arith.constant 3 : i32
    %275 = arith.addi %274, %c3_i32_122 : i32
    %276 = arith.index_cast %275 : i32 to index
    %277 = memref.load %arg1[%276] : memref<1024xi32, #tpu.memory_space<smem>>
    %278 = arith.index_cast %277 : i32 to index
    %c0_123 = arith.constant 0 : index
    %279 = vector.load %arg2[%278, %c0_123] : memref<1000x128xf32, #tpu.memory_space<vmem>>, vector<1x128xf32>
    %c40_i32_124 = arith.constant 40 : i32
    %280 = arith.addi %0, %c40_i32_124 : i32
    %c4_i32_125 = arith.constant 4 : i32
    %281 = arith.addi %280, %c4_i32_125 : i32
    %282 = arith.index_cast %281 : i32 to index
    %283 = memref.load %arg1[%282] : memref<1024xi32, #tpu.memory_space<smem>>
    %284 = arith.index_cast %283 : i32 to index
    %c0_126 = arith.constant 0 : index
    %285 = vector.load %arg2[%284, %c0_126] : memref<1000x128xf32, #tpu.memory_space<vmem>>, vector<1x128xf32>
    %c40_i32_127 = arith.constant 40 : i32
    %286 = arith.addi %0, %c40_i32_127 : i32
    %c5_i32_128 = arith.constant 5 : i32
    %287 = arith.addi %286, %c5_i32_128 : i32
    %288 = arith.index_cast %287 : i32 to index
    %289 = memref.load %arg1[%288] : memref<1024xi32, #tpu.memory_space<smem>>
    %290 = arith.index_cast %289 : i32 to index
    %c0_129 = arith.constant 0 : index
    %291 = vector.load %arg2[%290, %c0_129] : memref<1000x128xf32, #tpu.memory_space<vmem>>, vector<1x128xf32>
    %c40_i32_130 = arith.constant 40 : i32
    %292 = arith.addi %0, %c40_i32_130 : i32
    %c6_i32_131 = arith.constant 6 : i32
    %293 = arith.addi %292, %c6_i32_131 : i32
    %294 = arith.index_cast %293 : i32 to index
    %295 = memref.load %arg1[%294] : memref<1024xi32, #tpu.memory_space<smem>>
    %296 = arith.index_cast %295 : i32 to index
    %c0_132 = arith.constant 0 : index
    %297 = vector.load %arg2[%296, %c0_132] : memref<1000x128xf32, #tpu.memory_space<vmem>>, vector<1x128xf32>
    %c40_i32_133 = arith.constant 40 : i32
    %298 = arith.addi %0, %c40_i32_133 : i32
    %c7_i32_134 = arith.constant 7 : i32
    %299 = arith.addi %298, %c7_i32_134 : i32
    %300 = arith.index_cast %299 : i32 to index
    %301 = memref.load %arg1[%300] : memref<1024xi32, #tpu.memory_space<smem>>
    %302 = arith.index_cast %301 : i32 to index
    %c0_135 = arith.constant 0 : index
    %303 = vector.load %arg2[%302, %c0_135] : memref<1000x128xf32, #tpu.memory_space<vmem>>, vector<1x128xf32>
    %304 = tpu.concatenate %261, %267, %273, %279, %285, %291, %297, %303 in 0 : vector<1x128xf32>, vector<1x128xf32>, vector<1x128xf32>, vector<1x128xf32>, vector<1x128xf32>, vector<1x128xf32>, vector<1x128xf32>, vector<1x128xf32> -> vector<8x128xf32>
    %305 = math.tanh %304 : vector<8x128xf32>
    %c40 = arith.constant 40 : index
    %c0_136 = arith.constant 0 : index
    %306 = vector.load %arg3[%c40, %c0_136] : memref<256x128xf32, #tpu.memory_space<vmem>>, vector<8x128xf32>
    tpu.vector_store %arg3[%c40, %c0_136], %305 {strides = array<i32>} : memref<256x128xf32, #tpu.memory_space<vmem>>, vector<8x128xf32>,
    %c48_i32 = arith.constant 48 : i32
    %307 = arith.addi %0, %c48_i32 : i32
    %c0_i32_137 = arith.constant 0 : i32
    %308 = arith.addi %307, %c0_i32_137 : i32
    %309 = arith.index_cast %308 : i32 to index
    %310 = memref.load %arg1[%309] : memref<1024xi32, #tpu.memory_space<smem>>
    %311 = arith.index_cast %310 : i32 to index
    %c0_138 = arith.constant 0 : index
    %312 = vector.load %arg2[%311, %c0_138] : memref<1000x128xf32, #tpu.memory_space<vmem>>, vector<1x128xf32>
    %c48_i32_139 = arith.constant 48 : i32
    %313 = arith.addi %0, %c48_i32_139 : i32
    %c1_i32_140 = arith.constant 1 : i32
    %314 = arith.addi %313, %c1_i32_140 : i32
    %315 = arith.index_cast %314 : i32 to index
    %316 = memref.load %arg1[%315] : memref<1024xi32, #tpu.memory_space<smem>>
    %317 = arith.index_cast %316 : i32 to index
    %c0_141 = arith.constant 0 : index
    %318 = vector.load %arg2[%317, %c0_141] : memref<1000x128xf32, #tpu.memory_space<vmem>>, vector<1x128xf32>
    %c48_i32_142 = arith.constant 48 : i32
    %319 = arith.addi %0, %c48_i32_142 : i32
    %c2_i32_143 = arith.constant 2 : i32
    %320 = arith.addi %319, %c2_i32_143 : i32
    %321 = arith.index_cast %320 : i32 to index
    %322 = memref.load %arg1[%321] : memref<1024xi32, #tpu.memory_space<smem>>
    %323 = arith.index_cast %322 : i32 to index
    %c0_144 = arith.constant 0 : index
    %324 = vector.load %arg2[%323, %c0_144] : memref<1000x128xf32, #tpu.memory_space<vmem>>, vector<1x128xf32>
    %c48_i32_145 = arith.constant 48 : i32
    %325 = arith.addi %0, %c48_i32_145 : i32
    %c3_i32_146 = arith.constant 3 : i32
    %326 = arith.addi %325, %c3_i32_146 : i32
    %327 = arith.index_cast %326 : i32 to index
    %328 = memref.load %arg1[%327] : memref<1024xi32, #tpu.memory_space<smem>>
    %329 = arith.index_cast %328 : i32 to index
    %c0_147 = arith.constant 0 : index
    %330 = vector.load %arg2[%329, %c0_147] : memref<1000x128xf32, #tpu.memory_space<vmem>>, vector<1x128xf32>
    %c48_i32_148 = arith.constant 48 : i32
    %331 = arith.addi %0, %c48_i32_148 : i32
    %c4_i32_149 = arith.constant 4 : i32
    %332 = arith.addi %331, %c4_i32_149 : i32
    %333 = arith.index_cast %332 : i32 to index
    %334 = memref.load %arg1[%333] : memref<1024xi32, #tpu.memory_space<smem>>
    %335 = arith.index_cast %334 : i32 to index
    %c0_150 = arith.constant 0 : index
    %336 = vector.load %arg2[%335, %c0_150] : memref<1000x128xf32, #tpu.memory_space<vmem>>, vector<1x128xf32>
    %c48_i32_151 = arith.constant 48 : i32
    %337 = arith.addi %0, %c48_i32_151 : i32
    %c5_i32_152 = arith.constant 5 : i32
    %338 = arith.addi %337, %c5_i32_152 : i32
    %339 = arith.index_cast %338 : i32 to index
    %340 = memref.load %arg1[%339] : memref<1024xi32, #tpu.memory_space<smem>>
    %341 = arith.index_cast %340 : i32 to index
    %c0_153 = arith.constant 0 : index
    %342 = vector.load %arg2[%341, %c0_153] : memref<1000x128xf32, #tpu.memory_space<vmem>>, vector<1x128xf32>
    %c48_i32_154 = arith.constant 48 : i32
    %343 = arith.addi %0, %c48_i32_154 : i32
    %c6_i32_155 = arith.constant 6 : i32
    %344 = arith.addi %343, %c6_i32_155 : i32
    %345 = arith.index_cast %344 : i32 to index
    %346 = memref.load %arg1[%345] : memref<1024xi32, #tpu.memory_space<smem>>
    %347 = arith.index_cast %346 : i32 to index
    %c0_156 = arith.constant 0 : index
    %348 = vector.load %arg2[%347, %c0_156] : memref<1000x128xf32, #tpu.memory_space<vmem>>, vector<1x128xf32>
    %c48_i32_157 = arith.constant 48 : i32
    %349 = arith.addi %0, %c48_i32_157 : i32
    %c7_i32_158 = arith.constant 7 : i32
    %350 = arith.addi %349, %c7_i32_158 : i32
    %351 = arith.index_cast %350 : i32 to index
    %352 = memref.load %arg1[%351] : memref<1024xi32, #tpu.memory_space<smem>>
    %353 = arith.index_cast %352 : i32 to index
    %c0_159 = arith.constant 0 : index
    %354 = vector.load %arg2[%353, %c0_159] : memref<1000x128xf32, #tpu.memory_space<vmem>>, vector<1x128xf32>
    %355 = tpu.concatenate %312, %318, %324, %330, %336, %342, %348, %354 in 0 : vector<1x128xf32>, vector<1x128xf32>, vector<1x128xf32>, vector<1x128xf32>, vector<1x128xf32>, vector<1x128xf32>, vector<1x128xf32>, vector<1x128xf32> -> vector<8x128xf32>
    %356 = math.tanh %355 : vector<8x128xf32>
    %c48 = arith.constant 48 : index
    %c0_160 = arith.constant 0 : index
    %357 = vector.load %arg3[%c48, %c0_160] : memref<256x128xf32, #tpu.memory_space<vmem>>, vector<8x128xf32>
    tpu.vector_store %arg3[%c48, %c0_160], %356 {strides = array<i32>} : memref<256x128xf32, #tpu.memory_space<vmem>>, vector<8x128xf32>,
    %c56_i32 = arith.constant 56 : i32
    %358 = arith.addi %0, %c56_i32 : i32
    %c0_i32_161 = arith.constant 0 : i32
    %359 = arith.addi %358, %c0_i32_161 : i32
    %360 = arith.index_cast %359 : i32 to index
    %361 = memref.load %arg1[%360] : memref<1024xi32, #tpu.memory_space<smem>>
    %362 = arith.index_cast %361 : i32 to index
    %c0_162 = arith.constant 0 : index
    %363 = vector.load %arg2[%362, %c0_162] : memref<1000x128xf32, #tpu.memory_space<vmem>>, vector<1x128xf32>
    %c56_i32_163 = arith.constant 56 : i32
    %364 = arith.addi %0, %c56_i32_163 : i32
    %c1_i32_164 = arith.constant 1 : i32
    %365 = arith.addi %364, %c1_i32_164 : i32
    %366 = arith.index_cast %365 : i32 to index
    %367 = memref.load %arg1[%366] : memref<1024xi32, #tpu.memory_space<smem>>
    %368 = arith.index_cast %367 : i32 to index
    %c0_165 = arith.constant 0 : index
    %369 = vector.load %arg2[%368, %c0_165] : memref<1000x128xf32, #tpu.memory_space<vmem>>, vector<1x128xf32>
    %c56_i32_166 = arith.constant 56 : i32
    %370 = arith.addi %0, %c56_i32_166 : i32
    %c2_i32_167 = arith.constant 2 : i32
    %371 = arith.addi %370, %c2_i32_167 : i32
    %372 = arith.index_cast %371 : i32 to index
    %373 = memref.load %arg1[%372] : memref<1024xi32, #tpu.memory_space<smem>>
    %374 = arith.index_cast %373 : i32 to index
    %c0_168 = arith.constant 0 : index
    %375 = vector.load %arg2[%374, %c0_168] : memref<1000x128xf32, #tpu.memory_space<vmem>>, vector<1x128xf32>
    %c56_i32_169 = arith.constant 56 : i32
    %376 = arith.addi %0, %c56_i32_169 : i32
    %c3_i32_170 = arith.constant 3 : i32
    %377 = arith.addi %376, %c3_i32_170 : i32
    %378 = arith.index_cast %377 : i32 to index
    %379 = memref.load %arg1[%378] : memref<1024xi32, #tpu.memory_space<smem>>
    %380 = arith.index_cast %379 : i32 to index
    %c0_171 = arith.constant 0 : index
    %381 = vector.load %arg2[%380, %c0_171] : memref<1000x128xf32, #tpu.memory_space<vmem>>, vector<1x128xf32>
    %c56_i32_172 = arith.constant 56 : i32
    %382 = arith.addi %0, %c56_i32_172 : i32
    %c4_i32_173 = arith.constant 4 : i32
    %383 = arith.addi %382, %c4_i32_173 : i32
    %384 = arith.index_cast %383 : i32 to index
    %385 = memref.load %arg1[%384] : memref<1024xi32, #tpu.memory_space<smem>>
    %386 = arith.index_cast %385 : i32 to index
    %c0_174 = arith.constant 0 : index
    %387 = vector.load %arg2[%386, %c0_174] : memref<1000x128xf32, #tpu.memory_space<vmem>>, vector<1x128xf32>
    %c56_i32_175 = arith.constant 56 : i32
    %388 = arith.addi %0, %c56_i32_175 : i32
    %c5_i32_176 = arith.constant 5 : i32
    %389 = arith.addi %388, %c5_i32_176 : i32
    %390 = arith.index_cast %389 : i32 to index
    %391 = memref.load %arg1[%390] : memref<1024xi32, #tpu.memory_space<smem>>
    %392 = arith.index_cast %391 : i32 to index
    %c0_177 = arith.constant 0 : index
    %393 = vector.load %arg2[%392, %c0_177] : memref<1000x128xf32, #tpu.memory_space<vmem>>, vector<1x128xf32>
    %c56_i32_178 = arith.constant 56 : i32
    %394 = arith.addi %0, %c56_i32_178 : i32
    %c6_i32_179 = arith.constant 6 : i32
    %395 = arith.addi %394, %c6_i32_179 : i32
    %396 = arith.index_cast %395 : i32 to index
    %397 = memref.load %arg1[%396] : memref<1024xi32, #tpu.memory_space<smem>>
    %398 = arith.index_cast %397 : i32 to index
    %c0_180 = arith.constant 0 : index
    %399 = vector.load %arg2[%398, %c0_180] : memref<1000x128xf32, #tpu.memory_space<vmem>>, vector<1x128xf32>
    %c56_i32_181 = arith.constant 56 : i32
    %400 = arith.addi %0, %c56_i32_181 : i32
    %c7_i32_182 = arith.constant 7 : i32
    %401 = arith.addi %400, %c7_i32_182 : i32
    %402 = arith.index_cast %401 : i32 to index
    %403 = memref.load %arg1[%402] : memref<1024xi32, #tpu.memory_space<smem>>
    %404 = arith.index_cast %403 : i32 to index
    %c0_183 = arith.constant 0 : index
    %405 = vector.load %arg2[%404, %c0_183] : memref<1000x128xf32, #tpu.memory_space<vmem>>, vector<1x128xf32>
    %406 = tpu.concatenate %363, %369, %375, %381, %387, %393, %399, %405 in 0 : vector<1x128xf32>, vector<1x128xf32>, vector<1x128xf32>, vector<1x128xf32>, vector<1x128xf32>, vector<1x128xf32>, vector<1x128xf32>, vector<1x128xf32> -> vector<8x128xf32>
    %407 = math.tanh %406 : vector<8x128xf32>
    %c56 = arith.constant 56 : index
    %c0_184 = arith.constant 0 : index
    %408 = vector.load %arg3[%c56, %c0_184] : memref<256x128xf32, #tpu.memory_space<vmem>>, vector<8x128xf32>
    tpu.vector_store %arg3[%c56, %c0_184], %407 {strides = array<i32>} : memref<256x128xf32, #tpu.memory_space<vmem>>, vector<8x128xf32>,
    %c64_i32 = arith.constant 64 : i32
    %409 = arith.addi %0, %c64_i32 : i32
    %c0_i32_185 = arith.constant 0 : i32
    %410 = arith.addi %409, %c0_i32_185 : i32
    %411 = arith.index_cast %410 : i32 to index
    %412 = memref.load %arg1[%411] : memref<1024xi32, #tpu.memory_space<smem>>
    %413 = arith.index_cast %412 : i32 to index
    %c0_186 = arith.constant 0 : index
    %414 = vector.load %arg2[%413, %c0_186] : memref<1000x128xf32, #tpu.memory_space<vmem>>, vector<1x128xf32>
    %c64_i32_187 = arith.constant 64 : i32
    %415 = arith.addi %0, %c64_i32_187 : i32
    %c1_i32_188 = arith.constant 1 : i32
    %416 = arith.addi %415, %c1_i32_188 : i32
    %417 = arith.index_cast %416 : i32 to index
    %418 = memref.load %arg1[%417] : memref<1024xi32, #tpu.memory_space<smem>>
    %419 = arith.index_cast %418 : i32 to index
    %c0_189 = arith.constant 0 : index
    %420 = vector.load %arg2[%419, %c0_189] : memref<1000x128xf32, #tpu.memory_space<vmem>>, vector<1x128xf32>
    %c64_i32_190 = arith.constant 64 : i32
    %421 = arith.addi %0, %c64_i32_190 : i32
    %c2_i32_191 = arith.constant 2 : i32
    %422 = arith.addi %421, %c2_i32_191 : i32
    %423 = arith.index_cast %422 : i32 to index
    %424 = memref.load %arg1[%423] : memref<1024xi32, #tpu.memory_space<smem>>
    %425 = arith.index_cast %424 : i32 to index
    %c0_192 = arith.constant 0 : index
    %426 = vector.load %arg2[%425, %c0_192] : memref<1000x128xf32, #tpu.memory_space<vmem>>, vector<1x128xf32>
    %c64_i32_193 = arith.constant 64 : i32
    %427 = arith.addi %0, %c64_i32_193 : i32
    %c3_i32_194 = arith.constant 3 : i32
    %428 = arith.addi %427, %c3_i32_194 : i32
    %429 = arith.index_cast %428 : i32 to index
    %430 = memref.load %arg1[%429] : memref<1024xi32, #tpu.memory_space<smem>>
    %431 = arith.index_cast %430 : i32 to index
    %c0_195 = arith.constant 0 : index
    %432 = vector.load %arg2[%431, %c0_195] : memref<1000x128xf32, #tpu.memory_space<vmem>>, vector<1x128xf32>
    %c64_i32_196 = arith.constant 64 : i32
    %433 = arith.addi %0, %c64_i32_196 : i32
    %c4_i32_197 = arith.constant 4 : i32
    %434 = arith.addi %433, %c4_i32_197 : i32
    %435 = arith.index_cast %434 : i32 to index
    %436 = memref.load %arg1[%435] : memref<1024xi32, #tpu.memory_space<smem>>
    %437 = arith.index_cast %436 : i32 to index
    %c0_198 = arith.constant 0 : index
    %438 = vector.load %arg2[%437, %c0_198] : memref<1000x128xf32, #tpu.memory_space<vmem>>, vector<1x128xf32>
    %c64_i32_199 = arith.constant 64 : i32
    %439 = arith.addi %0, %c64_i32_199 : i32
    %c5_i32_200 = arith.constant 5 : i32
    %440 = arith.addi %439, %c5_i32_200 : i32
    %441 = arith.index_cast %440 : i32 to index
    %442 = memref.load %arg1[%441] : memref<1024xi32, #tpu.memory_space<smem>>
    %443 = arith.index_cast %442 : i32 to index
    %c0_201 = arith.constant 0 : index
    %444 = vector.load %arg2[%443, %c0_201] : memref<1000x128xf32, #tpu.memory_space<vmem>>, vector<1x128xf32>
    %c64_i32_202 = arith.constant 64 : i32
    %445 = arith.addi %0, %c64_i32_202 : i32
    %c6_i32_203 = arith.constant 6 : i32
    %446 = arith.addi %445, %c6_i32_203 : i32
    %447 = arith.index_cast %446 : i32 to index
    %448 = memref.load %arg1[%447] : memref<1024xi32, #tpu.memory_space<smem>>
    %449 = arith.index_cast %448 : i32 to index
    %c0_204 = arith.constant 0 : index
    %450 = vector.load %arg2[%449, %c0_204] : memref<1000x128xf32, #tpu.memory_space<vmem>>, vector<1x128xf32>
    %c64_i32_205 = arith.constant 64 : i32
    %451 = arith.addi %0, %c64_i32_205 : i32
    %c7_i32_206 = arith.constant 7 : i32
    %452 = arith.addi %451, %c7_i32_206 : i32
    %453 = arith.index_cast %452 : i32 to index
    %454 = memref.load %arg1[%453] : memref<1024xi32, #tpu.memory_space<smem>>
    %455 = arith.index_cast %454 : i32 to index
    %c0_207 = arith.constant 0 : index
    %456 = vector.load %arg2[%455, %c0_207] : memref<1000x128xf32, #tpu.memory_space<vmem>>, vector<1x128xf32>
    %457 = tpu.concatenate %414, %420, %426, %432, %438, %444, %450, %456 in 0 : vector<1x128xf32>, vector<1x128xf32>, vector<1x128xf32>, vector<1x128xf32>, vector<1x128xf32>, vector<1x128xf32>, vector<1x128xf32>, vector<1x128xf32> -> vector<8x128xf32>
    %458 = math.tanh %457 : vector<8x128xf32>
    %c64 = arith.constant 64 : index
    %c0_208 = arith.constant 0 : index
    %459 = vector.load %arg3[%c64, %c0_208] : memref<256x128xf32, #tpu.memory_space<vmem>>, vector<8x128xf32>
    tpu.vector_store %arg3[%c64, %c0_208], %458 {strides = array<i32>} : memref<256x128xf32, #tpu.memory_space<vmem>>, vector<8x128xf32>,
    %c72_i32 = arith.constant 72 : i32
    %460 = arith.addi %0, %c72_i32 : i32
    %c0_i32_209 = arith.constant 0 : i32
    %461 = arith.addi %460, %c0_i32_209 : i32
    %462 = arith.index_cast %461 : i32 to index
    %463 = memref.load %arg1[%462] : memref<1024xi32, #tpu.memory_space<smem>>
    %464 = arith.index_cast %463 : i32 to index
    %c0_210 = arith.constant 0 : index
    %465 = vector.load %arg2[%464, %c0_210] : memref<1000x128xf32, #tpu.memory_space<vmem>>, vector<1x128xf32>
    %c72_i32_211 = arith.constant 72 : i32
    %466 = arith.addi %0, %c72_i32_211 : i32
    %c1_i32_212 = arith.constant 1 : i32
    %467 = arith.addi %466, %c1_i32_212 : i32
    %468 = arith.index_cast %467 : i32 to index
    %469 = memref.load %arg1[%468] : memref<1024xi32, #tpu.memory_space<smem>>
    %470 = arith.index_cast %469 : i32 to index
    %c0_213 = arith.constant 0 : index
    %471 = vector.load %arg2[%470, %c0_213] : memref<1000x128xf32, #tpu.memory_space<vmem>>, vector<1x128xf32>
    %c72_i32_214 = arith.constant 72 : i32
    %472 = arith.addi %0, %c72_i32_214 : i32
    %c2_i32_215 = arith.constant 2 : i32
    %473 = arith.addi %472, %c2_i32_215 : i32
    %474 = arith.index_cast %473 : i32 to index
    %475 = memref.load %arg1[%474] : memref<1024xi32, #tpu.memory_space<smem>>
    %476 = arith.index_cast %475 : i32 to index
    %c0_216 = arith.constant 0 : index
    %477 = vector.load %arg2[%476, %c0_216] : memref<1000x128xf32, #tpu.memory_space<vmem>>, vector<1x128xf32>
    %c72_i32_217 = arith.constant 72 : i32
    %478 = arith.addi %0, %c72_i32_217 : i32
    %c3_i32_218 = arith.constant 3 : i32
    %479 = arith.addi %478, %c3_i32_218 : i32
    %480 = arith.index_cast %479 : i32 to index
    %481 = memref.load %arg1[%480] : memref<1024xi32, #tpu.memory_space<smem>>
    %482 = arith.index_cast %481 : i32 to index
    %c0_219 = arith.constant 0 : index
    %483 = vector.load %arg2[%482, %c0_219] : memref<1000x128xf32, #tpu.memory_space<vmem>>, vector<1x128xf32>
    %c72_i32_220 = arith.constant 72 : i32
    %484 = arith.addi %0, %c72_i32_220 : i32
    %c4_i32_221 = arith.constant 4 : i32
    %485 = arith.addi %484, %c4_i32_221 : i32
    %486 = arith.index_cast %485 : i32 to index
    %487 = memref.load %arg1[%486] : memref<1024xi32, #tpu.memory_space<smem>>
    %488 = arith.index_cast %487 : i32 to index
    %c0_222 = arith.constant 0 : index
    %489 = vector.load %arg2[%488, %c0_222] : memref<1000x128xf32, #tpu.memory_space<vmem>>, vector<1x128xf32>
    %c72_i32_223 = arith.constant 72 : i32
    %490 = arith.addi %0, %c72_i32_223 : i32
    %c5_i32_224 = arith.constant 5 : i32
    %491 = arith.addi %490, %c5_i32_224 : i32
    %492 = arith.index_cast %491 : i32 to index
    %493 = memref.load %arg1[%492] : memref<1024xi32, #tpu.memory_space<smem>>
    %494 = arith.index_cast %493 : i32 to index
    %c0_225 = arith.constant 0 : index
    %495 = vector.load %arg2[%494, %c0_225] : memref<1000x128xf32, #tpu.memory_space<vmem>>, vector<1x128xf32>
    %c72_i32_226 = arith.constant 72 : i32
    %496 = arith.addi %0, %c72_i32_226 : i32
    %c6_i32_227 = arith.constant 6 : i32
    %497 = arith.addi %496, %c6_i32_227 : i32
    %498 = arith.index_cast %497 : i32 to index
    %499 = memref.load %arg1[%498] : memref<1024xi32, #tpu.memory_space<smem>>
    %500 = arith.index_cast %499 : i32 to index
    %c0_228 = arith.constant 0 : index
    %501 = vector.load %arg2[%500, %c0_228] : memref<1000x128xf32, #tpu.memory_space<vmem>>, vector<1x128xf32>
    %c72_i32_229 = arith.constant 72 : i32
    %502 = arith.addi %0, %c72_i32_229 : i32
    %c7_i32_230 = arith.constant 7 : i32
    %503 = arith.addi %502, %c7_i32_230 : i32
    %504 = arith.index_cast %503 : i32 to index
    %505 = memref.load %arg1[%504] : memref<1024xi32, #tpu.memory_space<smem>>
    %506 = arith.index_cast %505 : i32 to index
    %c0_231 = arith.constant 0 : index
    %507 = vector.load %arg2[%506, %c0_231] : memref<1000x128xf32, #tpu.memory_space<vmem>>, vector<1x128xf32>
    %508 = tpu.concatenate %465, %471, %477, %483, %489, %495, %501, %507 in 0 : vector<1x128xf32>, vector<1x128xf32>, vector<1x128xf32>, vector<1x128xf32>, vector<1x128xf32>, vector<1x128xf32>, vector<1x128xf32>, vector<1x128xf32> -> vector<8x128xf32>
    %509 = math.tanh %508 : vector<8x128xf32>
    %c72 = arith.constant 72 : index
    %c0_232 = arith.constant 0 : index
    %510 = vector.load %arg3[%c72, %c0_232] : memref<256x128xf32, #tpu.memory_space<vmem>>, vector<8x128xf32>
    tpu.vector_store %arg3[%c72, %c0_232], %509 {strides = array<i32>} : memref<256x128xf32, #tpu.memory_space<vmem>>, vector<8x128xf32>,
    %c80_i32 = arith.constant 80 : i32
    %511 = arith.addi %0, %c80_i32 : i32
    %c0_i32_233 = arith.constant 0 : i32
    %512 = arith.addi %511, %c0_i32_233 : i32
    %513 = arith.index_cast %512 : i32 to index
    %514 = memref.load %arg1[%513] : memref<1024xi32, #tpu.memory_space<smem>>
    %515 = arith.index_cast %514 : i32 to index
    %c0_234 = arith.constant 0 : index
    %516 = vector.load %arg2[%515, %c0_234] : memref<1000x128xf32, #tpu.memory_space<vmem>>, vector<1x128xf32>
    %c80_i32_235 = arith.constant 80 : i32
    %517 = arith.addi %0, %c80_i32_235 : i32
    %c1_i32_236 = arith.constant 1 : i32
    %518 = arith.addi %517, %c1_i32_236 : i32
    %519 = arith.index_cast %518 : i32 to index
    %520 = memref.load %arg1[%519] : memref<1024xi32, #tpu.memory_space<smem>>
    %521 = arith.index_cast %520 : i32 to index
    %c0_237 = arith.constant 0 : index
    %522 = vector.load %arg2[%521, %c0_237] : memref<1000x128xf32, #tpu.memory_space<vmem>>, vector<1x128xf32>
    %c80_i32_238 = arith.constant 80 : i32
    %523 = arith.addi %0, %c80_i32_238 : i32
    %c2_i32_239 = arith.constant 2 : i32
    %524 = arith.addi %523, %c2_i32_239 : i32
    %525 = arith.index_cast %524 : i32 to index
    %526 = memref.load %arg1[%525] : memref<1024xi32, #tpu.memory_space<smem>>
    %527 = arith.index_cast %526 : i32 to index
    %c0_240 = arith.constant 0 : index
    %528 = vector.load %arg2[%527, %c0_240] : memref<1000x128xf32, #tpu.memory_space<vmem>>, vector<1x128xf32>
    %c80_i32_241 = arith.constant 80 : i32
    %529 = arith.addi %0, %c80_i32_241 : i32
    %c3_i32_242 = arith.constant 3 : i32
    %530 = arith.addi %529, %c3_i32_242 : i32
    %531 = arith.index_cast %530 : i32 to index
    %532 = memref.load %arg1[%531] : memref<1024xi32, #tpu.memory_space<smem>>
    %533 = arith.index_cast %532 : i32 to index
    %c0_243 = arith.constant 0 : index
    %534 = vector.load %arg2[%533, %c0_243] : memref<1000x128xf32, #tpu.memory_space<vmem>>, vector<1x128xf32>
    %c80_i32_244 = arith.constant 80 : i32
    %535 = arith.addi %0, %c80_i32_244 : i32
    %c4_i32_245 = arith.constant 4 : i32
    %536 = arith.addi %535, %c4_i32_245 : i32
    %537 = arith.index_cast %536 : i32 to index
    %538 = memref.load %arg1[%537] : memref<1024xi32, #tpu.memory_space<smem>>
    %539 = arith.index_cast %538 : i32 to index
    %c0_246 = arith.constant 0 : index
    %540 = vector.load %arg2[%539, %c0_246] : memref<1000x128xf32, #tpu.memory_space<vmem>>, vector<1x128xf32>
    %c80_i32_247 = arith.constant 80 : i32
    %541 = arith.addi %0, %c80_i32_247 : i32
    %c5_i32_248 = arith.constant 5 : i32
    %542 = arith.addi %541, %c5_i32_248 : i32
    %543 = arith.index_cast %542 : i32 to index
    %544 = memref.load %arg1[%543] : memref<1024xi32, #tpu.memory_space<smem>>
    %545 = arith.index_cast %544 : i32 to index
    %c0_249 = arith.constant 0 : index
    %546 = vector.load %arg2[%545, %c0_249] : memref<1000x128xf32, #tpu.memory_space<vmem>>, vector<1x128xf32>
    %c80_i32_250 = arith.constant 80 : i32
    %547 = arith.addi %0, %c80_i32_250 : i32
    %c6_i32_251 = arith.constant 6 : i32
    %548 = arith.addi %547, %c6_i32_251 : i32
    %549 = arith.index_cast %548 : i32 to index
    %550 = memref.load %arg1[%549] : memref<1024xi32, #tpu.memory_space<smem>>
    %551 = arith.index_cast %550 : i32 to index
    %c0_252 = arith.constant 0 : index
    %552 = vector.load %arg2[%551, %c0_252] : memref<1000x128xf32, #tpu.memory_space<vmem>>, vector<1x128xf32>
    %c80_i32_253 = arith.constant 80 : i32
    %553 = arith.addi %0, %c80_i32_253 : i32
    %c7_i32_254 = arith.constant 7 : i32
    %554 = arith.addi %553, %c7_i32_254 : i32
    %555 = arith.index_cast %554 : i32 to index
    %556 = memref.load %arg1[%555] : memref<1024xi32, #tpu.memory_space<smem>>
    %557 = arith.index_cast %556 : i32 to index
    %c0_255 = arith.constant 0 : index
    %558 = vector.load %arg2[%557, %c0_255] : memref<1000x128xf32, #tpu.memory_space<vmem>>, vector<1x128xf32>
    %559 = tpu.concatenate %516, %522, %528, %534, %540, %546, %552, %558 in 0 : vector<1x128xf32>, vector<1x128xf32>, vector<1x128xf32>, vector<1x128xf32>, vector<1x128xf32>, vector<1x128xf32>, vector<1x128xf32>, vector<1x128xf32> -> vector<8x128xf32>
    %560 = math.tanh %559 : vector<8x128xf32>
    %c80 = arith.constant 80 : index
    %c0_256 = arith.constant 0 : index
    %561 = vector.load %arg3[%c80, %c0_256] : memref<256x128xf32, #tpu.memory_space<vmem>>, vector<8x128xf32>
    tpu.vector_store %arg3[%c80, %c0_256], %560 {strides = array<i32>} : memref<256x128xf32, #tpu.memory_space<vmem>>, vector<8x128xf32>,
    %c88_i32 = arith.constant 88 : i32
    %562 = arith.addi %0, %c88_i32 : i32
    %c0_i32_257 = arith.constant 0 : i32
    %563 = arith.addi %562, %c0_i32_257 : i32
    %564 = arith.index_cast %563 : i32 to index
    %565 = memref.load %arg1[%564] : memref<1024xi32, #tpu.memory_space<smem>>
    %566 = arith.index_cast %565 : i32 to index
    %c0_258 = arith.constant 0 : index
    %567 = vector.load %arg2[%566, %c0_258] : memref<1000x128xf32, #tpu.memory_space<vmem>>, vector<1x128xf32>
    %c88_i32_259 = arith.constant 88 : i32
    %568 = arith.addi %0, %c88_i32_259 : i32
    %c1_i32_260 = arith.constant 1 : i32
    %569 = arith.addi %568, %c1_i32_260 : i32
    %570 = arith.index_cast %569 : i32 to index
    %571 = memref.load %arg1[%570] : memref<1024xi32, #tpu.memory_space<smem>>
    %572 = arith.index_cast %571 : i32 to index
    %c0_261 = arith.constant 0 : index
    %573 = vector.load %arg2[%572, %c0_261] : memref<1000x128xf32, #tpu.memory_space<vmem>>, vector<1x128xf32>
    %c88_i32_262 = arith.constant 88 : i32
    %574 = arith.addi %0, %c88_i32_262 : i32
    %c2_i32_263 = arith.constant 2 : i32
    %575 = arith.addi %574, %c2_i32_263 : i32
    %576 = arith.index_cast %575 : i32 to index
    %577 = memref.load %arg1[%576] : memref<1024xi32, #tpu.memory_space<smem>>
    %578 = arith.index_cast %577 : i32 to index
    %c0_264 = arith.constant 0 : index
    %579 = vector.load %arg2[%578, %c0_264] : memref<1000x128xf32, #tpu.memory_space<vmem>>, vector<1x128xf32>
    %c88_i32_265 = arith.constant 88 : i32
    %580 = arith.addi %0, %c88_i32_265 : i32
    %c3_i32_266 = arith.constant 3 : i32
    %581 = arith.addi %580, %c3_i32_266 : i32
    %582 = arith.index_cast %581 : i32 to index
    %583 = memref.load %arg1[%582] : memref<1024xi32, #tpu.memory_space<smem>>
    %584 = arith.index_cast %583 : i32 to index
    %c0_267 = arith.constant 0 : index
    %585 = vector.load %arg2[%584, %c0_267] : memref<1000x128xf32, #tpu.memory_space<vmem>>, vector<1x128xf32>
    %c88_i32_268 = arith.constant 88 : i32
    %586 = arith.addi %0, %c88_i32_268 : i32
    %c4_i32_269 = arith.constant 4 : i32
    %587 = arith.addi %586, %c4_i32_269 : i32
    %588 = arith.index_cast %587 : i32 to index
    %589 = memref.load %arg1[%588] : memref<1024xi32, #tpu.memory_space<smem>>
    %590 = arith.index_cast %589 : i32 to index
    %c0_270 = arith.constant 0 : index
    %591 = vector.load %arg2[%590, %c0_270] : memref<1000x128xf32, #tpu.memory_space<vmem>>, vector<1x128xf32>
    %c88_i32_271 = arith.constant 88 : i32
    %592 = arith.addi %0, %c88_i32_271 : i32
    %c5_i32_272 = arith.constant 5 : i32
    %593 = arith.addi %592, %c5_i32_272 : i32
    %594 = arith.index_cast %593 : i32 to index
    %595 = memref.load %arg1[%594] : memref<1024xi32, #tpu.memory_space<smem>>
    %596 = arith.index_cast %595 : i32 to index
    %c0_273 = arith.constant 0 : index
    %597 = vector.load %arg2[%596, %c0_273] : memref<1000x128xf32, #tpu.memory_space<vmem>>, vector<1x128xf32>
    %c88_i32_274 = arith.constant 88 : i32
    %598 = arith.addi %0, %c88_i32_274 : i32
    %c6_i32_275 = arith.constant 6 : i32
    %599 = arith.addi %598, %c6_i32_275 : i32
    %600 = arith.index_cast %599 : i32 to index
    %601 = memref.load %arg1[%600] : memref<1024xi32, #tpu.memory_space<smem>>
    %602 = arith.index_cast %601 : i32 to index
    %c0_276 = arith.constant 0 : index
    %603 = vector.load %arg2[%602, %c0_276] : memref<1000x128xf32, #tpu.memory_space<vmem>>, vector<1x128xf32>
    %c88_i32_277 = arith.constant 88 : i32
    %604 = arith.addi %0, %c88_i32_277 : i32
    %c7_i32_278 = arith.constant 7 : i32
    %605 = arith.addi %604, %c7_i32_278 : i32
    %606 = arith.index_cast %605 : i32 to index
    %607 = memref.load %arg1[%606] : memref<1024xi32, #tpu.memory_space<smem>>
    %608 = arith.index_cast %607 : i32 to index
    %c0_279 = arith.constant 0 : index
    %609 = vector.load %arg2[%608, %c0_279] : memref<1000x128xf32, #tpu.memory_space<vmem>>, vector<1x128xf32>
    %610 = tpu.concatenate %567, %573, %579, %585, %591, %597, %603, %609 in 0 : vector<1x128xf32>, vector<1x128xf32>, vector<1x128xf32>, vector<1x128xf32>, vector<1x128xf32>, vector<1x128xf32>, vector<1x128xf32>, vector<1x128xf32> -> vector<8x128xf32>
    %611 = math.tanh %610 : vector<8x128xf32>
    %c88 = arith.constant 88 : index
    %c0_280 = arith.constant 0 : index
    %612 = vector.load %arg3[%c88, %c0_280] : memref<256x128xf32, #tpu.memory_space<vmem>>, vector<8x128xf32>
    tpu.vector_store %arg3[%c88, %c0_280], %611 {strides = array<i32>} : memref<256x128xf32, #tpu.memory_space<vmem>>, vector<8x128xf32>,
    %c96_i32 = arith.constant 96 : i32
    %613 = arith.addi %0, %c96_i32 : i32
    %c0_i32_281 = arith.constant 0 : i32
    %614 = arith.addi %613, %c0_i32_281 : i32
    %615 = arith.index_cast %614 : i32 to index
    %616 = memref.load %arg1[%615] : memref<1024xi32, #tpu.memory_space<smem>>
    %617 = arith.index_cast %616 : i32 to index
    %c0_282 = arith.constant 0 : index
    %618 = vector.load %arg2[%617, %c0_282] : memref<1000x128xf32, #tpu.memory_space<vmem>>, vector<1x128xf32>
    %c96_i32_283 = arith.constant 96 : i32
    %619 = arith.addi %0, %c96_i32_283 : i32
    %c1_i32_284 = arith.constant 1 : i32
    %620 = arith.addi %619, %c1_i32_284 : i32
    %621 = arith.index_cast %620 : i32 to index
    %622 = memref.load %arg1[%621] : memref<1024xi32, #tpu.memory_space<smem>>
    %623 = arith.index_cast %622 : i32 to index
    %c0_285 = arith.constant 0 : index
    %624 = vector.load %arg2[%623, %c0_285] : memref<1000x128xf32, #tpu.memory_space<vmem>>, vector<1x128xf32>
    %c96_i32_286 = arith.constant 96 : i32
    %625 = arith.addi %0, %c96_i32_286 : i32
    %c2_i32_287 = arith.constant 2 : i32
    %626 = arith.addi %625, %c2_i32_287 : i32
    %627 = arith.index_cast %626 : i32 to index
    %628 = memref.load %arg1[%627] : memref<1024xi32, #tpu.memory_space<smem>>
    %629 = arith.index_cast %628 : i32 to index
    %c0_288 = arith.constant 0 : index
    %630 = vector.load %arg2[%629, %c0_288] : memref<1000x128xf32, #tpu.memory_space<vmem>>, vector<1x128xf32>
    %c96_i32_289 = arith.constant 96 : i32
    %631 = arith.addi %0, %c96_i32_289 : i32
    %c3_i32_290 = arith.constant 3 : i32
    %632 = arith.addi %631, %c3_i32_290 : i32
    %633 = arith.index_cast %632 : i32 to index
    %634 = memref.load %arg1[%633] : memref<1024xi32, #tpu.memory_space<smem>>
    %635 = arith.index_cast %634 : i32 to index
    %c0_291 = arith.constant 0 : index
    %636 = vector.load %arg2[%635, %c0_291] : memref<1000x128xf32, #tpu.memory_space<vmem>>, vector<1x128xf32>
    %c96_i32_292 = arith.constant 96 : i32
    %637 = arith.addi %0, %c96_i32_292 : i32
    %c4_i32_293 = arith.constant 4 : i32
    %638 = arith.addi %637, %c4_i32_293 : i32
    %639 = arith.index_cast %638 : i32 to index
    %640 = memref.load %arg1[%639] : memref<1024xi32, #tpu.memory_space<smem>>
    %641 = arith.index_cast %640 : i32 to index
    %c0_294 = arith.constant 0 : index
    %642 = vector.load %arg2[%641, %c0_294] : memref<1000x128xf32, #tpu.memory_space<vmem>>, vector<1x128xf32>
    %c96_i32_295 = arith.constant 96 : i32
    %643 = arith.addi %0, %c96_i32_295 : i32
    %c5_i32_296 = arith.constant 5 : i32
    %644 = arith.addi %643, %c5_i32_296 : i32
    %645 = arith.index_cast %644 : i32 to index
    %646 = memref.load %arg1[%645] : memref<1024xi32, #tpu.memory_space<smem>>
    %647 = arith.index_cast %646 : i32 to index
    %c0_297 = arith.constant 0 : index
    %648 = vector.load %arg2[%647, %c0_297] : memref<1000x128xf32, #tpu.memory_space<vmem>>, vector<1x128xf32>
    %c96_i32_298 = arith.constant 96 : i32
    %649 = arith.addi %0, %c96_i32_298 : i32
    %c6_i32_299 = arith.constant 6 : i32
    %650 = arith.addi %649, %c6_i32_299 : i32
    %651 = arith.index_cast %650 : i32 to index
    %652 = memref.load %arg1[%651] : memref<1024xi32, #tpu.memory_space<smem>>
    %653 = arith.index_cast %652 : i32 to index
    %c0_300 = arith.constant 0 : index
    %654 = vector.load %arg2[%653, %c0_300] : memref<1000x128xf32, #tpu.memory_space<vmem>>, vector<1x128xf32>
    %c96_i32_301 = arith.constant 96 : i32
    %655 = arith.addi %0, %c96_i32_301 : i32
    %c7_i32_302 = arith.constant 7 : i32
    %656 = arith.addi %655, %c7_i32_302 : i32
    %657 = arith.index_cast %656 : i32 to index
    %658 = memref.load %arg1[%657] : memref<1024xi32, #tpu.memory_space<smem>>
    %659 = arith.index_cast %658 : i32 to index
    %c0_303 = arith.constant 0 : index
    %660 = vector.load %arg2[%659, %c0_303] : memref<1000x128xf32, #tpu.memory_space<vmem>>, vector<1x128xf32>
    %661 = tpu.concatenate %618, %624, %630, %636, %642, %648, %654, %660 in 0 : vector<1x128xf32>, vector<1x128xf32>, vector<1x128xf32>, vector<1x128xf32>, vector<1x128xf32>, vector<1x128xf32>, vector<1x128xf32>, vector<1x128xf32> -> vector<8x128xf32>
    %662 = math.tanh %661 : vector<8x128xf32>
    %c96 = arith.constant 96 : index
    %c0_304 = arith.constant 0 : index
    %663 = vector.load %arg3[%c96, %c0_304] : memref<256x128xf32, #tpu.memory_space<vmem>>, vector<8x128xf32>
    tpu.vector_store %arg3[%c96, %c0_304], %662 {strides = array<i32>} : memref<256x128xf32, #tpu.memory_space<vmem>>, vector<8x128xf32>,
    %c104_i32 = arith.constant 104 : i32
    %664 = arith.addi %0, %c104_i32 : i32
    %c0_i32_305 = arith.constant 0 : i32
    %665 = arith.addi %664, %c0_i32_305 : i32
    %666 = arith.index_cast %665 : i32 to index
    %667 = memref.load %arg1[%666] : memref<1024xi32, #tpu.memory_space<smem>>
    %668 = arith.index_cast %667 : i32 to index
    %c0_306 = arith.constant 0 : index
    %669 = vector.load %arg2[%668, %c0_306] : memref<1000x128xf32, #tpu.memory_space<vmem>>, vector<1x128xf32>
    %c104_i32_307 = arith.constant 104 : i32
    %670 = arith.addi %0, %c104_i32_307 : i32
    %c1_i32_308 = arith.constant 1 : i32
    %671 = arith.addi %670, %c1_i32_308 : i32
    %672 = arith.index_cast %671 : i32 to index
    %673 = memref.load %arg1[%672] : memref<1024xi32, #tpu.memory_space<smem>>
    %674 = arith.index_cast %673 : i32 to index
    %c0_309 = arith.constant 0 : index
    %675 = vector.load %arg2[%674, %c0_309] : memref<1000x128xf32, #tpu.memory_space<vmem>>, vector<1x128xf32>
    %c104_i32_310 = arith.constant 104 : i32
    %676 = arith.addi %0, %c104_i32_310 : i32
    %c2_i32_311 = arith.constant 2 : i32
    %677 = arith.addi %676, %c2_i32_311 : i32
    %678 = arith.index_cast %677 : i32 to index
    %679 = memref.load %arg1[%678] : memref<1024xi32, #tpu.memory_space<smem>>
    %680 = arith.index_cast %679 : i32 to index
    %c0_312 = arith.constant 0 : index
    %681 = vector.load %arg2[%680, %c0_312] : memref<1000x128xf32, #tpu.memory_space<vmem>>, vector<1x128xf32>
    %c104_i32_313 = arith.constant 104 : i32
    %682 = arith.addi %0, %c104_i32_313 : i32
    %c3_i32_314 = arith.constant 3 : i32
    %683 = arith.addi %682, %c3_i32_314 : i32
    %684 = arith.index_cast %683 : i32 to index
    %685 = memref.load %arg1[%684] : memref<1024xi32, #tpu.memory_space<smem>>
    %686 = arith.index_cast %685 : i32 to index
    %c0_315 = arith.constant 0 : index
    %687 = vector.load %arg2[%686, %c0_315] : memref<1000x128xf32, #tpu.memory_space<vmem>>, vector<1x128xf32>
    %c104_i32_316 = arith.constant 104 : i32
    %688 = arith.addi %0, %c104_i32_316 : i32
    %c4_i32_317 = arith.constant 4 : i32
    %689 = arith.addi %688, %c4_i32_317 : i32
    %690 = arith.index_cast %689 : i32 to index
    %691 = memref.load %arg1[%690] : memref<1024xi32, #tpu.memory_space<smem>>
    %692 = arith.index_cast %691 : i32 to index
    %c0_318 = arith.constant 0 : index
    %693 = vector.load %arg2[%692, %c0_318] : memref<1000x128xf32, #tpu.memory_space<vmem>>, vector<1x128xf32>
    %c104_i32_319 = arith.constant 104 : i32
    %694 = arith.addi %0, %c104_i32_319 : i32
    %c5_i32_320 = arith.constant 5 : i32
    %695 = arith.addi %694, %c5_i32_320 : i32
    %696 = arith.index_cast %695 : i32 to index
    %697 = memref.load %arg1[%696] : memref<1024xi32, #tpu.memory_space<smem>>
    %698 = arith.index_cast %697 : i32 to index
    %c0_321 = arith.constant 0 : index
    %699 = vector.load %arg2[%698, %c0_321] : memref<1000x128xf32, #tpu.memory_space<vmem>>, vector<1x128xf32>
    %c104_i32_322 = arith.constant 104 : i32
    %700 = arith.addi %0, %c104_i32_322 : i32
    %c6_i32_323 = arith.constant 6 : i32
    %701 = arith.addi %700, %c6_i32_323 : i32
    %702 = arith.index_cast %701 : i32 to index
    %703 = memref.load %arg1[%702] : memref<1024xi32, #tpu.memory_space<smem>>
    %704 = arith.index_cast %703 : i32 to index
    %c0_324 = arith.constant 0 : index
    %705 = vector.load %arg2[%704, %c0_324] : memref<1000x128xf32, #tpu.memory_space<vmem>>, vector<1x128xf32>
    %c104_i32_325 = arith.constant 104 : i32
    %706 = arith.addi %0, %c104_i32_325 : i32
    %c7_i32_326 = arith.constant 7 : i32
    %707 = arith.addi %706, %c7_i32_326 : i32
    %708 = arith.index_cast %707 : i32 to index
    %709 = memref.load %arg1[%708] : memref<1024xi32, #tpu.memory_space<smem>>
    %710 = arith.index_cast %709 : i32 to index
    %c0_327 = arith.constant 0 : index
    %711 = vector.load %arg2[%710, %c0_327] : memref<1000x128xf32, #tpu.memory_space<vmem>>, vector<1x128xf32>
    %712 = tpu.concatenate %669, %675, %681, %687, %693, %699, %705, %711 in 0 : vector<1x128xf32>, vector<1x128xf32>, vector<1x128xf32>, vector<1x128xf32>, vector<1x128xf32>, vector<1x128xf32>, vector<1x128xf32>, vector<1x128xf32> -> vector<8x128xf32>
    %713 = math.tanh %712 : vector<8x128xf32>
    %c104 = arith.constant 104 : index
    %c0_328 = arith.constant 0 : index
    %714 = vector.load %arg3[%c104, %c0_328] : memref<256x128xf32, #tpu.memory_space<vmem>>, vector<8x128xf32>
    tpu.vector_store %arg3[%c104, %c0_328], %713 {strides = array<i32>} : memref<256x128xf32, #tpu.memory_space<vmem>>, vector<8x128xf32>,
    %c112_i32 = arith.constant 112 : i32
    %715 = arith.addi %0, %c112_i32 : i32
    %c0_i32_329 = arith.constant 0 : i32
    %716 = arith.addi %715, %c0_i32_329 : i32
    %717 = arith.index_cast %716 : i32 to index
    %718 = memref.load %arg1[%717] : memref<1024xi32, #tpu.memory_space<smem>>
    %719 = arith.index_cast %718 : i32 to index
    %c0_330 = arith.constant 0 : index
    %720 = vector.load %arg2[%719, %c0_330] : memref<1000x128xf32, #tpu.memory_space<vmem>>, vector<1x128xf32>
    %c112_i32_331 = arith.constant 112 : i32
    %721 = arith.addi %0, %c112_i32_331 : i32
    %c1_i32_332 = arith.constant 1 : i32
    %722 = arith.addi %721, %c1_i32_332 : i32
    %723 = arith.index_cast %722 : i32 to index
    %724 = memref.load %arg1[%723] : memref<1024xi32, #tpu.memory_space<smem>>
    %725 = arith.index_cast %724 : i32 to index
    %c0_333 = arith.constant 0 : index
    %726 = vector.load %arg2[%725, %c0_333] : memref<1000x128xf32, #tpu.memory_space<vmem>>, vector<1x128xf32>
    %c112_i32_334 = arith.constant 112 : i32
    %727 = arith.addi %0, %c112_i32_334 : i32
    %c2_i32_335 = arith.constant 2 : i32
    %728 = arith.addi %727, %c2_i32_335 : i32
    %729 = arith.index_cast %728 : i32 to index
    %730 = memref.load %arg1[%729] : memref<1024xi32, #tpu.memory_space<smem>>
    %731 = arith.index_cast %730 : i32 to index
    %c0_336 = arith.constant 0 : index
    %732 = vector.load %arg2[%731, %c0_336] : memref<1000x128xf32, #tpu.memory_space<vmem>>, vector<1x128xf32>
    %c112_i32_337 = arith.constant 112 : i32
    %733 = arith.addi %0, %c112_i32_337 : i32
    %c3_i32_338 = arith.constant 3 : i32
    %734 = arith.addi %733, %c3_i32_338 : i32
    %735 = arith.index_cast %734 : i32 to index
    %736 = memref.load %arg1[%735] : memref<1024xi32, #tpu.memory_space<smem>>
    %737 = arith.index_cast %736 : i32 to index
    %c0_339 = arith.constant 0 : index
    %738 = vector.load %arg2[%737, %c0_339] : memref<1000x128xf32, #tpu.memory_space<vmem>>, vector<1x128xf32>
    %c112_i32_340 = arith.constant 112 : i32
    %739 = arith.addi %0, %c112_i32_340 : i32
    %c4_i32_341 = arith.constant 4 : i32
    %740 = arith.addi %739, %c4_i32_341 : i32
    %741 = arith.index_cast %740 : i32 to index
    %742 = memref.load %arg1[%741] : memref<1024xi32, #tpu.memory_space<smem>>
    %743 = arith.index_cast %742 : i32 to index
    %c0_342 = arith.constant 0 : index
    %744 = vector.load %arg2[%743, %c0_342] : memref<1000x128xf32, #tpu.memory_space<vmem>>, vector<1x128xf32>
    %c112_i32_343 = arith.constant 112 : i32
    %745 = arith.addi %0, %c112_i32_343 : i32
    %c5_i32_344 = arith.constant 5 : i32
    %746 = arith.addi %745, %c5_i32_344 : i32
    %747 = arith.index_cast %746 : i32 to index
    %748 = memref.load %arg1[%747] : memref<1024xi32, #tpu.memory_space<smem>>
    %749 = arith.index_cast %748 : i32 to index
    %c0_345 = arith.constant 0 : index
    %750 = vector.load %arg2[%749, %c0_345] : memref<1000x128xf32, #tpu.memory_space<vmem>>, vector<1x128xf32>
    %c112_i32_346 = arith.constant 112 : i32
    %751 = arith.addi %0, %c112_i32_346 : i32
    %c6_i32_347 = arith.constant 6 : i32
    %752 = arith.addi %751, %c6_i32_347 : i32
    %753 = arith.index_cast %752 : i32 to index
    %754 = memref.load %arg1[%753] : memref<1024xi32, #tpu.memory_space<smem>>
    %755 = arith.index_cast %754 : i32 to index
    %c0_348 = arith.constant 0 : index
    %756 = vector.load %arg2[%755, %c0_348] : memref<1000x128xf32, #tpu.memory_space<vmem>>, vector<1x128xf32>
    %c112_i32_349 = arith.constant 112 : i32
    %757 = arith.addi %0, %c112_i32_349 : i32
    %c7_i32_350 = arith.constant 7 : i32
    %758 = arith.addi %757, %c7_i32_350 : i32
    %759 = arith.index_cast %758 : i32 to index
    %760 = memref.load %arg1[%759] : memref<1024xi32, #tpu.memory_space<smem>>
    %761 = arith.index_cast %760 : i32 to index
    %c0_351 = arith.constant 0 : index
    %762 = vector.load %arg2[%761, %c0_351] : memref<1000x128xf32, #tpu.memory_space<vmem>>, vector<1x128xf32>
    %763 = tpu.concatenate %720, %726, %732, %738, %744, %750, %756, %762 in 0 : vector<1x128xf32>, vector<1x128xf32>, vector<1x128xf32>, vector<1x128xf32>, vector<1x128xf32>, vector<1x128xf32>, vector<1x128xf32>, vector<1x128xf32> -> vector<8x128xf32>
    %764 = math.tanh %763 : vector<8x128xf32>
    %c112 = arith.constant 112 : index
    %c0_352 = arith.constant 0 : index
    %765 = vector.load %arg3[%c112, %c0_352] : memref<256x128xf32, #tpu.memory_space<vmem>>, vector<8x128xf32>
    tpu.vector_store %arg3[%c112, %c0_352], %764 {strides = array<i32>} : memref<256x128xf32, #tpu.memory_space<vmem>>, vector<8x128xf32>,
    %c120_i32 = arith.constant 120 : i32
    %766 = arith.addi %0, %c120_i32 : i32
    %c0_i32_353 = arith.constant 0 : i32
    %767 = arith.addi %766, %c0_i32_353 : i32
    %768 = arith.index_cast %767 : i32 to index
    %769 = memref.load %arg1[%768] : memref<1024xi32, #tpu.memory_space<smem>>
    %770 = arith.index_cast %769 : i32 to index
    %c0_354 = arith.constant 0 : index
    %771 = vector.load %arg2[%770, %c0_354] : memref<1000x128xf32, #tpu.memory_space<vmem>>, vector<1x128xf32>
    %c120_i32_355 = arith.constant 120 : i32
    %772 = arith.addi %0, %c120_i32_355 : i32
    %c1_i32_356 = arith.constant 1 : i32
    %773 = arith.addi %772, %c1_i32_356 : i32
    %774 = arith.index_cast %773 : i32 to index
    %775 = memref.load %arg1[%774] : memref<1024xi32, #tpu.memory_space<smem>>
    %776 = arith.index_cast %775 : i32 to index
    %c0_357 = arith.constant 0 : index
    %777 = vector.load %arg2[%776, %c0_357] : memref<1000x128xf32, #tpu.memory_space<vmem>>, vector<1x128xf32>
    %c120_i32_358 = arith.constant 120 : i32
    %778 = arith.addi %0, %c120_i32_358 : i32
    %c2_i32_359 = arith.constant 2 : i32
    %779 = arith.addi %778, %c2_i32_359 : i32
    %780 = arith.index_cast %779 : i32 to index
    %781 = memref.load %arg1[%780] : memref<1024xi32, #tpu.memory_space<smem>>
    %782 = arith.index_cast %781 : i32 to index
    %c0_360 = arith.constant 0 : index
    %783 = vector.load %arg2[%782, %c0_360] : memref<1000x128xf32, #tpu.memory_space<vmem>>, vector<1x128xf32>
    %c120_i32_361 = arith.constant 120 : i32
    %784 = arith.addi %0, %c120_i32_361 : i32
    %c3_i32_362 = arith.constant 3 : i32
    %785 = arith.addi %784, %c3_i32_362 : i32
    %786 = arith.index_cast %785 : i32 to index
    %787 = memref.load %arg1[%786] : memref<1024xi32, #tpu.memory_space<smem>>
    %788 = arith.index_cast %787 : i32 to index
    %c0_363 = arith.constant 0 : index
    %789 = vector.load %arg2[%788, %c0_363] : memref<1000x128xf32, #tpu.memory_space<vmem>>, vector<1x128xf32>
    %c120_i32_364 = arith.constant 120 : i32
    %790 = arith.addi %0, %c120_i32_364 : i32
    %c4_i32_365 = arith.constant 4 : i32
    %791 = arith.addi %790, %c4_i32_365 : i32
    %792 = arith.index_cast %791 : i32 to index
    %793 = memref.load %arg1[%792] : memref<1024xi32, #tpu.memory_space<smem>>
    %794 = arith.index_cast %793 : i32 to index
    %c0_366 = arith.constant 0 : index
    %795 = vector.load %arg2[%794, %c0_366] : memref<1000x128xf32, #tpu.memory_space<vmem>>, vector<1x128xf32>
    %c120_i32_367 = arith.constant 120 : i32
    %796 = arith.addi %0, %c120_i32_367 : i32
    %c5_i32_368 = arith.constant 5 : i32
    %797 = arith.addi %796, %c5_i32_368 : i32
    %798 = arith.index_cast %797 : i32 to index
    %799 = memref.load %arg1[%798] : memref<1024xi32, #tpu.memory_space<smem>>
    %800 = arith.index_cast %799 : i32 to index
    %c0_369 = arith.constant 0 : index
    %801 = vector.load %arg2[%800, %c0_369] : memref<1000x128xf32, #tpu.memory_space<vmem>>, vector<1x128xf32>
    %c120_i32_370 = arith.constant 120 : i32
    %802 = arith.addi %0, %c120_i32_370 : i32
    %c6_i32_371 = arith.constant 6 : i32
    %803 = arith.addi %802, %c6_i32_371 : i32
    %804 = arith.index_cast %803 : i32 to index
    %805 = memref.load %arg1[%804] : memref<1024xi32, #tpu.memory_space<smem>>
    %806 = arith.index_cast %805 : i32 to index
    %c0_372 = arith.constant 0 : index
    %807 = vector.load %arg2[%806, %c0_372] : memref<1000x128xf32, #tpu.memory_space<vmem>>, vector<1x128xf32>
    %c120_i32_373 = arith.constant 120 : i32
    %808 = arith.addi %0, %c120_i32_373 : i32
    %c7_i32_374 = arith.constant 7 : i32
    %809 = arith.addi %808, %c7_i32_374 : i32
    %810 = arith.index_cast %809 : i32 to index
    %811 = memref.load %arg1[%810] : memref<1024xi32, #tpu.memory_space<smem>>
    %812 = arith.index_cast %811 : i32 to index
    %c0_375 = arith.constant 0 : index
    %813 = vector.load %arg2[%812, %c0_375] : memref<1000x128xf32, #tpu.memory_space<vmem>>, vector<1x128xf32>
    %814 = tpu.concatenate %771, %777, %783, %789, %795, %801, %807, %813 in 0 : vector<1x128xf32>, vector<1x128xf32>, vector<1x128xf32>, vector<1x128xf32>, vector<1x128xf32>, vector<1x128xf32>, vector<1x128xf32>, vector<1x128xf32> -> vector<8x128xf32>
    %815 = math.tanh %814 : vector<8x128xf32>
    %c120 = arith.constant 120 : index
    %c0_376 = arith.constant 0 : index
    %816 = vector.load %arg3[%c120, %c0_376] : memref<256x128xf32, #tpu.memory_space<vmem>>, vector<8x128xf32>
    tpu.vector_store %arg3[%c120, %c0_376], %815 {strides = array<i32>} : memref<256x128xf32, #tpu.memory_space<vmem>>, vector<8x128xf32>,
    %c128_i32 = arith.constant 128 : i32
    %817 = arith.addi %0, %c128_i32 : i32
    %c0_i32_377 = arith.constant 0 : i32
    %818 = arith.addi %817, %c0_i32_377 : i32
    %819 = arith.index_cast %818 : i32 to index
    %820 = memref.load %arg1[%819] : memref<1024xi32, #tpu.memory_space<smem>>
    %821 = arith.index_cast %820 : i32 to index
    %c0_378 = arith.constant 0 : index
    %822 = vector.load %arg2[%821, %c0_378] : memref<1000x128xf32, #tpu.memory_space<vmem>>, vector<1x128xf32>
    %c128_i32_379 = arith.constant 128 : i32
    %823 = arith.addi %0, %c128_i32_379 : i32
    %c1_i32_380 = arith.constant 1 : i32
    %824 = arith.addi %823, %c1_i32_380 : i32
    %825 = arith.index_cast %824 : i32 to index
    %826 = memref.load %arg1[%825] : memref<1024xi32, #tpu.memory_space<smem>>
    %827 = arith.index_cast %826 : i32 to index
    %c0_381 = arith.constant 0 : index
    %828 = vector.load %arg2[%827, %c0_381] : memref<1000x128xf32, #tpu.memory_space<vmem>>, vector<1x128xf32>
    %c128_i32_382 = arith.constant 128 : i32
    %829 = arith.addi %0, %c128_i32_382 : i32
    %c2_i32_383 = arith.constant 2 : i32
    %830 = arith.addi %829, %c2_i32_383 : i32
    %831 = arith.index_cast %830 : i32 to index
    %832 = memref.load %arg1[%831] : memref<1024xi32, #tpu.memory_space<smem>>
    %833 = arith.index_cast %832 : i32 to index
    %c0_384 = arith.constant 0 : index
    %834 = vector.load %arg2[%833, %c0_384] : memref<1000x128xf32, #tpu.memory_space<vmem>>, vector<1x128xf32>
    %c128_i32_385 = arith.constant 128 : i32
    %835 = arith.addi %0, %c128_i32_385 : i32
    %c3_i32_386 = arith.constant 3 : i32
    %836 = arith.addi %835, %c3_i32_386 : i32
    %837 = arith.index_cast %836 : i32 to index
    %838 = memref.load %arg1[%837] : memref<1024xi32, #tpu.memory_space<smem>>
    %839 = arith.index_cast %838 : i32 to index
    %c0_387 = arith.constant 0 : index
    %840 = vector.load %arg2[%839, %c0_387] : memref<1000x128xf32, #tpu.memory_space<vmem>>, vector<1x128xf32>
    %c128_i32_388 = arith.constant 128 : i32
    %841 = arith.addi %0, %c128_i32_388 : i32
    %c4_i32_389 = arith.constant 4 : i32
    %842 = arith.addi %841, %c4_i32_389 : i32
    %843 = arith.index_cast %842 : i32 to index
    %844 = memref.load %arg1[%843] : memref<1024xi32, #tpu.memory_space<smem>>
    %845 = arith.index_cast %844 : i32 to index
    %c0_390 = arith.constant 0 : index
    %846 = vector.load %arg2[%845, %c0_390] : memref<1000x128xf32, #tpu.memory_space<vmem>>, vector<1x128xf32>
    %c128_i32_391 = arith.constant 128 : i32
    %847 = arith.addi %0, %c128_i32_391 : i32
    %c5_i32_392 = arith.constant 5 : i32
    %848 = arith.addi %847, %c5_i32_392 : i32
    %849 = arith.index_cast %848 : i32 to index
    %850 = memref.load %arg1[%849] : memref<1024xi32, #tpu.memory_space<smem>>
    %851 = arith.index_cast %850 : i32 to index
    %c0_393 = arith.constant 0 : index
    %852 = vector.load %arg2[%851, %c0_393] : memref<1000x128xf32, #tpu.memory_space<vmem>>, vector<1x128xf32>
    %c128_i32_394 = arith.constant 128 : i32
    %853 = arith.addi %0, %c128_i32_394 : i32
    %c6_i32_395 = arith.constant 6 : i32
    %854 = arith.addi %853, %c6_i32_395 : i32
    %855 = arith.index_cast %854 : i32 to index
    %856 = memref.load %arg1[%855] : memref<1024xi32, #tpu.memory_space<smem>>
    %857 = arith.index_cast %856 : i32 to index
    %c0_396 = arith.constant 0 : index
    %858 = vector.load %arg2[%857, %c0_396] : memref<1000x128xf32, #tpu.memory_space<vmem>>, vector<1x128xf32>
    %c128_i32_397 = arith.constant 128 : i32
    %859 = arith.addi %0, %c128_i32_397 : i32
    %c7_i32_398 = arith.constant 7 : i32
    %860 = arith.addi %859, %c7_i32_398 : i32
    %861 = arith.index_cast %860 : i32 to index
    %862 = memref.load %arg1[%861] : memref<1024xi32, #tpu.memory_space<smem>>
    %863 = arith.index_cast %862 : i32 to index
    %c0_399 = arith.constant 0 : index
    %864 = vector.load %arg2[%863, %c0_399] : memref<1000x128xf32, #tpu.memory_space<vmem>>, vector<1x128xf32>
    %865 = tpu.concatenate %822, %828, %834, %840, %846, %852, %858, %864 in 0 : vector<1x128xf32>, vector<1x128xf32>, vector<1x128xf32>, vector<1x128xf32>, vector<1x128xf32>, vector<1x128xf32>, vector<1x128xf32>, vector<1x128xf32> -> vector<8x128xf32>
    %866 = math.tanh %865 : vector<8x128xf32>
    %c128 = arith.constant 128 : index
    %c0_400 = arith.constant 0 : index
    %867 = vector.load %arg3[%c128, %c0_400] : memref<256x128xf32, #tpu.memory_space<vmem>>, vector<8x128xf32>
    tpu.vector_store %arg3[%c128, %c0_400], %866 {strides = array<i32>} : memref<256x128xf32, #tpu.memory_space<vmem>>, vector<8x128xf32>,
    %c136_i32 = arith.constant 136 : i32
    %868 = arith.addi %0, %c136_i32 : i32
    %c0_i32_401 = arith.constant 0 : i32
    %869 = arith.addi %868, %c0_i32_401 : i32
    %870 = arith.index_cast %869 : i32 to index
    %871 = memref.load %arg1[%870] : memref<1024xi32, #tpu.memory_space<smem>>
    %872 = arith.index_cast %871 : i32 to index
    %c0_402 = arith.constant 0 : index
    %873 = vector.load %arg2[%872, %c0_402] : memref<1000x128xf32, #tpu.memory_space<vmem>>, vector<1x128xf32>
    %c136_i32_403 = arith.constant 136 : i32
    %874 = arith.addi %0, %c136_i32_403 : i32
    %c1_i32_404 = arith.constant 1 : i32
    %875 = arith.addi %874, %c1_i32_404 : i32
    %876 = arith.index_cast %875 : i32 to index
    %877 = memref.load %arg1[%876] : memref<1024xi32, #tpu.memory_space<smem>>
    %878 = arith.index_cast %877 : i32 to index
    %c0_405 = arith.constant 0 : index
    %879 = vector.load %arg2[%878, %c0_405] : memref<1000x128xf32, #tpu.memory_space<vmem>>, vector<1x128xf32>
    %c136_i32_406 = arith.constant 136 : i32
    %880 = arith.addi %0, %c136_i32_406 : i32
    %c2_i32_407 = arith.constant 2 : i32
    %881 = arith.addi %880, %c2_i32_407 : i32
    %882 = arith.index_cast %881 : i32 to index
    %883 = memref.load %arg1[%882] : memref<1024xi32, #tpu.memory_space<smem>>
    %884 = arith.index_cast %883 : i32 to index
    %c0_408 = arith.constant 0 : index
    %885 = vector.load %arg2[%884, %c0_408] : memref<1000x128xf32, #tpu.memory_space<vmem>>, vector<1x128xf32>
    %c136_i32_409 = arith.constant 136 : i32
    %886 = arith.addi %0, %c136_i32_409 : i32
    %c3_i32_410 = arith.constant 3 : i32
    %887 = arith.addi %886, %c3_i32_410 : i32
    %888 = arith.index_cast %887 : i32 to index
    %889 = memref.load %arg1[%888] : memref<1024xi32, #tpu.memory_space<smem>>
    %890 = arith.index_cast %889 : i32 to index
    %c0_411 = arith.constant 0 : index
    %891 = vector.load %arg2[%890, %c0_411] : memref<1000x128xf32, #tpu.memory_space<vmem>>, vector<1x128xf32>
    %c136_i32_412 = arith.constant 136 : i32
    %892 = arith.addi %0, %c136_i32_412 : i32
    %c4_i32_413 = arith.constant 4 : i32
    %893 = arith.addi %892, %c4_i32_413 : i32
    %894 = arith.index_cast %893 : i32 to index
    %895 = memref.load %arg1[%894] : memref<1024xi32, #tpu.memory_space<smem>>
    %896 = arith.index_cast %895 : i32 to index
    %c0_414 = arith.constant 0 : index
    %897 = vector.load %arg2[%896, %c0_414] : memref<1000x128xf32, #tpu.memory_space<vmem>>, vector<1x128xf32>
    %c136_i32_415 = arith.constant 136 : i32
    %898 = arith.addi %0, %c136_i32_415 : i32
    %c5_i32_416 = arith.constant 5 : i32
    %899 = arith.addi %898, %c5_i32_416 : i32
    %900 = arith.index_cast %899 : i32 to index
    %901 = memref.load %arg1[%900] : memref<1024xi32, #tpu.memory_space<smem>>
    %902 = arith.index_cast %901 : i32 to index
    %c0_417 = arith.constant 0 : index
    %903 = vector.load %arg2[%902, %c0_417] : memref<1000x128xf32, #tpu.memory_space<vmem>>, vector<1x128xf32>
    %c136_i32_418 = arith.constant 136 : i32
    %904 = arith.addi %0, %c136_i32_418 : i32
    %c6_i32_419 = arith.constant 6 : i32
    %905 = arith.addi %904, %c6_i32_419 : i32
    %906 = arith.index_cast %905 : i32 to index
    %907 = memref.load %arg1[%906] : memref<1024xi32, #tpu.memory_space<smem>>
    %908 = arith.index_cast %907 : i32 to index
    %c0_420 = arith.constant 0 : index
    %909 = vector.load %arg2[%908, %c0_420] : memref<1000x128xf32, #tpu.memory_space<vmem>>, vector<1x128xf32>
    %c136_i32_421 = arith.constant 136 : i32
    %910 = arith.addi %0, %c136_i32_421 : i32
    %c7_i32_422 = arith.constant 7 : i32
    %911 = arith.addi %910, %c7_i32_422 : i32
    %912 = arith.index_cast %911 : i32 to index
    %913 = memref.load %arg1[%912] : memref<1024xi32, #tpu.memory_space<smem>>
    %914 = arith.index_cast %913 : i32 to index
    %c0_423 = arith.constant 0 : index
    %915 = vector.load %arg2[%914, %c0_423] : memref<1000x128xf32, #tpu.memory_space<vmem>>, vector<1x128xf32>
    %916 = tpu.concatenate %873, %879, %885, %891, %897, %903, %909, %915 in 0 : vector<1x128xf32>, vector<1x128xf32>, vector<1x128xf32>, vector<1x128xf32>, vector<1x128xf32>, vector<1x128xf32>, vector<1x128xf32>, vector<1x128xf32> -> vector<8x128xf32>
    %917 = math.tanh %916 : vector<8x128xf32>
    %c136 = arith.constant 136 : index
    %c0_424 = arith.constant 0 : index
    %918 = vector.load %arg3[%c136, %c0_424] : memref<256x128xf32, #tpu.memory_space<vmem>>, vector<8x128xf32>
    tpu.vector_store %arg3[%c136, %c0_424], %917 {strides = array<i32>} : memref<256x128xf32, #tpu.memory_space<vmem>>, vector<8x128xf32>,
    %c144_i32 = arith.constant 144 : i32
    %919 = arith.addi %0, %c144_i32 : i32
    %c0_i32_425 = arith.constant 0 : i32
    %920 = arith.addi %919, %c0_i32_425 : i32
    %921 = arith.index_cast %920 : i32 to index
    %922 = memref.load %arg1[%921] : memref<1024xi32, #tpu.memory_space<smem>>
    %923 = arith.index_cast %922 : i32 to index
    %c0_426 = arith.constant 0 : index
    %924 = vector.load %arg2[%923, %c0_426] : memref<1000x128xf32, #tpu.memory_space<vmem>>, vector<1x128xf32>
    %c144_i32_427 = arith.constant 144 : i32
    %925 = arith.addi %0, %c144_i32_427 : i32
    %c1_i32_428 = arith.constant 1 : i32
    %926 = arith.addi %925, %c1_i32_428 : i32
    %927 = arith.index_cast %926 : i32 to index
    %928 = memref.load %arg1[%927] : memref<1024xi32, #tpu.memory_space<smem>>
    %929 = arith.index_cast %928 : i32 to index
    %c0_429 = arith.constant 0 : index
    %930 = vector.load %arg2[%929, %c0_429] : memref<1000x128xf32, #tpu.memory_space<vmem>>, vector<1x128xf32>
    %c144_i32_430 = arith.constant 144 : i32
    %931 = arith.addi %0, %c144_i32_430 : i32
    %c2_i32_431 = arith.constant 2 : i32
    %932 = arith.addi %931, %c2_i32_431 : i32
    %933 = arith.index_cast %932 : i32 to index
    %934 = memref.load %arg1[%933] : memref<1024xi32, #tpu.memory_space<smem>>
    %935 = arith.index_cast %934 : i32 to index
    %c0_432 = arith.constant 0 : index
    %936 = vector.load %arg2[%935, %c0_432] : memref<1000x128xf32, #tpu.memory_space<vmem>>, vector<1x128xf32>
    %c144_i32_433 = arith.constant 144 : i32
    %937 = arith.addi %0, %c144_i32_433 : i32
    %c3_i32_434 = arith.constant 3 : i32
    %938 = arith.addi %937, %c3_i32_434 : i32
    %939 = arith.index_cast %938 : i32 to index
    %940 = memref.load %arg1[%939] : memref<1024xi32, #tpu.memory_space<smem>>
    %941 = arith.index_cast %940 : i32 to index
    %c0_435 = arith.constant 0 : index
    %942 = vector.load %arg2[%941, %c0_435] : memref<1000x128xf32, #tpu.memory_space<vmem>>, vector<1x128xf32>
    %c144_i32_436 = arith.constant 144 : i32
    %943 = arith.addi %0, %c144_i32_436 : i32
    %c4_i32_437 = arith.constant 4 : i32
    %944 = arith.addi %943, %c4_i32_437 : i32
    %945 = arith.index_cast %944 : i32 to index
    %946 = memref.load %arg1[%945] : memref<1024xi32, #tpu.memory_space<smem>>
    %947 = arith.index_cast %946 : i32 to index
    %c0_438 = arith.constant 0 : index
    %948 = vector.load %arg2[%947, %c0_438] : memref<1000x128xf32, #tpu.memory_space<vmem>>, vector<1x128xf32>
    %c144_i32_439 = arith.constant 144 : i32
    %949 = arith.addi %0, %c144_i32_439 : i32
    %c5_i32_440 = arith.constant 5 : i32
    %950 = arith.addi %949, %c5_i32_440 : i32
    %951 = arith.index_cast %950 : i32 to index
    %952 = memref.load %arg1[%951] : memref<1024xi32, #tpu.memory_space<smem>>
    %953 = arith.index_cast %952 : i32 to index
    %c0_441 = arith.constant 0 : index
    %954 = vector.load %arg2[%953, %c0_441] : memref<1000x128xf32, #tpu.memory_space<vmem>>, vector<1x128xf32>
    %c144_i32_442 = arith.constant 144 : i32
    %955 = arith.addi %0, %c144_i32_442 : i32
    %c6_i32_443 = arith.constant 6 : i32
    %956 = arith.addi %955, %c6_i32_443 : i32
    %957 = arith.index_cast %956 : i32 to index
    %958 = memref.load %arg1[%957] : memref<1024xi32, #tpu.memory_space<smem>>
    %959 = arith.index_cast %958 : i32 to index
    %c0_444 = arith.constant 0 : index
    %960 = vector.load %arg2[%959, %c0_444] : memref<1000x128xf32, #tpu.memory_space<vmem>>, vector<1x128xf32>
    %c144_i32_445 = arith.constant 144 : i32
    %961 = arith.addi %0, %c144_i32_445 : i32
    %c7_i32_446 = arith.constant 7 : i32
    %962 = arith.addi %961, %c7_i32_446 : i32
    %963 = arith.index_cast %962 : i32 to index
    %964 = memref.load %arg1[%963] : memref<1024xi32, #tpu.memory_space<smem>>
    %965 = arith.index_cast %964 : i32 to index
    %c0_447 = arith.constant 0 : index
    %966 = vector.load %arg2[%965, %c0_447] : memref<1000x128xf32, #tpu.memory_space<vmem>>, vector<1x128xf32>
    %967 = tpu.concatenate %924, %930, %936, %942, %948, %954, %960, %966 in 0 : vector<1x128xf32>, vector<1x128xf32>, vector<1x128xf32>, vector<1x128xf32>, vector<1x128xf32>, vector<1x128xf32>, vector<1x128xf32>, vector<1x128xf32> -> vector<8x128xf32>
    %968 = math.tanh %967 : vector<8x128xf32>
    %c144 = arith.constant 144 : index
    %c0_448 = arith.constant 0 : index
    %969 = vector.load %arg3[%c144, %c0_448] : memref<256x128xf32, #tpu.memory_space<vmem>>, vector<8x128xf32>
    tpu.vector_store %arg3[%c144, %c0_448], %968 {strides = array<i32>} : memref<256x128xf32, #tpu.memory_space<vmem>>, vector<8x128xf32>,
    %c152_i32 = arith.constant 152 : i32
    %970 = arith.addi %0, %c152_i32 : i32
    %c0_i32_449 = arith.constant 0 : i32
    %971 = arith.addi %970, %c0_i32_449 : i32
    %972 = arith.index_cast %971 : i32 to index
    %973 = memref.load %arg1[%972] : memref<1024xi32, #tpu.memory_space<smem>>
    %974 = arith.index_cast %973 : i32 to index
    %c0_450 = arith.constant 0 : index
    %975 = vector.load %arg2[%974, %c0_450] : memref<1000x128xf32, #tpu.memory_space<vmem>>, vector<1x128xf32>
    %c152_i32_451 = arith.constant 152 : i32
    %976 = arith.addi %0, %c152_i32_451 : i32
    %c1_i32_452 = arith.constant 1 : i32
    %977 = arith.addi %976, %c1_i32_452 : i32
    %978 = arith.index_cast %977 : i32 to index
    %979 = memref.load %arg1[%978] : memref<1024xi32, #tpu.memory_space<smem>>
    %980 = arith.index_cast %979 : i32 to index
    %c0_453 = arith.constant 0 : index
    %981 = vector.load %arg2[%980, %c0_453] : memref<1000x128xf32, #tpu.memory_space<vmem>>, vector<1x128xf32>
    %c152_i32_454 = arith.constant 152 : i32
    %982 = arith.addi %0, %c152_i32_454 : i32
    %c2_i32_455 = arith.constant 2 : i32
    %983 = arith.addi %982, %c2_i32_455 : i32
    %984 = arith.index_cast %983 : i32 to index
    %985 = memref.load %arg1[%984] : memref<1024xi32, #tpu.memory_space<smem>>
    %986 = arith.index_cast %985 : i32 to index
    %c0_456 = arith.constant 0 : index
    %987 = vector.load %arg2[%986, %c0_456] : memref<1000x128xf32, #tpu.memory_space<vmem>>, vector<1x128xf32>
    %c152_i32_457 = arith.constant 152 : i32
    %988 = arith.addi %0, %c152_i32_457 : i32
    %c3_i32_458 = arith.constant 3 : i32
    %989 = arith.addi %988, %c3_i32_458 : i32
    %990 = arith.index_cast %989 : i32 to index
    %991 = memref.load %arg1[%990] : memref<1024xi32, #tpu.memory_space<smem>>
    %992 = arith.index_cast %991 : i32 to index
    %c0_459 = arith.constant 0 : index
    %993 = vector.load %arg2[%992, %c0_459] : memref<1000x128xf32, #tpu.memory_space<vmem>>, vector<1x128xf32>
    %c152_i32_460 = arith.constant 152 : i32
    %994 = arith.addi %0, %c152_i32_460 : i32
    %c4_i32_461 = arith.constant 4 : i32
    %995 = arith.addi %994, %c4_i32_461 : i32
    %996 = arith.index_cast %995 : i32 to index
    %997 = memref.load %arg1[%996] : memref<1024xi32, #tpu.memory_space<smem>>
    %998 = arith.index_cast %997 : i32 to index
    %c0_462 = arith.constant 0 : index
    %999 = vector.load %arg2[%998, %c0_462] : memref<1000x128xf32, #tpu.memory_space<vmem>>, vector<1x128xf32>
    %c152_i32_463 = arith.constant 152 : i32
    %1000 = arith.addi %0, %c152_i32_463 : i32
    %c5_i32_464 = arith.constant 5 : i32
    %1001 = arith.addi %1000, %c5_i32_464 : i32
    %1002 = arith.index_cast %1001 : i32 to index
    %1003 = memref.load %arg1[%1002] : memref<1024xi32, #tpu.memory_space<smem>>
    %1004 = arith.index_cast %1003 : i32 to index
    %c0_465 = arith.constant 0 : index
    %1005 = vector.load %arg2[%1004, %c0_465] : memref<1000x128xf32, #tpu.memory_space<vmem>>, vector<1x128xf32>
    %c152_i32_466 = arith.constant 152 : i32
    %1006 = arith.addi %0, %c152_i32_466 : i32
    %c6_i32_467 = arith.constant 6 : i32
    %1007 = arith.addi %1006, %c6_i32_467 : i32
    %1008 = arith.index_cast %1007 : i32 to index
    %1009 = memref.load %arg1[%1008] : memref<1024xi32, #tpu.memory_space<smem>>
    %1010 = arith.index_cast %1009 : i32 to index
    %c0_468 = arith.constant 0 : index
    %1011 = vector.load %arg2[%1010, %c0_468] : memref<1000x128xf32, #tpu.memory_space<vmem>>, vector<1x128xf32>
    %c152_i32_469 = arith.constant 152 : i32
    %1012 = arith.addi %0, %c152_i32_469 : i32
    %c7_i32_470 = arith.constant 7 : i32
    %1013 = arith.addi %1012, %c7_i32_470 : i32
    %1014 = arith.index_cast %1013 : i32 to index
    %1015 = memref.load %arg1[%1014] : memref<1024xi32, #tpu.memory_space<smem>>
    %1016 = arith.index_cast %1015 : i32 to index
    %c0_471 = arith.constant 0 : index
    %1017 = vector.load %arg2[%1016, %c0_471] : memref<1000x128xf32, #tpu.memory_space<vmem>>, vector<1x128xf32>
    %1018 = tpu.concatenate %975, %981, %987, %993, %999, %1005, %1011, %1017 in 0 : vector<1x128xf32>, vector<1x128xf32>, vector<1x128xf32>, vector<1x128xf32>, vector<1x128xf32>, vector<1x128xf32>, vector<1x128xf32>, vector<1x128xf32> -> vector<8x128xf32>
    %1019 = math.tanh %1018 : vector<8x128xf32>
    %c152 = arith.constant 152 : index
    %c0_472 = arith.constant 0 : index
    %1020 = vector.load %arg3[%c152, %c0_472] : memref<256x128xf32, #tpu.memory_space<vmem>>, vector<8x128xf32>
    tpu.vector_store %arg3[%c152, %c0_472], %1019 {strides = array<i32>} : memref<256x128xf32, #tpu.memory_space<vmem>>, vector<8x128xf32>,
    %c160_i32 = arith.constant 160 : i32
    %1021 = arith.addi %0, %c160_i32 : i32
    %c0_i32_473 = arith.constant 0 : i32
    %1022 = arith.addi %1021, %c0_i32_473 : i32
    %1023 = arith.index_cast %1022 : i32 to index
    %1024 = memref.load %arg1[%1023] : memref<1024xi32, #tpu.memory_space<smem>>
    %1025 = arith.index_cast %1024 : i32 to index
    %c0_474 = arith.constant 0 : index
    %1026 = vector.load %arg2[%1025, %c0_474] : memref<1000x128xf32, #tpu.memory_space<vmem>>, vector<1x128xf32>
    %c160_i32_475 = arith.constant 160 : i32
    %1027 = arith.addi %0, %c160_i32_475 : i32
    %c1_i32_476 = arith.constant 1 : i32
    %1028 = arith.addi %1027, %c1_i32_476 : i32
    %1029 = arith.index_cast %1028 : i32 to index
    %1030 = memref.load %arg1[%1029] : memref<1024xi32, #tpu.memory_space<smem>>
    %1031 = arith.index_cast %1030 : i32 to index
    %c0_477 = arith.constant 0 : index
    %1032 = vector.load %arg2[%1031, %c0_477] : memref<1000x128xf32, #tpu.memory_space<vmem>>, vector<1x128xf32>
    %c160_i32_478 = arith.constant 160 : i32
    %1033 = arith.addi %0, %c160_i32_478 : i32
    %c2_i32_479 = arith.constant 2 : i32
    %1034 = arith.addi %1033, %c2_i32_479 : i32
    %1035 = arith.index_cast %1034 : i32 to index
    %1036 = memref.load %arg1[%1035] : memref<1024xi32, #tpu.memory_space<smem>>
    %1037 = arith.index_cast %1036 : i32 to index
    %c0_480 = arith.constant 0 : index
    %1038 = vector.load %arg2[%1037, %c0_480] : memref<1000x128xf32, #tpu.memory_space<vmem>>, vector<1x128xf32>
    %c160_i32_481 = arith.constant 160 : i32
    %1039 = arith.addi %0, %c160_i32_481 : i32
    %c3_i32_482 = arith.constant 3 : i32
    %1040 = arith.addi %1039, %c3_i32_482 : i32
    %1041 = arith.index_cast %1040 : i32 to index
    %1042 = memref.load %arg1[%1041] : memref<1024xi32, #tpu.memory_space<smem>>
    %1043 = arith.index_cast %1042 : i32 to index
    %c0_483 = arith.constant 0 : index
    %1044 = vector.load %arg2[%1043, %c0_483] : memref<1000x128xf32, #tpu.memory_space<vmem>>, vector<1x128xf32>
    %c160_i32_484 = arith.constant 160 : i32
    %1045 = arith.addi %0, %c160_i32_484 : i32
    %c4_i32_485 = arith.constant 4 : i32
    %1046 = arith.addi %1045, %c4_i32_485 : i32
    %1047 = arith.index_cast %1046 : i32 to index
    %1048 = memref.load %arg1[%1047] : memref<1024xi32, #tpu.memory_space<smem>>
    %1049 = arith.index_cast %1048 : i32 to index
    %c0_486 = arith.constant 0 : index
    %1050 = vector.load %arg2[%1049, %c0_486] : memref<1000x128xf32, #tpu.memory_space<vmem>>, vector<1x128xf32>
    %c160_i32_487 = arith.constant 160 : i32
    %1051 = arith.addi %0, %c160_i32_487 : i32
    %c5_i32_488 = arith.constant 5 : i32
    %1052 = arith.addi %1051, %c5_i32_488 : i32
    %1053 = arith.index_cast %1052 : i32 to index
    %1054 = memref.load %arg1[%1053] : memref<1024xi32, #tpu.memory_space<smem>>
    %1055 = arith.index_cast %1054 : i32 to index
    %c0_489 = arith.constant 0 : index
    %1056 = vector.load %arg2[%1055, %c0_489] : memref<1000x128xf32, #tpu.memory_space<vmem>>, vector<1x128xf32>
    %c160_i32_490 = arith.constant 160 : i32
    %1057 = arith.addi %0, %c160_i32_490 : i32
    %c6_i32_491 = arith.constant 6 : i32
    %1058 = arith.addi %1057, %c6_i32_491 : i32
    %1059 = arith.index_cast %1058 : i32 to index
    %1060 = memref.load %arg1[%1059] : memref<1024xi32, #tpu.memory_space<smem>>
    %1061 = arith.index_cast %1060 : i32 to index
    %c0_492 = arith.constant 0 : index
    %1062 = vector.load %arg2[%1061, %c0_492] : memref<1000x128xf32, #tpu.memory_space<vmem>>, vector<1x128xf32>
    %c160_i32_493 = arith.constant 160 : i32
    %1063 = arith.addi %0, %c160_i32_493 : i32
    %c7_i32_494 = arith.constant 7 : i32
    %1064 = arith.addi %1063, %c7_i32_494 : i32
    %1065 = arith.index_cast %1064 : i32 to index
    %1066 = memref.load %arg1[%1065] : memref<1024xi32, #tpu.memory_space<smem>>
    %1067 = arith.index_cast %1066 : i32 to index
    %c0_495 = arith.constant 0 : index
    %1068 = vector.load %arg2[%1067, %c0_495] : memref<1000x128xf32, #tpu.memory_space<vmem>>, vector<1x128xf32>
    %1069 = tpu.concatenate %1026, %1032, %1038, %1044, %1050, %1056, %1062, %1068 in 0 : vector<1x128xf32>, vector<1x128xf32>, vector<1x128xf32>, vector<1x128xf32>, vector<1x128xf32>, vector<1x128xf32>, vector<1x128xf32>, vector<1x128xf32> -> vector<8x128xf32>
    %1070 = math.tanh %1069 : vector<8x128xf32>
    %c160 = arith.constant 160 : index
    %c0_496 = arith.constant 0 : index
    %1071 = vector.load %arg3[%c160, %c0_496] : memref<256x128xf32, #tpu.memory_space<vmem>>, vector<8x128xf32>
    tpu.vector_store %arg3[%c160, %c0_496], %1070 {strides = array<i32>} : memref<256x128xf32, #tpu.memory_space<vmem>>, vector<8x128xf32>,
    %c168_i32 = arith.constant 168 : i32
    %1072 = arith.addi %0, %c168_i32 : i32
    %c0_i32_497 = arith.constant 0 : i32
    %1073 = arith.addi %1072, %c0_i32_497 : i32
    %1074 = arith.index_cast %1073 : i32 to index
    %1075 = memref.load %arg1[%1074] : memref<1024xi32, #tpu.memory_space<smem>>
    %1076 = arith.index_cast %1075 : i32 to index
    %c0_498 = arith.constant 0 : index
    %1077 = vector.load %arg2[%1076, %c0_498] : memref<1000x128xf32, #tpu.memory_space<vmem>>, vector<1x128xf32>
    %c168_i32_499 = arith.constant 168 : i32
    %1078 = arith.addi %0, %c168_i32_499 : i32
    %c1_i32_500 = arith.constant 1 : i32
    %1079 = arith.addi %1078, %c1_i32_500 : i32
    %1080 = arith.index_cast %1079 : i32 to index
    %1081 = memref.load %arg1[%1080] : memref<1024xi32, #tpu.memory_space<smem>>
    %1082 = arith.index_cast %1081 : i32 to index
    %c0_501 = arith.constant 0 : index
    %1083 = vector.load %arg2[%1082, %c0_501] : memref<1000x128xf32, #tpu.memory_space<vmem>>, vector<1x128xf32>
    %c168_i32_502 = arith.constant 168 : i32
    %1084 = arith.addi %0, %c168_i32_502 : i32
    %c2_i32_503 = arith.constant 2 : i32
    %1085 = arith.addi %1084, %c2_i32_503 : i32
    %1086 = arith.index_cast %1085 : i32 to index
    %1087 = memref.load %arg1[%1086] : memref<1024xi32, #tpu.memory_space<smem>>
    %1088 = arith.index_cast %1087 : i32 to index
    %c0_504 = arith.constant 0 : index
    %1089 = vector.load %arg2[%1088, %c0_504] : memref<1000x128xf32, #tpu.memory_space<vmem>>, vector<1x128xf32>
    %c168_i32_505 = arith.constant 168 : i32
    %1090 = arith.addi %0, %c168_i32_505 : i32
    %c3_i32_506 = arith.constant 3 : i32
    %1091 = arith.addi %1090, %c3_i32_506 : i32
    %1092 = arith.index_cast %1091 : i32 to index
    %1093 = memref.load %arg1[%1092] : memref<1024xi32, #tpu.memory_space<smem>>
    %1094 = arith.index_cast %1093 : i32 to index
    %c0_507 = arith.constant 0 : index
    %1095 = vector.load %arg2[%1094, %c0_507] : memref<1000x128xf32, #tpu.memory_space<vmem>>, vector<1x128xf32>
    %c168_i32_508 = arith.constant 168 : i32
    %1096 = arith.addi %0, %c168_i32_508 : i32
    %c4_i32_509 = arith.constant 4 : i32
    %1097 = arith.addi %1096, %c4_i32_509 : i32
    %1098 = arith.index_cast %1097 : i32 to index
    %1099 = memref.load %arg1[%1098] : memref<1024xi32, #tpu.memory_space<smem>>
    %1100 = arith.index_cast %1099 : i32 to index
    %c0_510 = arith.constant 0 : index
    %1101 = vector.load %arg2[%1100, %c0_510] : memref<1000x128xf32, #tpu.memory_space<vmem>>, vector<1x128xf32>
    %c168_i32_511 = arith.constant 168 : i32
    %1102 = arith.addi %0, %c168_i32_511 : i32
    %c5_i32_512 = arith.constant 5 : i32
    %1103 = arith.addi %1102, %c5_i32_512 : i32
    %1104 = arith.index_cast %1103 : i32 to index
    %1105 = memref.load %arg1[%1104] : memref<1024xi32, #tpu.memory_space<smem>>
    %1106 = arith.index_cast %1105 : i32 to index
    %c0_513 = arith.constant 0 : index
    %1107 = vector.load %arg2[%1106, %c0_513] : memref<1000x128xf32, #tpu.memory_space<vmem>>, vector<1x128xf32>
    %c168_i32_514 = arith.constant 168 : i32
    %1108 = arith.addi %0, %c168_i32_514 : i32
    %c6_i32_515 = arith.constant 6 : i32
    %1109 = arith.addi %1108, %c6_i32_515 : i32
    %1110 = arith.index_cast %1109 : i32 to index
    %1111 = memref.load %arg1[%1110] : memref<1024xi32, #tpu.memory_space<smem>>
    %1112 = arith.index_cast %1111 : i32 to index
    %c0_516 = arith.constant 0 : index
    %1113 = vector.load %arg2[%1112, %c0_516] : memref<1000x128xf32, #tpu.memory_space<vmem>>, vector<1x128xf32>
    %c168_i32_517 = arith.constant 168 : i32
    %1114 = arith.addi %0, %c168_i32_517 : i32
    %c7_i32_518 = arith.constant 7 : i32
    %1115 = arith.addi %1114, %c7_i32_518 : i32
    %1116 = arith.index_cast %1115 : i32 to index
    %1117 = memref.load %arg1[%1116] : memref<1024xi32, #tpu.memory_space<smem>>
    %1118 = arith.index_cast %1117 : i32 to index
    %c0_519 = arith.constant 0 : index
    %1119 = vector.load %arg2[%1118, %c0_519] : memref<1000x128xf32, #tpu.memory_space<vmem>>, vector<1x128xf32>
    %1120 = tpu.concatenate %1077, %1083, %1089, %1095, %1101, %1107, %1113, %1119 in 0 : vector<1x128xf32>, vector<1x128xf32>, vector<1x128xf32>, vector<1x128xf32>, vector<1x128xf32>, vector<1x128xf32>, vector<1x128xf32>, vector<1x128xf32> -> vector<8x128xf32>
    %1121 = math.tanh %1120 : vector<8x128xf32>
    %c168 = arith.constant 168 : index
    %c0_520 = arith.constant 0 : index
    %1122 = vector.load %arg3[%c168, %c0_520] : memref<256x128xf32, #tpu.memory_space<vmem>>, vector<8x128xf32>
    tpu.vector_store %arg3[%c168, %c0_520], %1121 {strides = array<i32>} : memref<256x128xf32, #tpu.memory_space<vmem>>, vector<8x128xf32>,
    %c176_i32 = arith.constant 176 : i32
    %1123 = arith.addi %0, %c176_i32 : i32
    %c0_i32_521 = arith.constant 0 : i32
    %1124 = arith.addi %1123, %c0_i32_521 : i32
    %1125 = arith.index_cast %1124 : i32 to index
    %1126 = memref.load %arg1[%1125] : memref<1024xi32, #tpu.memory_space<smem>>
    %1127 = arith.index_cast %1126 : i32 to index
    %c0_522 = arith.constant 0 : index
    %1128 = vector.load %arg2[%1127, %c0_522] : memref<1000x128xf32, #tpu.memory_space<vmem>>, vector<1x128xf32>
    %c176_i32_523 = arith.constant 176 : i32
    %1129 = arith.addi %0, %c176_i32_523 : i32
    %c1_i32_524 = arith.constant 1 : i32
    %1130 = arith.addi %1129, %c1_i32_524 : i32
    %1131 = arith.index_cast %1130 : i32 to index
    %1132 = memref.load %arg1[%1131] : memref<1024xi32, #tpu.memory_space<smem>>
    %1133 = arith.index_cast %1132 : i32 to index
    %c0_525 = arith.constant 0 : index
    %1134 = vector.load %arg2[%1133, %c0_525] : memref<1000x128xf32, #tpu.memory_space<vmem>>, vector<1x128xf32>
    %c176_i32_526 = arith.constant 176 : i32
    %1135 = arith.addi %0, %c176_i32_526 : i32
    %c2_i32_527 = arith.constant 2 : i32
    %1136 = arith.addi %1135, %c2_i32_527 : i32
    %1137 = arith.index_cast %1136 : i32 to index
    %1138 = memref.load %arg1[%1137] : memref<1024xi32, #tpu.memory_space<smem>>
    %1139 = arith.index_cast %1138 : i32 to index
    %c0_528 = arith.constant 0 : index
    %1140 = vector.load %arg2[%1139, %c0_528] : memref<1000x128xf32, #tpu.memory_space<vmem>>, vector<1x128xf32>
    %c176_i32_529 = arith.constant 176 : i32
    %1141 = arith.addi %0, %c176_i32_529 : i32
    %c3_i32_530 = arith.constant 3 : i32
    %1142 = arith.addi %1141, %c3_i32_530 : i32
    %1143 = arith.index_cast %1142 : i32 to index
    %1144 = memref.load %arg1[%1143] : memref<1024xi32, #tpu.memory_space<smem>>
    %1145 = arith.index_cast %1144 : i32 to index
    %c0_531 = arith.constant 0 : index
    %1146 = vector.load %arg2[%1145, %c0_531] : memref<1000x128xf32, #tpu.memory_space<vmem>>, vector<1x128xf32>
    %c176_i32_532 = arith.constant 176 : i32
    %1147 = arith.addi %0, %c176_i32_532 : i32
    %c4_i32_533 = arith.constant 4 : i32
    %1148 = arith.addi %1147, %c4_i32_533 : i32
    %1149 = arith.index_cast %1148 : i32 to index
    %1150 = memref.load %arg1[%1149] : memref<1024xi32, #tpu.memory_space<smem>>
    %1151 = arith.index_cast %1150 : i32 to index
    %c0_534 = arith.constant 0 : index
    %1152 = vector.load %arg2[%1151, %c0_534] : memref<1000x128xf32, #tpu.memory_space<vmem>>, vector<1x128xf32>
    %c176_i32_535 = arith.constant 176 : i32
    %1153 = arith.addi %0, %c176_i32_535 : i32
    %c5_i32_536 = arith.constant 5 : i32
    %1154 = arith.addi %1153, %c5_i32_536 : i32
    %1155 = arith.index_cast %1154 : i32 to index
    %1156 = memref.load %arg1[%1155] : memref<1024xi32, #tpu.memory_space<smem>>
    %1157 = arith.index_cast %1156 : i32 to index
    %c0_537 = arith.constant 0 : index
    %1158 = vector.load %arg2[%1157, %c0_537] : memref<1000x128xf32, #tpu.memory_space<vmem>>, vector<1x128xf32>
    %c176_i32_538 = arith.constant 176 : i32
    %1159 = arith.addi %0, %c176_i32_538 : i32
    %c6_i32_539 = arith.constant 6 : i32
    %1160 = arith.addi %1159, %c6_i32_539 : i32
    %1161 = arith.index_cast %1160 : i32 to index
    %1162 = memref.load %arg1[%1161] : memref<1024xi32, #tpu.memory_space<smem>>
    %1163 = arith.index_cast %1162 : i32 to index
    %c0_540 = arith.constant 0 : index
    %1164 = vector.load %arg2[%1163, %c0_540] : memref<1000x128xf32, #tpu.memory_space<vmem>>, vector<1x128xf32>
    %c176_i32_541 = arith.constant 176 : i32
    %1165 = arith.addi %0, %c176_i32_541 : i32
    %c7_i32_542 = arith.constant 7 : i32
    %1166 = arith.addi %1165, %c7_i32_542 : i32
    %1167 = arith.index_cast %1166 : i32 to index
    %1168 = memref.load %arg1[%1167] : memref<1024xi32, #tpu.memory_space<smem>>
    %1169 = arith.index_cast %1168 : i32 to index
    %c0_543 = arith.constant 0 : index
    %1170 = vector.load %arg2[%1169, %c0_543] : memref<1000x128xf32, #tpu.memory_space<vmem>>, vector<1x128xf32>
    %1171 = tpu.concatenate %1128, %1134, %1140, %1146, %1152, %1158, %1164, %1170 in 0 : vector<1x128xf32>, vector<1x128xf32>, vector<1x128xf32>, vector<1x128xf32>, vector<1x128xf32>, vector<1x128xf32>, vector<1x128xf32>, vector<1x128xf32> -> vector<8x128xf32>
    %1172 = math.tanh %1171 : vector<8x128xf32>
    %c176 = arith.constant 176 : index
    %c0_544 = arith.constant 0 : index
    %1173 = vector.load %arg3[%c176, %c0_544] : memref<256x128xf32, #tpu.memory_space<vmem>>, vector<8x128xf32>
    tpu.vector_store %arg3[%c176, %c0_544], %1172 {strides = array<i32>} : memref<256x128xf32, #tpu.memory_space<vmem>>, vector<8x128xf32>,
    %c184_i32 = arith.constant 184 : i32
    %1174 = arith.addi %0, %c184_i32 : i32
    %c0_i32_545 = arith.constant 0 : i32
    %1175 = arith.addi %1174, %c0_i32_545 : i32
    %1176 = arith.index_cast %1175 : i32 to index
    %1177 = memref.load %arg1[%1176] : memref<1024xi32, #tpu.memory_space<smem>>
    %1178 = arith.index_cast %1177 : i32 to index
    %c0_546 = arith.constant 0 : index
    %1179 = vector.load %arg2[%1178, %c0_546] : memref<1000x128xf32, #tpu.memory_space<vmem>>, vector<1x128xf32>
    %c184_i32_547 = arith.constant 184 : i32
    %1180 = arith.addi %0, %c184_i32_547 : i32
    %c1_i32_548 = arith.constant 1 : i32
    %1181 = arith.addi %1180, %c1_i32_548 : i32
    %1182 = arith.index_cast %1181 : i32 to index
    %1183 = memref.load %arg1[%1182] : memref<1024xi32, #tpu.memory_space<smem>>
    %1184 = arith.index_cast %1183 : i32 to index
    %c0_549 = arith.constant 0 : index
    %1185 = vector.load %arg2[%1184, %c0_549] : memref<1000x128xf32, #tpu.memory_space<vmem>>, vector<1x128xf32>
    %c184_i32_550 = arith.constant 184 : i32
    %1186 = arith.addi %0, %c184_i32_550 : i32
    %c2_i32_551 = arith.constant 2 : i32
    %1187 = arith.addi %1186, %c2_i32_551 : i32
    %1188 = arith.index_cast %1187 : i32 to index
    %1189 = memref.load %arg1[%1188] : memref<1024xi32, #tpu.memory_space<smem>>
    %1190 = arith.index_cast %1189 : i32 to index
    %c0_552 = arith.constant 0 : index
    %1191 = vector.load %arg2[%1190, %c0_552] : memref<1000x128xf32, #tpu.memory_space<vmem>>, vector<1x128xf32>
    %c184_i32_553 = arith.constant 184 : i32
    %1192 = arith.addi %0, %c184_i32_553 : i32
    %c3_i32_554 = arith.constant 3 : i32
    %1193 = arith.addi %1192, %c3_i32_554 : i32
    %1194 = arith.index_cast %1193 : i32 to index
    %1195 = memref.load %arg1[%1194] : memref<1024xi32, #tpu.memory_space<smem>>
    %1196 = arith.index_cast %1195 : i32 to index
    %c0_555 = arith.constant 0 : index
    %1197 = vector.load %arg2[%1196, %c0_555] : memref<1000x128xf32, #tpu.memory_space<vmem>>, vector<1x128xf32>
    %c184_i32_556 = arith.constant 184 : i32
    %1198 = arith.addi %0, %c184_i32_556 : i32
    %c4_i32_557 = arith.constant 4 : i32
    %1199 = arith.addi %1198, %c4_i32_557 : i32
    %1200 = arith.index_cast %1199 : i32 to index
    %1201 = memref.load %arg1[%1200] : memref<1024xi32, #tpu.memory_space<smem>>
    %1202 = arith.index_cast %1201 : i32 to index
    %c0_558 = arith.constant 0 : index
    %1203 = vector.load %arg2[%1202, %c0_558] : memref<1000x128xf32, #tpu.memory_space<vmem>>, vector<1x128xf32>
    %c184_i32_559 = arith.constant 184 : i32
    %1204 = arith.addi %0, %c184_i32_559 : i32
    %c5_i32_560 = arith.constant 5 : i32
    %1205 = arith.addi %1204, %c5_i32_560 : i32
    %1206 = arith.index_cast %1205 : i32 to index
    %1207 = memref.load %arg1[%1206] : memref<1024xi32, #tpu.memory_space<smem>>
    %1208 = arith.index_cast %1207 : i32 to index
    %c0_561 = arith.constant 0 : index
    %1209 = vector.load %arg2[%1208, %c0_561] : memref<1000x128xf32, #tpu.memory_space<vmem>>, vector<1x128xf32>
    %c184_i32_562 = arith.constant 184 : i32
    %1210 = arith.addi %0, %c184_i32_562 : i32
    %c6_i32_563 = arith.constant 6 : i32
    %1211 = arith.addi %1210, %c6_i32_563 : i32
    %1212 = arith.index_cast %1211 : i32 to index
    %1213 = memref.load %arg1[%1212] : memref<1024xi32, #tpu.memory_space<smem>>
    %1214 = arith.index_cast %1213 : i32 to index
    %c0_564 = arith.constant 0 : index
    %1215 = vector.load %arg2[%1214, %c0_564] : memref<1000x128xf32, #tpu.memory_space<vmem>>, vector<1x128xf32>
    %c184_i32_565 = arith.constant 184 : i32
    %1216 = arith.addi %0, %c184_i32_565 : i32
    %c7_i32_566 = arith.constant 7 : i32
    %1217 = arith.addi %1216, %c7_i32_566 : i32
    %1218 = arith.index_cast %1217 : i32 to index
    %1219 = memref.load %arg1[%1218] : memref<1024xi32, #tpu.memory_space<smem>>
    %1220 = arith.index_cast %1219 : i32 to index
    %c0_567 = arith.constant 0 : index
    %1221 = vector.load %arg2[%1220, %c0_567] : memref<1000x128xf32, #tpu.memory_space<vmem>>, vector<1x128xf32>
    %1222 = tpu.concatenate %1179, %1185, %1191, %1197, %1203, %1209, %1215, %1221 in 0 : vector<1x128xf32>, vector<1x128xf32>, vector<1x128xf32>, vector<1x128xf32>, vector<1x128xf32>, vector<1x128xf32>, vector<1x128xf32>, vector<1x128xf32> -> vector<8x128xf32>
    %1223 = math.tanh %1222 : vector<8x128xf32>
    %c184 = arith.constant 184 : index
    %c0_568 = arith.constant 0 : index
    %1224 = vector.load %arg3[%c184, %c0_568] : memref<256x128xf32, #tpu.memory_space<vmem>>, vector<8x128xf32>
    tpu.vector_store %arg3[%c184, %c0_568], %1223 {strides = array<i32>} : memref<256x128xf32, #tpu.memory_space<vmem>>, vector<8x128xf32>,
    %c192_i32 = arith.constant 192 : i32
    %1225 = arith.addi %0, %c192_i32 : i32
    %c0_i32_569 = arith.constant 0 : i32
    %1226 = arith.addi %1225, %c0_i32_569 : i32
    %1227 = arith.index_cast %1226 : i32 to index
    %1228 = memref.load %arg1[%1227] : memref<1024xi32, #tpu.memory_space<smem>>
    %1229 = arith.index_cast %1228 : i32 to index
    %c0_570 = arith.constant 0 : index
    %1230 = vector.load %arg2[%1229, %c0_570] : memref<1000x128xf32, #tpu.memory_space<vmem>>, vector<1x128xf32>
    %c192_i32_571 = arith.constant 192 : i32
    %1231 = arith.addi %0, %c192_i32_571 : i32
    %c1_i32_572 = arith.constant 1 : i32
    %1232 = arith.addi %1231, %c1_i32_572 : i32
    %1233 = arith.index_cast %1232 : i32 to index
    %1234 = memref.load %arg1[%1233] : memref<1024xi32, #tpu.memory_space<smem>>
    %1235 = arith.index_cast %1234 : i32 to index
    %c0_573 = arith.constant 0 : index
    %1236 = vector.load %arg2[%1235, %c0_573] : memref<1000x128xf32, #tpu.memory_space<vmem>>, vector<1x128xf32>
    %c192_i32_574 = arith.constant 192 : i32
    %1237 = arith.addi %0, %c192_i32_574 : i32
    %c2_i32_575 = arith.constant 2 : i32
    %1238 = arith.addi %1237, %c2_i32_575 : i32
    %1239 = arith.index_cast %1238 : i32 to index
    %1240 = memref.load %arg1[%1239] : memref<1024xi32, #tpu.memory_space<smem>>
    %1241 = arith.index_cast %1240 : i32 to index
    %c0_576 = arith.constant 0 : index
    %1242 = vector.load %arg2[%1241, %c0_576] : memref<1000x128xf32, #tpu.memory_space<vmem>>, vector<1x128xf32>
    %c192_i32_577 = arith.constant 192 : i32
    %1243 = arith.addi %0, %c192_i32_577 : i32
    %c3_i32_578 = arith.constant 3 : i32
    %1244 = arith.addi %1243, %c3_i32_578 : i32
    %1245 = arith.index_cast %1244 : i32 to index
    %1246 = memref.load %arg1[%1245] : memref<1024xi32, #tpu.memory_space<smem>>
    %1247 = arith.index_cast %1246 : i32 to index
    %c0_579 = arith.constant 0 : index
    %1248 = vector.load %arg2[%1247, %c0_579] : memref<1000x128xf32, #tpu.memory_space<vmem>>, vector<1x128xf32>
    %c192_i32_580 = arith.constant 192 : i32
    %1249 = arith.addi %0, %c192_i32_580 : i32
    %c4_i32_581 = arith.constant 4 : i32
    %1250 = arith.addi %1249, %c4_i32_581 : i32
    %1251 = arith.index_cast %1250 : i32 to index
    %1252 = memref.load %arg1[%1251] : memref<1024xi32, #tpu.memory_space<smem>>
    %1253 = arith.index_cast %1252 : i32 to index
    %c0_582 = arith.constant 0 : index
    %1254 = vector.load %arg2[%1253, %c0_582] : memref<1000x128xf32, #tpu.memory_space<vmem>>, vector<1x128xf32>
    %c192_i32_583 = arith.constant 192 : i32
    %1255 = arith.addi %0, %c192_i32_583 : i32
    %c5_i32_584 = arith.constant 5 : i32
    %1256 = arith.addi %1255, %c5_i32_584 : i32
    %1257 = arith.index_cast %1256 : i32 to index
    %1258 = memref.load %arg1[%1257] : memref<1024xi32, #tpu.memory_space<smem>>
    %1259 = arith.index_cast %1258 : i32 to index
    %c0_585 = arith.constant 0 : index
    %1260 = vector.load %arg2[%1259, %c0_585] : memref<1000x128xf32, #tpu.memory_space<vmem>>, vector<1x128xf32>
    %c192_i32_586 = arith.constant 192 : i32
    %1261 = arith.addi %0, %c192_i32_586 : i32
    %c6_i32_587 = arith.constant 6 : i32
    %1262 = arith.addi %1261, %c6_i32_587 : i32
    %1263 = arith.index_cast %1262 : i32 to index
    %1264 = memref.load %arg1[%1263] : memref<1024xi32, #tpu.memory_space<smem>>
    %1265 = arith.index_cast %1264 : i32 to index
    %c0_588 = arith.constant 0 : index
    %1266 = vector.load %arg2[%1265, %c0_588] : memref<1000x128xf32, #tpu.memory_space<vmem>>, vector<1x128xf32>
    %c192_i32_589 = arith.constant 192 : i32
    %1267 = arith.addi %0, %c192_i32_589 : i32
    %c7_i32_590 = arith.constant 7 : i32
    %1268 = arith.addi %1267, %c7_i32_590 : i32
    %1269 = arith.index_cast %1268 : i32 to index
    %1270 = memref.load %arg1[%1269] : memref<1024xi32, #tpu.memory_space<smem>>
    %1271 = arith.index_cast %1270 : i32 to index
    %c0_591 = arith.constant 0 : index
    %1272 = vector.load %arg2[%1271, %c0_591] : memref<1000x128xf32, #tpu.memory_space<vmem>>, vector<1x128xf32>
    %1273 = tpu.concatenate %1230, %1236, %1242, %1248, %1254, %1260, %1266, %1272 in 0 : vector<1x128xf32>, vector<1x128xf32>, vector<1x128xf32>, vector<1x128xf32>, vector<1x128xf32>, vector<1x128xf32>, vector<1x128xf32>, vector<1x128xf32> -> vector<8x128xf32>
    %1274 = math.tanh %1273 : vector<8x128xf32>
    %c192 = arith.constant 192 : index
    %c0_592 = arith.constant 0 : index
    %1275 = vector.load %arg3[%c192, %c0_592] : memref<256x128xf32, #tpu.memory_space<vmem>>, vector<8x128xf32>
    tpu.vector_store %arg3[%c192, %c0_592], %1274 {strides = array<i32>} : memref<256x128xf32, #tpu.memory_space<vmem>>, vector<8x128xf32>,
    %c200_i32 = arith.constant 200 : i32
    %1276 = arith.addi %0, %c200_i32 : i32
    %c0_i32_593 = arith.constant 0 : i32
    %1277 = arith.addi %1276, %c0_i32_593 : i32
    %1278 = arith.index_cast %1277 : i32 to index
    %1279 = memref.load %arg1[%1278] : memref<1024xi32, #tpu.memory_space<smem>>
    %1280 = arith.index_cast %1279 : i32 to index
    %c0_594 = arith.constant 0 : index
    %1281 = vector.load %arg2[%1280, %c0_594] : memref<1000x128xf32, #tpu.memory_space<vmem>>, vector<1x128xf32>
    %c200_i32_595 = arith.constant 200 : i32
    %1282 = arith.addi %0, %c200_i32_595 : i32
    %c1_i32_596 = arith.constant 1 : i32
    %1283 = arith.addi %1282, %c1_i32_596 : i32
    %1284 = arith.index_cast %1283 : i32 to index
    %1285 = memref.load %arg1[%1284] : memref<1024xi32, #tpu.memory_space<smem>>
    %1286 = arith.index_cast %1285 : i32 to index
    %c0_597 = arith.constant 0 : index
    %1287 = vector.load %arg2[%1286, %c0_597] : memref<1000x128xf32, #tpu.memory_space<vmem>>, vector<1x128xf32>
    %c200_i32_598 = arith.constant 200 : i32
    %1288 = arith.addi %0, %c200_i32_598 : i32
    %c2_i32_599 = arith.constant 2 : i32
    %1289 = arith.addi %1288, %c2_i32_599 : i32
    %1290 = arith.index_cast %1289 : i32 to index
    %1291 = memref.load %arg1[%1290] : memref<1024xi32, #tpu.memory_space<smem>>
    %1292 = arith.index_cast %1291 : i32 to index
    %c0_600 = arith.constant 0 : index
    %1293 = vector.load %arg2[%1292, %c0_600] : memref<1000x128xf32, #tpu.memory_space<vmem>>, vector<1x128xf32>
    %c200_i32_601 = arith.constant 200 : i32
    %1294 = arith.addi %0, %c200_i32_601 : i32
    %c3_i32_602 = arith.constant 3 : i32
    %1295 = arith.addi %1294, %c3_i32_602 : i32
    %1296 = arith.index_cast %1295 : i32 to index
    %1297 = memref.load %arg1[%1296] : memref<1024xi32, #tpu.memory_space<smem>>
    %1298 = arith.index_cast %1297 : i32 to index
    %c0_603 = arith.constant 0 : index
    %1299 = vector.load %arg2[%1298, %c0_603] : memref<1000x128xf32, #tpu.memory_space<vmem>>, vector<1x128xf32>
    %c200_i32_604 = arith.constant 200 : i32
    %1300 = arith.addi %0, %c200_i32_604 : i32
    %c4_i32_605 = arith.constant 4 : i32
    %1301 = arith.addi %1300, %c4_i32_605 : i32
    %1302 = arith.index_cast %1301 : i32 to index
    %1303 = memref.load %arg1[%1302] : memref<1024xi32, #tpu.memory_space<smem>>
    %1304 = arith.index_cast %1303 : i32 to index
    %c0_606 = arith.constant 0 : index
    %1305 = vector.load %arg2[%1304, %c0_606] : memref<1000x128xf32, #tpu.memory_space<vmem>>, vector<1x128xf32>
    %c200_i32_607 = arith.constant 200 : i32
    %1306 = arith.addi %0, %c200_i32_607 : i32
    %c5_i32_608 = arith.constant 5 : i32
    %1307 = arith.addi %1306, %c5_i32_608 : i32
    %1308 = arith.index_cast %1307 : i32 to index
    %1309 = memref.load %arg1[%1308] : memref<1024xi32, #tpu.memory_space<smem>>
    %1310 = arith.index_cast %1309 : i32 to index
    %c0_609 = arith.constant 0 : index
    %1311 = vector.load %arg2[%1310, %c0_609] : memref<1000x128xf32, #tpu.memory_space<vmem>>, vector<1x128xf32>
    %c200_i32_610 = arith.constant 200 : i32
    %1312 = arith.addi %0, %c200_i32_610 : i32
    %c6_i32_611 = arith.constant 6 : i32
    %1313 = arith.addi %1312, %c6_i32_611 : i32
    %1314 = arith.index_cast %1313 : i32 to index
    %1315 = memref.load %arg1[%1314] : memref<1024xi32, #tpu.memory_space<smem>>
    %1316 = arith.index_cast %1315 : i32 to index
    %c0_612 = arith.constant 0 : index
    %1317 = vector.load %arg2[%1316, %c0_612] : memref<1000x128xf32, #tpu.memory_space<vmem>>, vector<1x128xf32>
    %c200_i32_613 = arith.constant 200 : i32
    %1318 = arith.addi %0, %c200_i32_613 : i32
    %c7_i32_614 = arith.constant 7 : i32
    %1319 = arith.addi %1318, %c7_i32_614 : i32
    %1320 = arith.index_cast %1319 : i32 to index
    %1321 = memref.load %arg1[%1320] : memref<1024xi32, #tpu.memory_space<smem>>
    %1322 = arith.index_cast %1321 : i32 to index
    %c0_615 = arith.constant 0 : index
    %1323 = vector.load %arg2[%1322, %c0_615] : memref<1000x128xf32, #tpu.memory_space<vmem>>, vector<1x128xf32>
    %1324 = tpu.concatenate %1281, %1287, %1293, %1299, %1305, %1311, %1317, %1323 in 0 : vector<1x128xf32>, vector<1x128xf32>, vector<1x128xf32>, vector<1x128xf32>, vector<1x128xf32>, vector<1x128xf32>, vector<1x128xf32>, vector<1x128xf32> -> vector<8x128xf32>
    %1325 = math.tanh %1324 : vector<8x128xf32>
    %c200 = arith.constant 200 : index
    %c0_616 = arith.constant 0 : index
    %1326 = vector.load %arg3[%c200, %c0_616] : memref<256x128xf32, #tpu.memory_space<vmem>>, vector<8x128xf32>
    tpu.vector_store %arg3[%c200, %c0_616], %1325 {strides = array<i32>} : memref<256x128xf32, #tpu.memory_space<vmem>>, vector<8x128xf32>,
    %c208_i32 = arith.constant 208 : i32
    %1327 = arith.addi %0, %c208_i32 : i32
    %c0_i32_617 = arith.constant 0 : i32
    %1328 = arith.addi %1327, %c0_i32_617 : i32
    %1329 = arith.index_cast %1328 : i32 to index
    %1330 = memref.load %arg1[%1329] : memref<1024xi32, #tpu.memory_space<smem>>
    %1331 = arith.index_cast %1330 : i32 to index
    %c0_618 = arith.constant 0 : index
    %1332 = vector.load %arg2[%1331, %c0_618] : memref<1000x128xf32, #tpu.memory_space<vmem>>, vector<1x128xf32>
    %c208_i32_619 = arith.constant 208 : i32
    %1333 = arith.addi %0, %c208_i32_619 : i32
    %c1_i32_620 = arith.constant 1 : i32
    %1334 = arith.addi %1333, %c1_i32_620 : i32
    %1335 = arith.index_cast %1334 : i32 to index
    %1336 = memref.load %arg1[%1335] : memref<1024xi32, #tpu.memory_space<smem>>
    %1337 = arith.index_cast %1336 : i32 to index
    %c0_621 = arith.constant 0 : index
    %1338 = vector.load %arg2[%1337, %c0_621] : memref<1000x128xf32, #tpu.memory_space<vmem>>, vector<1x128xf32>
    %c208_i32_622 = arith.constant 208 : i32
    %1339 = arith.addi %0, %c208_i32_622 : i32
    %c2_i32_623 = arith.constant 2 : i32
    %1340 = arith.addi %1339, %c2_i32_623 : i32
    %1341 = arith.index_cast %1340 : i32 to index
    %1342 = memref.load %arg1[%1341] : memref<1024xi32, #tpu.memory_space<smem>>
    %1343 = arith.index_cast %1342 : i32 to index
    %c0_624 = arith.constant 0 : index
    %1344 = vector.load %arg2[%1343, %c0_624] : memref<1000x128xf32, #tpu.memory_space<vmem>>, vector<1x128xf32>
    %c208_i32_625 = arith.constant 208 : i32
    %1345 = arith.addi %0, %c208_i32_625 : i32
    %c3_i32_626 = arith.constant 3 : i32
    %1346 = arith.addi %1345, %c3_i32_626 : i32
    %1347 = arith.index_cast %1346 : i32 to index
    %1348 = memref.load %arg1[%1347] : memref<1024xi32, #tpu.memory_space<smem>>
    %1349 = arith.index_cast %1348 : i32 to index
    %c0_627 = arith.constant 0 : index
    %1350 = vector.load %arg2[%1349, %c0_627] : memref<1000x128xf32, #tpu.memory_space<vmem>>, vector<1x128xf32>
    %c208_i32_628 = arith.constant 208 : i32
    %1351 = arith.addi %0, %c208_i32_628 : i32
    %c4_i32_629 = arith.constant 4 : i32
    %1352 = arith.addi %1351, %c4_i32_629 : i32
    %1353 = arith.index_cast %1352 : i32 to index
    %1354 = memref.load %arg1[%1353] : memref<1024xi32, #tpu.memory_space<smem>>
    %1355 = arith.index_cast %1354 : i32 to index
    %c0_630 = arith.constant 0 : index
    %1356 = vector.load %arg2[%1355, %c0_630] : memref<1000x128xf32, #tpu.memory_space<vmem>>, vector<1x128xf32>
    %c208_i32_631 = arith.constant 208 : i32
    %1357 = arith.addi %0, %c208_i32_631 : i32
    %c5_i32_632 = arith.constant 5 : i32
    %1358 = arith.addi %1357, %c5_i32_632 : i32
    %1359 = arith.index_cast %1358 : i32 to index
    %1360 = memref.load %arg1[%1359] : memref<1024xi32, #tpu.memory_space<smem>>
    %1361 = arith.index_cast %1360 : i32 to index
    %c0_633 = arith.constant 0 : index
    %1362 = vector.load %arg2[%1361, %c0_633] : memref<1000x128xf32, #tpu.memory_space<vmem>>, vector<1x128xf32>
    %c208_i32_634 = arith.constant 208 : i32
    %1363 = arith.addi %0, %c208_i32_634 : i32
    %c6_i32_635 = arith.constant 6 : i32
    %1364 = arith.addi %1363, %c6_i32_635 : i32
    %1365 = arith.index_cast %1364 : i32 to index
    %1366 = memref.load %arg1[%1365] : memref<1024xi32, #tpu.memory_space<smem>>
    %1367 = arith.index_cast %1366 : i32 to index
    %c0_636 = arith.constant 0 : index
    %1368 = vector.load %arg2[%1367, %c0_636] : memref<1000x128xf32, #tpu.memory_space<vmem>>, vector<1x128xf32>
    %c208_i32_637 = arith.constant 208 : i32
    %1369 = arith.addi %0, %c208_i32_637 : i32
    %c7_i32_638 = arith.constant 7 : i32
    %1370 = arith.addi %1369, %c7_i32_638 : i32
    %1371 = arith.index_cast %1370 : i32 to index
    %1372 = memref.load %arg1[%1371] : memref<1024xi32, #tpu.memory_space<smem>>
    %1373 = arith.index_cast %1372 : i32 to index
    %c0_639 = arith.constant 0 : index
    %1374 = vector.load %arg2[%1373, %c0_639] : memref<1000x128xf32, #tpu.memory_space<vmem>>, vector<1x128xf32>
    %1375 = tpu.concatenate %1332, %1338, %1344, %1350, %1356, %1362, %1368, %1374 in 0 : vector<1x128xf32>, vector<1x128xf32>, vector<1x128xf32>, vector<1x128xf32>, vector<1x128xf32>, vector<1x128xf32>, vector<1x128xf32>, vector<1x128xf32> -> vector<8x128xf32>
    %1376 = math.tanh %1375 : vector<8x128xf32>
    %c208 = arith.constant 208 : index
    %c0_640 = arith.constant 0 : index
    %1377 = vector.load %arg3[%c208, %c0_640] : memref<256x128xf32, #tpu.memory_space<vmem>>, vector<8x128xf32>
    tpu.vector_store %arg3[%c208, %c0_640], %1376 {strides = array<i32>} : memref<256x128xf32, #tpu.memory_space<vmem>>, vector<8x128xf32>,
    %c216_i32 = arith.constant 216 : i32
    %1378 = arith.addi %0, %c216_i32 : i32
    %c0_i32_641 = arith.constant 0 : i32
    %1379 = arith.addi %1378, %c0_i32_641 : i32
    %1380 = arith.index_cast %1379 : i32 to index
    %1381 = memref.load %arg1[%1380] : memref<1024xi32, #tpu.memory_space<smem>>
    %1382 = arith.index_cast %1381 : i32 to index
    %c0_642 = arith.constant 0 : index
    %1383 = vector.load %arg2[%1382, %c0_642] : memref<1000x128xf32, #tpu.memory_space<vmem>>, vector<1x128xf32>
    %c216_i32_643 = arith.constant 216 : i32
    %1384 = arith.addi %0, %c216_i32_643 : i32
    %c1_i32_644 = arith.constant 1 : i32
    %1385 = arith.addi %1384, %c1_i32_644 : i32
    %1386 = arith.index_cast %1385 : i32 to index
    %1387 = memref.load %arg1[%1386] : memref<1024xi32, #tpu.memory_space<smem>>
    %1388 = arith.index_cast %1387 : i32 to index
    %c0_645 = arith.constant 0 : index
    %1389 = vector.load %arg2[%1388, %c0_645] : memref<1000x128xf32, #tpu.memory_space<vmem>>, vector<1x128xf32>
    %c216_i32_646 = arith.constant 216 : i32
    %1390 = arith.addi %0, %c216_i32_646 : i32
    %c2_i32_647 = arith.constant 2 : i32
    %1391 = arith.addi %1390, %c2_i32_647 : i32
    %1392 = arith.index_cast %1391 : i32 to index
    %1393 = memref.load %arg1[%1392] : memref<1024xi32, #tpu.memory_space<smem>>
    %1394 = arith.index_cast %1393 : i32 to index
    %c0_648 = arith.constant 0 : index
    %1395 = vector.load %arg2[%1394, %c0_648] : memref<1000x128xf32, #tpu.memory_space<vmem>>, vector<1x128xf32>
    %c216_i32_649 = arith.constant 216 : i32
    %1396 = arith.addi %0, %c216_i32_649 : i32
    %c3_i32_650 = arith.constant 3 : i32
    %1397 = arith.addi %1396, %c3_i32_650 : i32
    %1398 = arith.index_cast %1397 : i32 to index
    %1399 = memref.load %arg1[%1398] : memref<1024xi32, #tpu.memory_space<smem>>
    %1400 = arith.index_cast %1399 : i32 to index
    %c0_651 = arith.constant 0 : index
    %1401 = vector.load %arg2[%1400, %c0_651] : memref<1000x128xf32, #tpu.memory_space<vmem>>, vector<1x128xf32>
    %c216_i32_652 = arith.constant 216 : i32
    %1402 = arith.addi %0, %c216_i32_652 : i32
    %c4_i32_653 = arith.constant 4 : i32
    %1403 = arith.addi %1402, %c4_i32_653 : i32
    %1404 = arith.index_cast %1403 : i32 to index
    %1405 = memref.load %arg1[%1404] : memref<1024xi32, #tpu.memory_space<smem>>
    %1406 = arith.index_cast %1405 : i32 to index
    %c0_654 = arith.constant 0 : index
    %1407 = vector.load %arg2[%1406, %c0_654] : memref<1000x128xf32, #tpu.memory_space<vmem>>, vector<1x128xf32>
    %c216_i32_655 = arith.constant 216 : i32
    %1408 = arith.addi %0, %c216_i32_655 : i32
    %c5_i32_656 = arith.constant 5 : i32
    %1409 = arith.addi %1408, %c5_i32_656 : i32
    %1410 = arith.index_cast %1409 : i32 to index
    %1411 = memref.load %arg1[%1410] : memref<1024xi32, #tpu.memory_space<smem>>
    %1412 = arith.index_cast %1411 : i32 to index
    %c0_657 = arith.constant 0 : index
    %1413 = vector.load %arg2[%1412, %c0_657] : memref<1000x128xf32, #tpu.memory_space<vmem>>, vector<1x128xf32>
    %c216_i32_658 = arith.constant 216 : i32
    %1414 = arith.addi %0, %c216_i32_658 : i32
    %c6_i32_659 = arith.constant 6 : i32
    %1415 = arith.addi %1414, %c6_i32_659 : i32
    %1416 = arith.index_cast %1415 : i32 to index
    %1417 = memref.load %arg1[%1416] : memref<1024xi32, #tpu.memory_space<smem>>
    %1418 = arith.index_cast %1417 : i32 to index
    %c0_660 = arith.constant 0 : index
    %1419 = vector.load %arg2[%1418, %c0_660] : memref<1000x128xf32, #tpu.memory_space<vmem>>, vector<1x128xf32>
    %c216_i32_661 = arith.constant 216 : i32
    %1420 = arith.addi %0, %c216_i32_661 : i32
    %c7_i32_662 = arith.constant 7 : i32
    %1421 = arith.addi %1420, %c7_i32_662 : i32
    %1422 = arith.index_cast %1421 : i32 to index
    %1423 = memref.load %arg1[%1422] : memref<1024xi32, #tpu.memory_space<smem>>
    %1424 = arith.index_cast %1423 : i32 to index
    %c0_663 = arith.constant 0 : index
    %1425 = vector.load %arg2[%1424, %c0_663] : memref<1000x128xf32, #tpu.memory_space<vmem>>, vector<1x128xf32>
    %1426 = tpu.concatenate %1383, %1389, %1395, %1401, %1407, %1413, %1419, %1425 in 0 : vector<1x128xf32>, vector<1x128xf32>, vector<1x128xf32>, vector<1x128xf32>, vector<1x128xf32>, vector<1x128xf32>, vector<1x128xf32>, vector<1x128xf32> -> vector<8x128xf32>
    %1427 = math.tanh %1426 : vector<8x128xf32>
    %c216 = arith.constant 216 : index
    %c0_664 = arith.constant 0 : index
    %1428 = vector.load %arg3[%c216, %c0_664] : memref<256x128xf32, #tpu.memory_space<vmem>>, vector<8x128xf32>
    tpu.vector_store %arg3[%c216, %c0_664], %1427 {strides = array<i32>} : memref<256x128xf32, #tpu.memory_space<vmem>>, vector<8x128xf32>,
    %c224_i32 = arith.constant 224 : i32
    %1429 = arith.addi %0, %c224_i32 : i32
    %c0_i32_665 = arith.constant 0 : i32
    %1430 = arith.addi %1429, %c0_i32_665 : i32
    %1431 = arith.index_cast %1430 : i32 to index
    %1432 = memref.load %arg1[%1431] : memref<1024xi32, #tpu.memory_space<smem>>
    %1433 = arith.index_cast %1432 : i32 to index
    %c0_666 = arith.constant 0 : index
    %1434 = vector.load %arg2[%1433, %c0_666] : memref<1000x128xf32, #tpu.memory_space<vmem>>, vector<1x128xf32>
    %c224_i32_667 = arith.constant 224 : i32
    %1435 = arith.addi %0, %c224_i32_667 : i32
    %c1_i32_668 = arith.constant 1 : i32
    %1436 = arith.addi %1435, %c1_i32_668 : i32
    %1437 = arith.index_cast %1436 : i32 to index
    %1438 = memref.load %arg1[%1437] : memref<1024xi32, #tpu.memory_space<smem>>
    %1439 = arith.index_cast %1438 : i32 to index
    %c0_669 = arith.constant 0 : index
    %1440 = vector.load %arg2[%1439, %c0_669] : memref<1000x128xf32, #tpu.memory_space<vmem>>, vector<1x128xf32>
    %c224_i32_670 = arith.constant 224 : i32
    %1441 = arith.addi %0, %c224_i32_670 : i32
    %c2_i32_671 = arith.constant 2 : i32
    %1442 = arith.addi %1441, %c2_i32_671 : i32
    %1443 = arith.index_cast %1442 : i32 to index
    %1444 = memref.load %arg1[%1443] : memref<1024xi32, #tpu.memory_space<smem>>
    %1445 = arith.index_cast %1444 : i32 to index
    %c0_672 = arith.constant 0 : index
    %1446 = vector.load %arg2[%1445, %c0_672] : memref<1000x128xf32, #tpu.memory_space<vmem>>, vector<1x128xf32>
    %c224_i32_673 = arith.constant 224 : i32
    %1447 = arith.addi %0, %c224_i32_673 : i32
    %c3_i32_674 = arith.constant 3 : i32
    %1448 = arith.addi %1447, %c3_i32_674 : i32
    %1449 = arith.index_cast %1448 : i32 to index
    %1450 = memref.load %arg1[%1449] : memref<1024xi32, #tpu.memory_space<smem>>
    %1451 = arith.index_cast %1450 : i32 to index
    %c0_675 = arith.constant 0 : index
    %1452 = vector.load %arg2[%1451, %c0_675] : memref<1000x128xf32, #tpu.memory_space<vmem>>, vector<1x128xf32>
    %c224_i32_676 = arith.constant 224 : i32
    %1453 = arith.addi %0, %c224_i32_676 : i32
    %c4_i32_677 = arith.constant 4 : i32
    %1454 = arith.addi %1453, %c4_i32_677 : i32
    %1455 = arith.index_cast %1454 : i32 to index
    %1456 = memref.load %arg1[%1455] : memref<1024xi32, #tpu.memory_space<smem>>
    %1457 = arith.index_cast %1456 : i32 to index
    %c0_678 = arith.constant 0 : index
    %1458 = vector.load %arg2[%1457, %c0_678] : memref<1000x128xf32, #tpu.memory_space<vmem>>, vector<1x128xf32>
    %c224_i32_679 = arith.constant 224 : i32
    %1459 = arith.addi %0, %c224_i32_679 : i32
    %c5_i32_680 = arith.constant 5 : i32
    %1460 = arith.addi %1459, %c5_i32_680 : i32
    %1461 = arith.index_cast %1460 : i32 to index
    %1462 = memref.load %arg1[%1461] : memref<1024xi32, #tpu.memory_space<smem>>
    %1463 = arith.index_cast %1462 : i32 to index
    %c0_681 = arith.constant 0 : index
    %1464 = vector.load %arg2[%1463, %c0_681] : memref<1000x128xf32, #tpu.memory_space<vmem>>, vector<1x128xf32>
    %c224_i32_682 = arith.constant 224 : i32
    %1465 = arith.addi %0, %c224_i32_682 : i32
    %c6_i32_683 = arith.constant 6 : i32
    %1466 = arith.addi %1465, %c6_i32_683 : i32
    %1467 = arith.index_cast %1466 : i32 to index
    %1468 = memref.load %arg1[%1467] : memref<1024xi32, #tpu.memory_space<smem>>
    %1469 = arith.index_cast %1468 : i32 to index
    %c0_684 = arith.constant 0 : index
    %1470 = vector.load %arg2[%1469, %c0_684] : memref<1000x128xf32, #tpu.memory_space<vmem>>, vector<1x128xf32>
    %c224_i32_685 = arith.constant 224 : i32
    %1471 = arith.addi %0, %c224_i32_685 : i32
    %c7_i32_686 = arith.constant 7 : i32
    %1472 = arith.addi %1471, %c7_i32_686 : i32
    %1473 = arith.index_cast %1472 : i32 to index
    %1474 = memref.load %arg1[%1473] : memref<1024xi32, #tpu.memory_space<smem>>
    %1475 = arith.index_cast %1474 : i32 to index
    %c0_687 = arith.constant 0 : index
    %1476 = vector.load %arg2[%1475, %c0_687] : memref<1000x128xf32, #tpu.memory_space<vmem>>, vector<1x128xf32>
    %1477 = tpu.concatenate %1434, %1440, %1446, %1452, %1458, %1464, %1470, %1476 in 0 : vector<1x128xf32>, vector<1x128xf32>, vector<1x128xf32>, vector<1x128xf32>, vector<1x128xf32>, vector<1x128xf32>, vector<1x128xf32>, vector<1x128xf32> -> vector<8x128xf32>
    %1478 = math.tanh %1477 : vector<8x128xf32>
    %c224 = arith.constant 224 : index
    %c0_688 = arith.constant 0 : index
    %1479 = vector.load %arg3[%c224, %c0_688] : memref<256x128xf32, #tpu.memory_space<vmem>>, vector<8x128xf32>
    tpu.vector_store %arg3[%c224, %c0_688], %1478 {strides = array<i32>} : memref<256x128xf32, #tpu.memory_space<vmem>>, vector<8x128xf32>,
    %c232_i32 = arith.constant 232 : i32
    %1480 = arith.addi %0, %c232_i32 : i32
    %c0_i32_689 = arith.constant 0 : i32
    %1481 = arith.addi %1480, %c0_i32_689 : i32
    %1482 = arith.index_cast %1481 : i32 to index
    %1483 = memref.load %arg1[%1482] : memref<1024xi32, #tpu.memory_space<smem>>
    %1484 = arith.index_cast %1483 : i32 to index
    %c0_690 = arith.constant 0 : index
    %1485 = vector.load %arg2[%1484, %c0_690] : memref<1000x128xf32, #tpu.memory_space<vmem>>, vector<1x128xf32>
    %c232_i32_691 = arith.constant 232 : i32
    %1486 = arith.addi %0, %c232_i32_691 : i32
    %c1_i32_692 = arith.constant 1 : i32
    %1487 = arith.addi %1486, %c1_i32_692 : i32
    %1488 = arith.index_cast %1487 : i32 to index
    %1489 = memref.load %arg1[%1488] : memref<1024xi32, #tpu.memory_space<smem>>
    %1490 = arith.index_cast %1489 : i32 to index
    %c0_693 = arith.constant 0 : index
    %1491 = vector.load %arg2[%1490, %c0_693] : memref<1000x128xf32, #tpu.memory_space<vmem>>, vector<1x128xf32>
    %c232_i32_694 = arith.constant 232 : i32
    %1492 = arith.addi %0, %c232_i32_694 : i32
    %c2_i32_695 = arith.constant 2 : i32
    %1493 = arith.addi %1492, %c2_i32_695 : i32
    %1494 = arith.index_cast %1493 : i32 to index
    %1495 = memref.load %arg1[%1494] : memref<1024xi32, #tpu.memory_space<smem>>
    %1496 = arith.index_cast %1495 : i32 to index
    %c0_696 = arith.constant 0 : index
    %1497 = vector.load %arg2[%1496, %c0_696] : memref<1000x128xf32, #tpu.memory_space<vmem>>, vector<1x128xf32>
    %c232_i32_697 = arith.constant 232 : i32
    %1498 = arith.addi %0, %c232_i32_697 : i32
    %c3_i32_698 = arith.constant 3 : i32
    %1499 = arith.addi %1498, %c3_i32_698 : i32
    %1500 = arith.index_cast %1499 : i32 to index
    %1501 = memref.load %arg1[%1500] : memref<1024xi32, #tpu.memory_space<smem>>
    %1502 = arith.index_cast %1501 : i32 to index
    %c0_699 = arith.constant 0 : index
    %1503 = vector.load %arg2[%1502, %c0_699] : memref<1000x128xf32, #tpu.memory_space<vmem>>, vector<1x128xf32>
    %c232_i32_700 = arith.constant 232 : i32
    %1504 = arith.addi %0, %c232_i32_700 : i32
    %c4_i32_701 = arith.constant 4 : i32
    %1505 = arith.addi %1504, %c4_i32_701 : i32
    %1506 = arith.index_cast %1505 : i32 to index
    %1507 = memref.load %arg1[%1506] : memref<1024xi32, #tpu.memory_space<smem>>
    %1508 = arith.index_cast %1507 : i32 to index
    %c0_702 = arith.constant 0 : index
    %1509 = vector.load %arg2[%1508, %c0_702] : memref<1000x128xf32, #tpu.memory_space<vmem>>, vector<1x128xf32>
    %c232_i32_703 = arith.constant 232 : i32
    %1510 = arith.addi %0, %c232_i32_703 : i32
    %c5_i32_704 = arith.constant 5 : i32
    %1511 = arith.addi %1510, %c5_i32_704 : i32
    %1512 = arith.index_cast %1511 : i32 to index
    %1513 = memref.load %arg1[%1512] : memref<1024xi32, #tpu.memory_space<smem>>
    %1514 = arith.index_cast %1513 : i32 to index
    %c0_705 = arith.constant 0 : index
    %1515 = vector.load %arg2[%1514, %c0_705] : memref<1000x128xf32, #tpu.memory_space<vmem>>, vector<1x128xf32>
    %c232_i32_706 = arith.constant 232 : i32
    %1516 = arith.addi %0, %c232_i32_706 : i32
    %c6_i32_707 = arith.constant 6 : i32
    %1517 = arith.addi %1516, %c6_i32_707 : i32
    %1518 = arith.index_cast %1517 : i32 to index
    %1519 = memref.load %arg1[%1518] : memref<1024xi32, #tpu.memory_space<smem>>
    %1520 = arith.index_cast %1519 : i32 to index
    %c0_708 = arith.constant 0 : index
    %1521 = vector.load %arg2[%1520, %c0_708] : memref<1000x128xf32, #tpu.memory_space<vmem>>, vector<1x128xf32>
    %c232_i32_709 = arith.constant 232 : i32
    %1522 = arith.addi %0, %c232_i32_709 : i32
    %c7_i32_710 = arith.constant 7 : i32
    %1523 = arith.addi %1522, %c7_i32_710 : i32
    %1524 = arith.index_cast %1523 : i32 to index
    %1525 = memref.load %arg1[%1524] : memref<1024xi32, #tpu.memory_space<smem>>
    %1526 = arith.index_cast %1525 : i32 to index
    %c0_711 = arith.constant 0 : index
    %1527 = vector.load %arg2[%1526, %c0_711] : memref<1000x128xf32, #tpu.memory_space<vmem>>, vector<1x128xf32>
    %1528 = tpu.concatenate %1485, %1491, %1497, %1503, %1509, %1515, %1521, %1527 in 0 : vector<1x128xf32>, vector<1x128xf32>, vector<1x128xf32>, vector<1x128xf32>, vector<1x128xf32>, vector<1x128xf32>, vector<1x128xf32>, vector<1x128xf32> -> vector<8x128xf32>
    %1529 = math.tanh %1528 : vector<8x128xf32>
    %c232 = arith.constant 232 : index
    %c0_712 = arith.constant 0 : index
    %1530 = vector.load %arg3[%c232, %c0_712] : memref<256x128xf32, #tpu.memory_space<vmem>>, vector<8x128xf32>
    tpu.vector_store %arg3[%c232, %c0_712], %1529 {strides = array<i32>} : memref<256x128xf32, #tpu.memory_space<vmem>>, vector<8x128xf32>,
    %c240_i32 = arith.constant 240 : i32
    %1531 = arith.addi %0, %c240_i32 : i32
    %c0_i32_713 = arith.constant 0 : i32
    %1532 = arith.addi %1531, %c0_i32_713 : i32
    %1533 = arith.index_cast %1532 : i32 to index
    %1534 = memref.load %arg1[%1533] : memref<1024xi32, #tpu.memory_space<smem>>
    %1535 = arith.index_cast %1534 : i32 to index
    %c0_714 = arith.constant 0 : index
    %1536 = vector.load %arg2[%1535, %c0_714] : memref<1000x128xf32, #tpu.memory_space<vmem>>, vector<1x128xf32>
    %c240_i32_715 = arith.constant 240 : i32
    %1537 = arith.addi %0, %c240_i32_715 : i32
    %c1_i32_716 = arith.constant 1 : i32
    %1538 = arith.addi %1537, %c1_i32_716 : i32
    %1539 = arith.index_cast %1538 : i32 to index
    %1540 = memref.load %arg1[%1539] : memref<1024xi32, #tpu.memory_space<smem>>
    %1541 = arith.index_cast %1540 : i32 to index
    %c0_717 = arith.constant 0 : index
    %1542 = vector.load %arg2[%1541, %c0_717] : memref<1000x128xf32, #tpu.memory_space<vmem>>, vector<1x128xf32>
    %c240_i32_718 = arith.constant 240 : i32
    %1543 = arith.addi %0, %c240_i32_718 : i32
    %c2_i32_719 = arith.constant 2 : i32
    %1544 = arith.addi %1543, %c2_i32_719 : i32
    %1545 = arith.index_cast %1544 : i32 to index
    %1546 = memref.load %arg1[%1545] : memref<1024xi32, #tpu.memory_space<smem>>
    %1547 = arith.index_cast %1546 : i32 to index
    %c0_720 = arith.constant 0 : index
    %1548 = vector.load %arg2[%1547, %c0_720] : memref<1000x128xf32, #tpu.memory_space<vmem>>, vector<1x128xf32>
    %c240_i32_721 = arith.constant 240 : i32
    %1549 = arith.addi %0, %c240_i32_721 : i32
    %c3_i32_722 = arith.constant 3 : i32
    %1550 = arith.addi %1549, %c3_i32_722 : i32
    %1551 = arith.index_cast %1550 : i32 to index
    %1552 = memref.load %arg1[%1551] : memref<1024xi32, #tpu.memory_space<smem>>
    %1553 = arith.index_cast %1552 : i32 to index
    %c0_723 = arith.constant 0 : index
    %1554 = vector.load %arg2[%1553, %c0_723] : memref<1000x128xf32, #tpu.memory_space<vmem>>, vector<1x128xf32>
    %c240_i32_724 = arith.constant 240 : i32
    %1555 = arith.addi %0, %c240_i32_724 : i32
    %c4_i32_725 = arith.constant 4 : i32
    %1556 = arith.addi %1555, %c4_i32_725 : i32
    %1557 = arith.index_cast %1556 : i32 to index
    %1558 = memref.load %arg1[%1557] : memref<1024xi32, #tpu.memory_space<smem>>
    %1559 = arith.index_cast %1558 : i32 to index
    %c0_726 = arith.constant 0 : index
    %1560 = vector.load %arg2[%1559, %c0_726] : memref<1000x128xf32, #tpu.memory_space<vmem>>, vector<1x128xf32>
    %c240_i32_727 = arith.constant 240 : i32
    %1561 = arith.addi %0, %c240_i32_727 : i32
    %c5_i32_728 = arith.constant 5 : i32
    %1562 = arith.addi %1561, %c5_i32_728 : i32
    %1563 = arith.index_cast %1562 : i32 to index
    %1564 = memref.load %arg1[%1563] : memref<1024xi32, #tpu.memory_space<smem>>
    %1565 = arith.index_cast %1564 : i32 to index
    %c0_729 = arith.constant 0 : index
    %1566 = vector.load %arg2[%1565, %c0_729] : memref<1000x128xf32, #tpu.memory_space<vmem>>, vector<1x128xf32>
    %c240_i32_730 = arith.constant 240 : i32
    %1567 = arith.addi %0, %c240_i32_730 : i32
    %c6_i32_731 = arith.constant 6 : i32
    %1568 = arith.addi %1567, %c6_i32_731 : i32
    %1569 = arith.index_cast %1568 : i32 to index
    %1570 = memref.load %arg1[%1569] : memref<1024xi32, #tpu.memory_space<smem>>
    %1571 = arith.index_cast %1570 : i32 to index
    %c0_732 = arith.constant 0 : index
    %1572 = vector.load %arg2[%1571, %c0_732] : memref<1000x128xf32, #tpu.memory_space<vmem>>, vector<1x128xf32>
    %c240_i32_733 = arith.constant 240 : i32
    %1573 = arith.addi %0, %c240_i32_733 : i32
    %c7_i32_734 = arith.constant 7 : i32
    %1574 = arith.addi %1573, %c7_i32_734 : i32
    %1575 = arith.index_cast %1574 : i32 to index
    %1576 = memref.load %arg1[%1575] : memref<1024xi32, #tpu.memory_space<smem>>
    %1577 = arith.index_cast %1576 : i32 to index
    %c0_735 = arith.constant 0 : index
    %1578 = vector.load %arg2[%1577, %c0_735] : memref<1000x128xf32, #tpu.memory_space<vmem>>, vector<1x128xf32>
    %1579 = tpu.concatenate %1536, %1542, %1548, %1554, %1560, %1566, %1572, %1578 in 0 : vector<1x128xf32>, vector<1x128xf32>, vector<1x128xf32>, vector<1x128xf32>, vector<1x128xf32>, vector<1x128xf32>, vector<1x128xf32>, vector<1x128xf32> -> vector<8x128xf32>
    %1580 = math.tanh %1579 : vector<8x128xf32>
    %c240 = arith.constant 240 : index
    %c0_736 = arith.constant 0 : index
    %1581 = vector.load %arg3[%c240, %c0_736] : memref<256x128xf32, #tpu.memory_space<vmem>>, vector<8x128xf32>
    tpu.vector_store %arg3[%c240, %c0_736], %1580 {strides = array<i32>} : memref<256x128xf32, #tpu.memory_space<vmem>>, vector<8x128xf32>,
    %c248_i32 = arith.constant 248 : i32
    %1582 = arith.addi %0, %c248_i32 : i32
    %c0_i32_737 = arith.constant 0 : i32
    %1583 = arith.addi %1582, %c0_i32_737 : i32
    %1584 = arith.index_cast %1583 : i32 to index
    %1585 = memref.load %arg1[%1584] : memref<1024xi32, #tpu.memory_space<smem>>
    %1586 = arith.index_cast %1585 : i32 to index
    %c0_738 = arith.constant 0 : index
    %1587 = vector.load %arg2[%1586, %c0_738] : memref<1000x128xf32, #tpu.memory_space<vmem>>, vector<1x128xf32>
    %c248_i32_739 = arith.constant 248 : i32
    %1588 = arith.addi %0, %c248_i32_739 : i32
    %c1_i32_740 = arith.constant 1 : i32
    %1589 = arith.addi %1588, %c1_i32_740 : i32
    %1590 = arith.index_cast %1589 : i32 to index
    %1591 = memref.load %arg1[%1590] : memref<1024xi32, #tpu.memory_space<smem>>
    %1592 = arith.index_cast %1591 : i32 to index
    %c0_741 = arith.constant 0 : index
    %1593 = vector.load %arg2[%1592, %c0_741] : memref<1000x128xf32, #tpu.memory_space<vmem>>, vector<1x128xf32>
    %c248_i32_742 = arith.constant 248 : i32
    %1594 = arith.addi %0, %c248_i32_742 : i32
    %c2_i32_743 = arith.constant 2 : i32
    %1595 = arith.addi %1594, %c2_i32_743 : i32
    %1596 = arith.index_cast %1595 : i32 to index
    %1597 = memref.load %arg1[%1596] : memref<1024xi32, #tpu.memory_space<smem>>
    %1598 = arith.index_cast %1597 : i32 to index
    %c0_744 = arith.constant 0 : index
    %1599 = vector.load %arg2[%1598, %c0_744] : memref<1000x128xf32, #tpu.memory_space<vmem>>, vector<1x128xf32>
    %c248_i32_745 = arith.constant 248 : i32
    %1600 = arith.addi %0, %c248_i32_745 : i32
    %c3_i32_746 = arith.constant 3 : i32
    %1601 = arith.addi %1600, %c3_i32_746 : i32
    %1602 = arith.index_cast %1601 : i32 to index
    %1603 = memref.load %arg1[%1602] : memref<1024xi32, #tpu.memory_space<smem>>
    %1604 = arith.index_cast %1603 : i32 to index
    %c0_747 = arith.constant 0 : index
    %1605 = vector.load %arg2[%1604, %c0_747] : memref<1000x128xf32, #tpu.memory_space<vmem>>, vector<1x128xf32>
    %c248_i32_748 = arith.constant 248 : i32
    %1606 = arith.addi %0, %c248_i32_748 : i32
    %c4_i32_749 = arith.constant 4 : i32
    %1607 = arith.addi %1606, %c4_i32_749 : i32
    %1608 = arith.index_cast %1607 : i32 to index
    %1609 = memref.load %arg1[%1608] : memref<1024xi32, #tpu.memory_space<smem>>
    %1610 = arith.index_cast %1609 : i32 to index
    %c0_750 = arith.constant 0 : index
    %1611 = vector.load %arg2[%1610, %c0_750] : memref<1000x128xf32, #tpu.memory_space<vmem>>, vector<1x128xf32>
    %c248_i32_751 = arith.constant 248 : i32
    %1612 = arith.addi %0, %c248_i32_751 : i32
    %c5_i32_752 = arith.constant 5 : i32
    %1613 = arith.addi %1612, %c5_i32_752 : i32
    %1614 = arith.index_cast %1613 : i32 to index
    %1615 = memref.load %arg1[%1614] : memref<1024xi32, #tpu.memory_space<smem>>
    %1616 = arith.index_cast %1615 : i32 to index
    %c0_753 = arith.constant 0 : index
    %1617 = vector.load %arg2[%1616, %c0_753] : memref<1000x128xf32, #tpu.memory_space<vmem>>, vector<1x128xf32>
    %c248_i32_754 = arith.constant 248 : i32
    %1618 = arith.addi %0, %c248_i32_754 : i32
    %c6_i32_755 = arith.constant 6 : i32
    %1619 = arith.addi %1618, %c6_i32_755 : i32
    %1620 = arith.index_cast %1619 : i32 to index
    %1621 = memref.load %arg1[%1620] : memref<1024xi32, #tpu.memory_space<smem>>
    %1622 = arith.index_cast %1621 : i32 to index
    %c0_756 = arith.constant 0 : index
    %1623 = vector.load %arg2[%1622, %c0_756] : memref<1000x128xf32, #tpu.memory_space<vmem>>, vector<1x128xf32>
    %c248_i32_757 = arith.constant 248 : i32
    %1624 = arith.addi %0, %c248_i32_757 : i32
    %c7_i32_758 = arith.constant 7 : i32
    %1625 = arith.addi %1624, %c7_i32_758 : i32
    %1626 = arith.index_cast %1625 : i32 to index
    %1627 = memref.load %arg1[%1626] : memref<1024xi32, #tpu.memory_space<smem>>
    %1628 = arith.index_cast %1627 : i32 to index
    %c0_759 = arith.constant 0 : index
    %1629 = vector.load %arg2[%1628, %c0_759] : memref<1000x128xf32, #tpu.memory_space<vmem>>, vector<1x128xf32>
    %1630 = tpu.concatenate %1587, %1593, %1599, %1605, %1611, %1617, %1623, %1629 in 0 : vector<1x128xf32>, vector<1x128xf32>, vector<1x128xf32>, vector<1x128xf32>, vector<1x128xf32>, vector<1x128xf32>, vector<1x128xf32>, vector<1x128xf32> -> vector<8x128xf32>
    %1631 = math.tanh %1630 : vector<8x128xf32>
    %c248 = arith.constant 248 : index
    %c0_760 = arith.constant 0 : index
    %1632 = vector.load %arg3[%c248, %c0_760] : memref<256x128xf32, #tpu.memory_space<vmem>>, vector<8x128xf32>
    tpu.vector_store %arg3[%c248, %c0_760], %1631 {strides = array<i32>} : memref<256x128xf32, #tpu.memory_space<vmem>>, vector<8x128xf32>,
    return
  }
  func.func @transform_0(%arg0: i32, %arg1: memref<1024xi32, #tpu.memory_space<smem>>) -> (i32, i32) {
    %c0_i32 = arith.constant 0 : i32
    %c0_i32_0 = arith.constant 0 : i32
    %c0_i32_1 = arith.constant 0 : i32
    return %c0_i32, %c0_i32_0 : i32, i32
  }
  func.func @transform_1(%arg0: i32, %arg1: memref<1024xi32, #tpu.memory_space<smem>>) -> (i32, i32) {
    %c0_i32 = arith.constant 0 : i32
    %c0_i32_0 = arith.constant 0 : i32
    return %arg0, %c0_i32 : i32, i32
  }
}

</mosaic_0001>

<llo_original>
// kernel: tpu_custom_call.1
$region0: #{tpu_custom_call.1}
  #allocation0 [shape = 'u32[]', space=smem, size = 0x4, offset = 0x4, fixed_abs, tag = 'smem constant byte address 0x4 - core index']
  #allocation1 [shape = 'u32[72,128]{1,0:T(1,128)}', space=vmem, size = 0x9000, scoped, tag = 'internal scratch']
  #allocation2 [shape = 's32[1]{0}', space=sflag, size = 0x4, scoped, tag = 'scoped memory for tpu_custom_call.1']
  #allocation3 [shape = 'u8[4096]{0}', space=smem, size = 0x1000, scoped, tag = 'prefetched SMEM operand 0']
  %s0 = inlined_call_operand.hbm [shape: s32[1024], index: 0, kind: input, shape index: {}]
  %s1 = inlined_call_operand.hbm [shape: f32[1000,128], index: 1, kind: input, shape index: {}]
  %s2 = inlined_call_operand.hbm [shape: f32[1024,128], index: 2, kind: output, shape index: {}]
  %s3 = sld [smem:[#allocation0]]
  $region41: #{tpu_custom_call.1} parent=0
    _
  %s5 = ssub.s32 1, %s3
  %s6 = scalar_select 0, %s5, %s3
  %s8 = sshll.u32 %s0, 4
  %s9 = int_to_ptr.hbm [resolvable:$true] %s8
  %11 = dma.hbm_to_smem %s9, 128, [#allocation3], [#allocation2]
  %13 = dma.done [#allocation2], 128
  %14 = sfence
  $region1: #{tpu_custom_call.1} parent=0
    #allocation4 [shape = 'u8[512000]{0}', space=vmem, size = 0x7d000, scoped, tag = 'input window, operand 1, single buffered']
    #allocation5 [shape = 's32[2]{0}', space=sflag, size = 0x8, scoped, tag = 'scoped memory for tpu_custom_call.1']
    #allocation6 [shape = 's32[2]{0}', space=sflag, size = 0x8, scoped, tag = 'scoped memory for tpu_custom_call.1']
    #allocation7 [shape = 'u8[262144]{0}', space=vmem, size = 0x40000, scoped, tag = 'output window, operand 0']
    %15 = vsyncpa [#allocation5], 0
    %16 = vsyncpa [#allocation6], 0
    %s17 = scalar_lea.sflag [#allocation6], 1
    %18 = vsyncpa %s17, 0
    loop: start=0, step=1, limit=6
    $region2: #{tpu_custom_call.1} parent=1 // loop_pre_header
      _
    $region3: #{tpu_custom_call.1} parent=1 // loop_header
      %s20 = sphi 0, %s24
      %p21 = scmp.ge.s32.totalorder %s20, 6
      %s28 = sphi 0, %s28
      %s30 = sphi 0, %s28
      %s31 = sphi 0, %s30
      %s45 = sphi 0, %s31
      %s51 = sphi 0, %s53
      %s54 = sphi 0, %s51
      %s55 = sphi 0, %s54
      %s71 = sphi 0, %s55
    $region4: #{tpu_custom_call.1} parent=1 // loop_header_branch
      %23 = sbr.rel (%p21) target = $region8
    $region5: #{tpu_custom_call.1} parent=1 // loop_body
      %s25 = ssub.s32 %s20, 1
      %s26 = ssub.s32 %s20, 2
      %s27 = sadd.s32 %s20, 1
      %s29 = sadd.s32 %s28, 1
      %p32 = scmp.eq.s32.totalorder %s20, 3
      %p33 = scmp.ne.s32.totalorder %s28, %s30
      %p34 = scmp.eq.s32.totalorder %s20, 0
      %p35 = por %p33, %p34
      %p36 = scmp.ne.s32.totalorder %s28, %s30
      %p37 = scmp.eq.s32.totalorder %s25, 3
      %p38 = por %p36, %p37
      %p39 = scmp.ne.s32.totalorder %s30, %s31
      %p40 = scmp.eq.s32.totalorder %s25, 0
      %p41 = por %p39, %p40
      %p42 = scmp.ne.s32.totalorder %s30, %s31
      %p43 = scmp.eq.s32.totalorder %s26, 3
      %p44 = por %p42, %p43
      %p46 = scmp.ne.s32.totalorder %s31, %s45
      %p47 = scmp.eq.s32.totalorder %s26, 0
      %p48 = por %p46, %p47
      %s49 = ssub.s32 %s20, %s27
      %p50 = scmp.eq.s32.totalorder %s49, 0
      %s52 = sadd.s32 %s51, 1
      %s53 = scalar_select %p50, %s51, %s52
      %p56 = pneg %p50
      %p57 = scmp.eq.s32.totalorder %s20, 3
      %p58 = por %p56, %p57
      %p59 = scmp.ne.s32.totalorder %s51, %s54
      %p60 = scmp.eq.s32.totalorder %s20, 0
      %p61 = por %p59, %p60
      %p62 = scmp.ne.s32.totalorder %s51, %s54
      %p63 = scmp.eq.s32.totalorder %s25, 3
      %p64 = por %p62, %p63
      %p65 = scmp.ne.s32.totalorder %s54, %s55
      %p66 = scmp.eq.s32.totalorder %s25, 0
      %p67 = por %p65, %p66
      %p68 = scmp.ne.s32.totalorder %s54, %s55
      %p69 = scmp.eq.s32.totalorder %s26, 3
      %p70 = por %p68, %p69
      %p72 = scmp.ne.s32.totalorder %s55, %s71
      %p73 = scmp.eq.s32.totalorder %s26, 0
      %p74 = por %p72, %p73
      %p75 = scmp.le.s32.totalorder 1, %s20
      %p76 = scmp.lt.s32.totalorder %s20, 5
      %p77 = pnand %p75, %p76
      %p78 = pneg %p77
      // Predicated region
      $region9: #{tpu_custom_call.1} parent=5 // pred_check
        _
      $region10: #{tpu_custom_call.1} parent=5 // pred_check_branch
        %80 = sbr.rel (%p77) target = $region12
      $region11: #{tpu_custom_call.1} parent=5 // pred_region
        %s81 = ssub.s32 %s20, 1
        // Predicated region
        $region13: #{tpu_custom_call.1} parent=11 // pred_check
          %p82 = pneg %p41
        $region14: #{tpu_custom_call.1} parent=11 // pred_check_branch
          %84 = sbr.rel (%p82) target = $region16
        $region15: #{tpu_custom_call.1} parent=11 // pred_region
          %86 = vsyncadd [#allocation5], 0
          %s87 = sshll.u32 %s1, 4
          %s88 = int_to_ptr.hbm [resolvable:$true] %s87
          %s89 = sshll.u32 [#allocation4], 4
          %s90 = int_to_ptr.vmem [resolvable:$true] %s89
          %95 = dma.hbm_to_vmem [thread:$0]  %s88, 16000, %s90, [#allocation5], 128, 128, 8
        $region16: #{tpu_custom_call.1} parent=11 // pred_fallthru
          _
      $region12: #{tpu_custom_call.1} parent=5 // pred_fallthru
        _
      %p96 = scmp.lt.s32.totalorder %s20, 4
      // Predicated region
      $region17: #{tpu_custom_call.1} parent=5 // pred_check
        %p97 = pneg %p96
      $region18: #{tpu_custom_call.1} parent=5 // pred_check_branch
        %99 = sbr.rel (%p97) target = $region20
      $region19: #{tpu_custom_call.1} parent=5 // pred_region
        _
      $region20: #{tpu_custom_call.1} parent=5 // pred_fallthru
        _
      %p100 = scmp.le.s32.totalorder 1, %s20
      %p101 = scmp.lt.s32.totalorder %s20, 5
      %p102 = pnand %p100, %p101
      %p103 = pneg %p102
      // Predicated region
      $region21: #{tpu_custom_call.1} parent=5 // pred_check
        _
      $region22: #{tpu_custom_call.1} parent=5 // pred_check_branch
        %105 = sbr.rel (%p102) target = $region24
      $region23: #{tpu_custom_call.1} parent=5 // pred_region
        %s106 = ssub.s32 %s20, 1
        // Predicated region
        $region25: #{tpu_custom_call.1} parent=23 // pred_check
          %p107 = pneg %p41
        $region26: #{tpu_custom_call.1} parent=23 // pred_check_branch
          %109 = sbr.rel (%p107) target = $region28
        $region27: #{tpu_custom_call.1} parent=23 // pred_region
          %111 = dma.done [#allocation5], 16000
        $region28: #{tpu_custom_call.1} parent=23 // pred_fallthru
          _
        %p112 = pneg %p41
        %p113 = pneg %p38
        %p114 = pneg %p67
        %p115 = pneg %p64
        %s116 = sand.u32 %s54, 1
        %s117 = scalar_lea.sflag [#allocation6], %s116
        %s118 = sand.u32 %s54, 1
        %s119 = smul.addr %s118, 256
        %s120 = scalar_lea.vmem [#allocation7], %s119
        %s121 = smul.u32 32, %s25
        %s122 = smul.u32 %s25, 256
        %s123 = sld [smem:[#allocation3 + %s122]]
        %s124 = scalar_lea.vmem [#allocation4], %s123
        %v125 = vld [vmem:[%s124] sm:$0x1]
        %s126 = sadd.s32 %s122, 1
        %s127 = sld [smem:[#allocation3 + %s126]]
        %s128 = scalar_lea.vmem [#allocation4], %s127
        %v129 = vld [vmem:[%s128] sm:$0x1]
        %s130 = sadd.s32 %s122, 2
        %s131 = sld [smem:[#allocation3 + %s130]]
        %s132 = scalar_lea.vmem [#allocation4], %s131
        %v133 = vld [vmem:[%s132] sm:$0x1]
        %s134 = sadd.s32 %s122, 3
        %s135 = sld [smem:[#allocation3 + %s134]]
        %s136 = scalar_lea.vmem [#allocation4], %s135
        %v137 = vld [vmem:[%s136] sm:$0x1]
        %s138 = sadd.s32 %s122, 4
        %s139 = sld [smem:[#allocation3 + %s138]]
        %s140 = scalar_lea.vmem [#allocation4], %s139
        %v141 = vld [vmem:[%s140] sm:$0x1]
        %s142 = sadd.s32 %s122, 5
        %s143 = sld [smem:[#allocation3 + %s142]]
        %s144 = scalar_lea.vmem [#allocation4], %s143
        %v145 = vld [vmem:[%s144] sm:$0x1]
        %s146 = sadd.s32 %s122, 6
        %s147 = sld [smem:[#allocation3 + %s146]]
        %s148 = scalar_lea.vmem [#allocation4], %s147
        %v149 = vld [vmem:[%s148] sm:$0x1]
        %s150 = sadd.s32 %s122, 7
        %s151 = sld [smem:[#allocation3 + %s150]]
        %s152 = scalar_lea.vmem [#allocation4], %s151
        %v153 = vld [vmem:[%s152] sm:$0x1]
        %v155 = vrot.slane %v129, 7
        %v158 = vrot.slane %v133, 6
        %v161 = vrot.slane %v137, 5
        %v164 = vrot.slane %v141, 4
        %v167 = vrot.slane %v145, 3
        %v170 = vrot.slane %v149, 2
        %v173 = vrot.slane %v153, 1
        %vm175 = vcmask 1040384
        %v176 = vsel %vm175, %v125, %v155
        %vm177 = vcmask 1041408
        %v178 = vsel %vm177, %v176, %v158
        %vm179 = vcmask 1042432
        %v180 = vsel %vm179, %v178, %v161
        %vm181 = vcmask 1043456
        %v182 = vsel %vm181, %v180, %v164
        %vm183 = vcmask 1044480
        %v184 = vsel %vm183, %v182, %v167
        %vm185 = vcmask 1045504
        %v186 = vsel %vm185, %v184, %v170
        %vm187 = vcmask 1046528
        %v188 = vsel %vm187, %v186, %v173
        %v189 = vtanh.pop %v188
        %190 = vst [vmem:[%s120] sm:$0xff] %v189
        %s191 = sadd.s32 %s122, 8
        %s192 = sld [smem:[#allocation3 + %s191]]
        %s193 = scalar_lea.vmem [#allocation4], %s192
        %v194 = vld [vmem:[%s193] sm:$0x1]
        %s195 = sadd.s32 %s122, 9
        %s196 = sld [smem:[#allocation3 + %s195]]
        %s197 = scalar_lea.vmem [#allocation4], %s196
        %v198 = vld [vmem:[%s197] sm:$0x1]
        %s199 = sadd.s32 %s122, 10
        %s200 = sld [smem:[#allocation3 + %s199]]
        %s201 = scalar_lea.vmem [#allocation4], %s200
        %v202 = vld [vmem:[%s201] sm:$0x1]
        %s203 = sadd.s32 %s122, 11
        %s204 = sld [smem:[#allocation3 + %s203]]
        %s205 = scalar_lea.vmem [#allocation4], %s204
        %v206 = vld [vmem:[%s205] sm:$0x1]
        %s207 = sadd.s32 %s122, 12
        %s208 = sld [smem:[#allocation3 + %s207]]
        %s209 = scalar_lea.vmem [#allocation4], %s208
        %v210 = vld [vmem:[%s209] sm:$0x1]
        %s211 = sadd.s32 %s122, 13
        %s212 = sld [smem:[#allocation3 + %s211]]
        %s213 = scalar_lea.vmem [#allocation4], %s212
        %v214 = vld [vmem:[%s213] sm:$0x1]
        %s215 = sadd.s32 %s122, 14
        %s216 = sld [smem:[#allocation3 + %s215]]
        %s217 = scalar_lea.vmem [#allocation4], %s216
        %v218 = vld [vmem:[%s217] sm:$0x1]
        %s219 = sadd.s32 %s122, 15
        %s220 = sld [smem:[#allocation3 + %s219]]
        %s221 = scalar_lea.vmem [#allocation4], %s220
        %v222 = vld [vmem:[%s221] sm:$0x1]
        %v224 = vrot.slane %v198, 7
        %v227 = vrot.slane %v202, 6
        %v230 = vrot.slane %v206, 5
        %v233 = vrot.slane %v210, 4
        %v236 = vrot.slane %v214, 3
        %v239 = vrot.slane %v218, 2
        %v242 = vrot.slane %v222, 1
        %v244 = vsel %vm175, %v194, %v224
        %v245 = vsel %vm177, %v244, %v227
        %v246 = vsel %vm179, %v245, %v230
        %v247 = vsel %vm181, %v246, %v233
        %v248 = vsel %vm183, %v247, %v236
        %v249 = vsel %vm185, %v248, %v239
        %v250 = vsel %vm187, %v249, %v242
        %v251 = vtanh.pop %v250
        %252 = vst [vmem:[%s120 + $0x8] sm:$0xff] %v251
        %s253 = sadd.s32 %s122, 16
        %s254 = sld [smem:[#allocation3 + %s253]]
        %s255 = scalar_lea.vmem [#allocation4], %s254
        %v256 = vld [vmem:[%s255] sm:$0x1]
        %s257 = sadd.s32 %s122, 17
        %s258 = sld [smem:[#allocation3 + %s257]]
        %s259 = scalar_lea.vmem [#allocation4], %s258
        %v260 = vld [vmem:[%s259] sm:$0x1]
        %s261 = sadd.s32 %s122, 18
        %s262 = sld [smem:[#allocation3 + %s261]]
        %s263 = scalar_lea.vmem [#allocation4], %s262
        %v264 = vld [vmem:[%s263] sm:$0x1]
        %s265 = sadd.s32 %s122, 19
        %s266 = sld [smem:[#allocation3 + %s265]]
        %s267 = scalar_lea.vmem [#allocation4], %s266
        %v268 = vld [vmem:[%s267] sm:$0x1]
        %s269 = sadd.s32 %s122, 20
        %s270 = sld [smem:[#allocation3 + %s269]]
        %s271 = scalar_lea.vmem [#allocation4], %s270
        %v272 = vld [vmem:[%s271] sm:$0x1]
        %s273 = sadd.s32 %s122, 21
        %s274 = sld [smem:[#allocation3 + %s273]]
        %s275 = scalar_lea.vmem [#allocation4], %s274
        %v276 = vld [vmem:[%s275] sm:$0x1]
        %s277 = sadd.s32 %s122, 22
        %s278 = sld [smem:[#allocation3 + %s277]]
        %s279 = scalar_lea.vmem [#allocation4], %s278
        %v280 = vld [vmem:[%s279] sm:$0x1]
        %s281 = sadd.s32 %s122, 23
        %s282 = sld [smem:[#allocation3 + %s281]]
        %s283 = scalar_lea.vmem [#allocation4], %s282
        %v284 = vld [vmem:[%s283] sm:$0x1]
        %v286 = vrot.slane %v260, 7
        %v289 = vrot.slane %v264, 6
        %v292 = vrot.slane %v268, 5
        %v295 = vrot.slane %v272, 4
        %v298 = vrot.slane %v276, 3
        %v301 = vrot.slane %v280, 2
        %v304 = vrot.slane %v284, 1
        %v306 = vsel %vm175, %v256, %v286
        %v307 = vsel %vm177, %v306, %v289
        %v308 = vsel %vm179, %v307, %v292
        %v309 = vsel %vm181, %v308, %v295
        %v310 = vsel %vm183, %v309, %v298
        %v311 = vsel %vm185, %v310, %v301
        %v312 = vsel %vm187, %v311, %v304
        %v313 = vtanh.pop %v312
        %314 = vst [vmem:[%s120 + $0x10] sm:$0xff] %v313
        %s315 = sadd.s32 %s122, 24
        %s316 = sld [smem:[#allocation3 + %s315]]
        %s317 = scalar_lea.vmem [#allocation4], %s316
        %v318 = vld [vmem:[%s317] sm:$0x1]
        %s319 = sadd.s32 %s122, 25
        %s320 = sld [smem:[#allocation3 + %s319]]
        %s321 = scalar_lea.vmem [#allocation4], %s320
        %v322 = vld [vmem:[%s321] sm:$0x1]
        %s323 = sadd.s32 %s122, 26
        %s324 = sld [smem:[#allocation3 + %s323]]
        %s325 = scalar_lea.vmem [#allocation4], %s324
        %v326 = vld [vmem:[%s325] sm:$0x1]
        %s327 = sadd.s32 %s122, 27
        %s328 = sld [smem:[#allocation3 + %s327]]
        %s329 = scalar_lea.vmem [#allocation4], %s328
        %v330 = vld [vmem:[%s329] sm:$0x1]
        %s331 = sadd.s32 %s122, 28
        %s332 = sld [smem:[#allocation3 + %s331]]
        %s333 = scalar_lea.vmem [#allocation4], %s332
        %v334 = vld [vmem:[%s333] sm:$0x1]
        %s335 = sadd.s32 %s122, 29
        %s336 = sld [smem:[#allocation3 + %s335]]
        %s337 = scalar_lea.vmem [#allocation4], %s336
        %v338 = vld [vmem:[%s337] sm:$0x1]
        %s339 = sadd.s32 %s122, 30
        %s340 = sld [smem:[#allocation3 + %s339]]
        %s341 = scalar_lea.vmem [#allocation4], %s340
        %v342 = vld [vmem:[%s341] sm:$0x1]
        %s343 = sadd.s32 %s122, 31
        %s344 = sld [smem:[#allocation3 + %s343]]
        %s345 = scalar_lea.vmem [#allocation4], %s344
        %v346 = vld [vmem:[%s345] sm:$0x1]
        %v348 = vrot.slane %v322, 7
        %v351 = vrot.slane %v326, 6
        %v354 = vrot.slane %v330, 5
        %v357 = vrot.slane %v334, 4
        %v360 = vrot.slane %v338, 3
        %v363 = vrot.slane %v342, 2
        %v366 = vrot.slane %v346, 1
        %v368 = vsel %vm175, %v318, %v348
        %v369 = vsel %vm177, %v368, %v351
        %v370 = vsel %vm179, %v369, %v354
        %v371 = vsel %vm181, %v370, %v357
        %v372 = vsel %vm183, %v371, %v360
        %v373 = vsel %vm185, %v372, %v363
        %v374 = vsel %vm187, %v373, %v366
        %v375 = vtanh.pop %v374
        %376 = vst [vmem:[%s120 + $0x18] sm:$0xff] %v375
        %s377 = sadd.s32 %s122, 32
        %s378 = sld [smem:[#allocation3 + %s377]]
        %s379 = scalar_lea.vmem [#allocation4], %s378
        %v380 = vld [vmem:[%s379] sm:$0x1]
        %s381 = sadd.s32 %s122, 33
        %s382 = sld [smem:[#allocation3 + %s381]]
        %s383 = scalar_lea.vmem [#allocation4], %s382
        %v384 = vld [vmem:[%s383] sm:$0x1]
        %s385 = sadd.s32 %s122, 34
        %s386 = sld [smem:[#allocation3 + %s385]]
        %s387 = scalar_lea.vmem [#allocation4], %s386
        %v388 = vld [vmem:[%s387] sm:$0x1]
        %s389 = sadd.s32 %s122, 35
        %s390 = sld [smem:[#allocation3 + %s389]]
        %s391 = scalar_lea.vmem [#allocation4], %s390
        %v392 = vld [vmem:[%s391] sm:$0x1]
        %s393 = sadd.s32 %s122, 36
        %s394 = sld [smem:[#allocation3 + %s393]]
        %s395 = scalar_lea.vmem [#allocation4], %s394
        %v396 = vld [vmem:[%s395] sm:$0x1]
        %s397 = sadd.s32 %s122, 37
        %s398 = sld [smem:[#allocation3 + %s397]]
        %s399 = scalar_lea.vmem [#allocation4], %s398
        %v400 = vld [vmem:[%s399] sm:$0x1]
        %s401 = sadd.s32 %s122, 38
        %s402 = sld [smem:[#allocation3 + %s401]]
        %s403 = scalar_lea.vmem [#allocation4], %s402
        %v404 = vld [vmem:[%s403] sm:$0x1]
        %s405 = sadd.s32 %s122, 39
        %s406 = sld [smem:[#allocation3 + %s405]]
        %s407 = scalar_lea.vmem [#allocation4], %s406
        %v408 = vld [vmem:[%s407] sm:$0x1]
        %v410 = vrot.slane %v384, 7
        %v413 = vrot.slane %v388, 6
        %v416 = vrot.slane %v392, 5
        %v419 = vrot.slane %v396, 4
        %v422 = vrot.slane %v400, 3
        %v425 = vrot.slane %v404, 2
        %v428 = vrot.slane %v408, 1
        %v430 = vsel %vm175, %v380, %v410
        %v431 = vsel %vm177, %v430, %v413
        %v432 = vsel %vm179, %v431, %v416
        %v433 = vsel %vm181, %v432, %v419
        %v434 = vsel %vm183, %v433, %v422
        %v435 = vsel %vm185, %v434, %v425
        %v436 = vsel %vm187, %v435, %v428
        %v437 = vtanh.pop %v436
        %438 = vst [vmem:[%s120 + $0x20] sm:$0xff] %v437
        %s439 = sadd.s32 %s122, 40
        %s440 = sld [smem:[#allocation3 + %s439]]
        %s441 = scalar_lea.vmem [#allocation4], %s440
        %v442 = vld [vmem:[%s441] sm:$0x1]
        %s443 = sadd.s32 %s122, 41
        %s444 = sld [smem:[#allocation3 + %s443]]
        %s445 = scalar_lea.vmem [#allocation4], %s444
        %v446 = vld [vmem:[%s445] sm:$0x1]
        %s447 = sadd.s32 %s122, 42
        %s448 = sld [smem:[#allocation3 + %s447]]
        %s449 = scalar_lea.vmem [#allocation4], %s448
        %v450 = vld [vmem:[%s449] sm:$0x1]
        %s451 = sadd.s32 %s122, 43
        %s452 = sld [smem:[#allocation3 + %s451]]
        %s453 = scalar_lea.vmem [#allocation4], %s452
        %v454 = vld [vmem:[%s453] sm:$0x1]
        %s455 = sadd.s32 %s122, 44
        %s456 = sld [smem:[#allocation3 + %s455]]
        %s457 = scalar_lea.vmem [#allocation4], %s456
        %v458 = vld [vmem:[%s457] sm:$0x1]
        %s459 = sadd.s32 %s122, 45
        %s460 = sld [smem:[#allocation3 + %s459]]
        %s461 = scalar_lea.vmem [#allocation4], %s460
        %v462 = vld [vmem:[%s461] sm:$0x1]
        %s463 = sadd.s32 %s122, 46
        %s464 = sld [smem:[#allocation3 + %s463]]
        %s465 = scalar_lea.vmem [#allocation4], %s464
        %v466 = vld [vmem:[%s465] sm:$0x1]
        %s467 = sadd.s32 %s122, 47
        %s468 = sld [smem:[#allocation3 + %s467]]
        %s469 = scalar_lea.vmem [#allocation4], %s468
        %v470 = vld [vmem:[%s469] sm:$0x1]
        %v472 = vrot.slane %v446, 7
        %v475 = vrot.slane %v450, 6
        %v478 = vrot.slane %v454, 5
        %v481 = vrot.slane %v458, 4
        %v484 = vrot.slane %v462, 3
        %v487 = vrot.slane %v466, 2
        %v490 = vrot.slane %v470, 1
        %v492 = vsel %vm175, %v442, %v472
        %v493 = vsel %vm177, %v492, %v475
        %v494 = vsel %vm179, %v493, %v478
        %v495 = vsel %vm181, %v494, %v481
        %v496 = vsel %vm183, %v495, %v484
        %v497 = vsel %vm185, %v496, %v487
        %v498 = vsel %vm187, %v497, %v490
        %v499 = vtanh.pop %v498
        %500 = vst [vmem:[%s120 + $0x28] sm:$0xff] %v499
        %s501 = sadd.s32 %s122, 48
        %s502 = sld [smem:[#allocation3 + %s501]]
        %s503 = scalar_lea.vmem [#allocation4], %s502
        %v504 = vld [vmem:[%s503] sm:$0x1]
        %s505 = sadd.s32 %s122, 49
        %s506 = sld [smem:[#allocation3 + %s505]]
        %s507 = scalar_lea.vmem [#allocation4], %s506
        %v508 = vld [vmem:[%s507] sm:$0x1]
        %s509 = sadd.s32 %s122, 50
        %s510 = sld [smem:[#allocation3 + %s509]]
        %s511 = scalar_lea.vmem [#allocation4], %s510
        %v512 = vld [vmem:[%s511] sm:$0x1]
        %s513 = sadd.s32 %s122, 51
        %s514 = sld [smem:[#allocation3 + %s513]]
        %s515 = scalar_lea.vmem [#allocation4], %s514
        %v516 = vld [vmem:[%s515] sm:$0x1]
        %s517 = sadd.s32 %s122, 52
        %s518 = sld [smem:[#allocation3 + %s517]]
        %s519 = scalar_lea.vmem [#allocation4], %s518
        %v520 = vld [vmem:[%s519] sm:$0x1]
        %s521 = sadd.s32 %s122, 53
        %s522 = sld [smem:[#allocation3 + %s521]]
        %s523 = scalar_lea.vmem [#allocation4], %s522
        %v524 = vld [vmem:[%s523] sm:$0x1]
        %s525 = sadd.s32 %s122, 54
        %s526 = sld [smem:[#allocation3 + %s525]]
        %s527 = scalar_lea.vmem [#allocation4], %s526
        %v528 = vld [vmem:[%s527] sm:$0x1]
        %s529 = sadd.s32 %s122, 55
        %s530 = sld [smem:[#allocation3 + %s529]]
        %s531 = scalar_lea.vmem [#allocation4], %s530
        %v532 = vld [vmem:[%s531] sm:$0x1]
        %v534 = vrot.slane %v508, 7
        %v537 = vrot.slane %v512, 6
        %v540 = vrot.slane %v516, 5
        %v543 = vrot.slane %v520, 4
        %v546 = vrot.slane %v524, 3
        %v549 = vrot.slane %v528, 2
        %v552 = vrot.slane %v532, 1
        %v554 = vsel %vm175, %v504, %v534
        %v555 = vsel %vm177, %v554, %v537
        %v556 = vsel %vm179, %v555, %v540
        %v557 = vsel %vm181, %v556, %v543
        %v558 = vsel %vm183, %v557, %v546
        %v559 = vsel %vm185, %v558, %v549
        %v560 = vsel %vm187, %v559, %v552
        %v561 = vtanh.pop %v560
        %562 = vst [vmem:[%s120 + $0x30] sm:$0xff] %v561
        %s563 = sadd.s32 %s122, 56
        %s564 = sld [smem:[#allocation3 + %s563]]
        %s565 = scalar_lea.vmem [#allocation4], %s564
        %v566 = vld [vmem:[%s565] sm:$0x1]
        %s567 = sadd.s32 %s122, 57
        %s568 = sld [smem:[#allocation3 + %s567]]
        %s569 = scalar_lea.vmem [#allocation4], %s568
        %v570 = vld [vmem:[%s569] sm:$0x1]
        %s571 = sadd.s32 %s122, 58
        %s572 = sld [smem:[#allocation3 + %s571]]
        %s573 = scalar_lea.vmem [#allocation4], %s572
        %v574 = vld [vmem:[%s573] sm:$0x1]
        %s575 = sadd.s32 %s122, 59
        %s576 = sld [smem:[#allocation3 + %s575]]
        %s577 = scalar_lea.vmem [#allocation4], %s576
        %v578 = vld [vmem:[%s577] sm:$0x1]
        %s579 = sadd.s32 %s122, 60
        %s580 = sld [smem:[#allocation3 + %s579]]
        %s581 = scalar_lea.vmem [#allocation4], %s580
        %v582 = vld [vmem:[%s581] sm:$0x1]
        %s583 = sadd.s32 %s122, 61
        %s584 = sld [smem:[#allocation3 + %s583]]
        %s585 = scalar_lea.vmem [#allocation4], %s584
        %v586 = vld [vmem:[%s585] sm:$0x1]
        %s587 = sadd.s32 %s122, 62
        %s588 = sld [smem:[#allocation3 + %s587]]
        %s589 = scalar_lea.vmem [#allocation4], %s588
        %v590 = vld [vmem:[%s589] sm:$0x1]
        %s591 = sadd.s32 %s122, 63
        %s592 = sld [smem:[#allocation3 + %s591]]
        %s593 = scalar_lea.vmem [#allocation4], %s592
        %v594 = vld [vmem:[%s593] sm:$0x1]
        %v596 = vrot.slane %v570, 7
        %v599 = vrot.slane %v574, 6
        %v602 = vrot.slane %v578, 5
        %v605 = vrot.slane %v582, 4
        %v608 = vrot.slane %v586, 3
        %v611 = vrot.slane %v590, 2
        %v614 = vrot.slane %v594, 1
        %v616 = vsel %vm175, %v566, %v596
        %v617 = vsel %vm177, %v616, %v599
        %v618 = vsel %vm179, %v617, %v602
        %v619 = vsel %vm181, %v618, %v605
        %v620 = vsel %vm183, %v619, %v608
        %v621 = vsel %vm185, %v620, %v611
        %v622 = vsel %vm187, %v621, %v614
        %v623 = vtanh.pop %v622
        %624 = vst [vmem:[%s120 + $0x38] sm:$0xff] %v623
        %s625 = sadd.s32 %s122, 64
        %s626 = sld [smem:[#allocation3 + %s625]]
        %s627 = scalar_lea.vmem [#allocation4], %s626
        %v628 = vld [vmem:[%s627] sm:$0x1]
        %s629 = sadd.s32 %s122, 65
        %s630 = sld [smem:[#allocation3 + %s629]]
        %s631 = scalar_lea.vmem [#allocation4], %s630
        %v632 = vld [vmem:[%s631] sm:$0x1]
        %s633 = sadd.s32 %s122, 66
        %s634 = sld [smem:[#allocation3 + %s633]]
        %s635 = scalar_lea.vmem [#allocation4], %s634
        %v636 = vld [vmem:[%s635] sm:$0x1]
        %s637 = sadd.s32 %s122, 67
        %s638 = sld [smem:[#allocation3 + %s637]]
        %s639 = scalar_lea.vmem [#allocation4], %s638
        %v640 = vld [vmem:[%s639] sm:$0x1]
        %s641 = sadd.s32 %s122, 68
        %s642 = sld [smem:[#allocation3 + %s641]]
        %s643 = scalar_lea.vmem [#allocation4], %s642
        %v644 = vld [vmem:[%s643] sm:$0x1]
        %s645 = sadd.s32 %s122, 69
        %s646 = sld [smem:[#allocation3 + %s645]]
        %s647 = scalar_lea.vmem [#allocation4], %s646
        %v648 = vld [vmem:[%s647] sm:$0x1]
        %s649 = sadd.s32 %s122, 70
        %s650 = sld [smem:[#allocation3 + %s649]]
        %s651 = scalar_lea.vmem [#allocation4], %s650
        %v652 = vld [vmem:[%s651] sm:$0x1]
        %s653 = sadd.s32 %s122, 71
        %s654 = sld [smem:[#allocation3 + %s653]]
        %s655 = scalar_lea.vmem [#allocation4], %s654
        %v656 = vld [vmem:[%s655] sm:$0x1]
        %v658 = vrot.slane %v632, 7
        %v661 = vrot.slane %v636, 6
        %v664 = vrot.slane %v640, 5
        %v667 = vrot.slane %v644, 4
        %v670 = vrot.slane %v648, 3
        %v673 = vrot.slane %v652, 2
        %v676 = vrot.slane %v656, 1
        %v678 = vsel %vm175, %v628, %v658
        %v679 = vsel %vm177, %v678, %v661
        %v680 = vsel %vm179, %v679, %v664
        %v681 = vsel %vm181, %v680, %v667
        %v682 = vsel %vm183, %v681, %v670
        %v683 = vsel %vm185, %v682, %v673
        %v684 = vsel %vm187, %v683, %v676
        %v685 = vtanh.pop %v684
        %686 = vst [vmem:[%s120 + $0x40] sm:$0xff] %v685
        %s687 = sadd.s32 %s122, 72
        %s688 = sld [smem:[#allocation3 + %s687]]
        %s689 = scalar_lea.vmem [#allocation4], %s688
        %v690 = vld [vmem:[%s689] sm:$0x1]
        %s691 = sadd.s32 %s122, 73
        %s692 = sld [smem:[#allocation3 + %s691]]
        %s693 = scalar_lea.vmem [#allocation4], %s692
        %v694 = vld [vmem:[%s693] sm:$0x1]
        %s695 = sadd.s32 %s122, 74
        %s696 = sld [smem:[#allocation3 + %s695]]
        %s697 = scalar_lea.vmem [#allocation4], %s696
        %v698 = vld [vmem:[%s697] sm:$0x1]
        %s699 = sadd.s32 %s122, 75
        %s700 = sld [smem:[#allocation3 + %s699]]
        %s701 = scalar_lea.vmem [#allocation4], %s700
        %v702 = vld [vmem:[%s701] sm:$0x1]
        %s703 = sadd.s32 %s122, 76
        %s704 = sld [smem:[#allocation3 + %s703]]
        %s705 = scalar_lea.vmem [#allocation4], %s704
        %v706 = vld [vmem:[%s705] sm:$0x1]
        %s707 = sadd.s32 %s122, 77
        %s708 = sld [smem:[#allocation3 + %s707]]
        %s709 = scalar_lea.vmem [#allocation4], %s708
        %v710 = vld [vmem:[%s709] sm:$0x1]
        %s711 = sadd.s32 %s122, 78
        %s712 = sld [smem:[#allocation3 + %s711]]
        %s713 = scalar_lea.vmem [#allocation4], %s712
        %v714 = vld [vmem:[%s713] sm:$0x1]
        %s715 = sadd.s32 %s122, 79
        %s716 = sld [smem:[#allocation3 + %s715]]
        %s717 = scalar_lea.vmem [#allocation4], %s716
        %v718 = vld [vmem:[%s717] sm:$0x1]
        %v720 = vrot.slane %v694, 7
        %v723 = vrot.slane %v698, 6
        %v726 = vrot.slane %v702, 5
        %v729 = vrot.slane %v706, 4
        %v732 = vrot.slane %v710, 3
        %v735 = vrot.slane %v714, 2
        %v738 = vrot.slane %v718, 1
        %v740 = vsel %vm175, %v690, %v720
        %v741 = vsel %vm177, %v740, %v723
        %v742 = vsel %vm179, %v741, %v726
        %v743 = vsel %vm181, %v742, %v729
        %v744 = vsel %vm183, %v743, %v732
        %v745 = vsel %vm185, %v744, %v735
        %v746 = vsel %vm187, %v745, %v738
        %v747 = vtanh.pop %v746
        %748 = vst [vmem:[%s120 + $0x48] sm:$0xff] %v747
        %s749 = sadd.s32 %s122, 80
        %s750 = sld [smem:[#allocation3 + %s749]]
        %s751 = scalar_lea.vmem [#allocation4], %s750
        %v752 = vld [vmem:[%s751] sm:$0x1]
        %s753 = sadd.s32 %s122, 81
        %s754 = sld [smem:[#allocation3 + %s753]]
        %s755 = scalar_lea.vmem [#allocation4], %s754
        %v756 = vld [vmem:[%s755] sm:$0x1]
        %s757 = sadd.s32 %s122, 82
        %s758 = sld [smem:[#allocation3 + %s757]]
        %s759 = scalar_lea.vmem [#allocation4], %s758
        %v760 = vld [vmem:[%s759] sm:$0x1]
        %s761 = sadd.s32 %s122, 83
        %s762 = sld [smem:[#allocation3 + %s761]]
        %s763 = scalar_lea.vmem [#allocation4], %s762
        %v764 = vld [vmem:[%s763] sm:$0x1]
        %s765 = sadd.s32 %s122, 84
        %s766 = sld [smem:[#allocation3 + %s765]]
        %s767 = scalar_lea.vmem [#allocation4], %s766
        %v768 = vld [vmem:[%s767] sm:$0x1]
        %s769 = sadd.s32 %s122, 85
        %s770 = sld [smem:[#allocation3 + %s769]]
        %s771 = scalar_lea.vmem [#allocation4], %s770
        %v772 = vld [vmem:[%s771] sm:$0x1]
        %s773 = sadd.s32 %s122, 86
        %s774 = sld [smem:[#allocation3 + %s773]]
        %s775 = scalar_lea.vmem [#allocation4], %s774
        %v776 = vld [vmem:[%s775] sm:$0x1]
        %s777 = sadd.s32 %s122, 87
        %s778 = sld [smem:[#allocation3 + %s777]]
        %s779 = scalar_lea.vmem [#allocation4], %s778
        %v780 = vld [vmem:[%s779] sm:$0x1]
        %v782 = vrot.slane %v756, 7
        %v785 = vrot.slane %v760, 6
        %v788 = vrot.slane %v764, 5
        %v791 = vrot.slane %v768, 4
        %v794 = vrot.slane %v772, 3
        %v797 = vrot.slane %v776, 2
        %v800 = vrot.slane %v780, 1
        %v802 = vsel %vm175, %v752, %v782
        %v803 = vsel %vm177, %v802, %v785
        %v804 = vsel %vm179, %v803, %v788
        %v805 = vsel %vm181, %v804, %v791
        %v806 = vsel %vm183, %v805, %v794
        %v807 = vsel %vm185, %v806, %v797
        %v808 = vsel %vm187, %v807, %v800
        %v809 = vtanh.pop %v808
        %810 = vst [vmem:[%s120 + $0x50] sm:$0xff] %v809
        %s811 = sadd.s32 %s122, 88
        %s812 = sld [smem:[#allocation3 + %s811]]
        %s813 = scalar_lea.vmem [#allocation4], %s812
        %v814 = vld [vmem:[%s813] sm:$0x1]
        %s815 = sadd.s32 %s122, 89
        %s816 = sld [smem:[#allocation3 + %s815]]
        %s817 = scalar_lea.vmem [#allocation4], %s816
        %v818 = vld [vmem:[%s817] sm:$0x1]
        %s819 = sadd.s32 %s122, 90
        %s820 = sld [smem:[#allocation3 + %s819]]
        %s821 = scalar_lea.vmem [#allocation4], %s820
        %v822 = vld [vmem:[%s821] sm:$0x1]
        %s823 = sadd.s32 %s122, 91
        %s824 = sld [smem:[#allocation3 + %s823]]
        %s825 = scalar_lea.vmem [#allocation4], %s824
        %v826 = vld [vmem:[%s825] sm:$0x1]
        %s827 = sadd.s32 %s122, 92
        %s828 = sld [smem:[#allocation3 + %s827]]
        %s829 = scalar_lea.vmem [#allocation4], %s828
        %v830 = vld [vmem:[%s829] sm:$0x1]
        %s831 = sadd.s32 %s122, 93
        %s832 = sld [smem:[#allocation3 + %s831]]
        %s833 = scalar_lea.vmem [#allocation4], %s832
        %v834 = vld [vmem:[%s833] sm:$0x1]
        %s835 = sadd.s32 %s122, 94
        %s836 = sld [smem:[#allocation3 + %s835]]
        %s837 = scalar_lea.vmem [#allocation4], %s836
        %v838 = vld [vmem:[%s837] sm:$0x1]
        %s839 = sadd.s32 %s122, 95
        %s840 = sld [smem:[#allocation3 + %s839]]
        %s841 = scalar_lea.vmem [#allocation4], %s840
        %v842 = vld [vmem:[%s841] sm:$0x1]
        %v844 = vrot.slane %v818, 7
        %v847 = vrot.slane %v822, 6
        %v850 = vrot.slane %v826, 5
        %v853 = vrot.slane %v830, 4
        %v856 = vrot.slane %v834, 3
        %v859 = vrot.slane %v838, 2
        %v862 = vrot.slane %v842, 1
        %v864 = vsel %vm175, %v814, %v844
        %v865 = vsel %vm177, %v864, %v847
        %v866 = vsel %vm179, %v865, %v850
        %v867 = vsel %vm181, %v866, %v853
        %v868 = vsel %vm183, %v867, %v856
        %v869 = vsel %vm185, %v868, %v859
        %v870 = vsel %vm187, %v869, %v862
        %v871 = vtanh.pop %v870
        %872 = vst [vmem:[%s120 + $0x58] sm:$0xff] %v871
        %s873 = sadd.s32 %s122, 96
        %s874 = sld [smem:[#allocation3 + %s873]]
        %s875 = scalar_lea.vmem [#allocation4], %s874
        %v876 = vld [vmem:[%s875] sm:$0x1]
        %s877 = sadd.s32 %s122, 97
        %s878 = sld [smem:[#allocation3 + %s877]]
        %s879 = scalar_lea.vmem [#allocation4], %s878
        %v880 = vld [vmem:[%s879] sm:$0x1]
        %s881 = sadd.s32 %s122, 98
        %s882 = sld [smem:[#allocation3 + %s881]]
        %s883 = scalar_lea.vmem [#allocation4], %s882
        %v884 = vld [vmem:[%s883] sm:$0x1]
        %s885 = sadd.s32 %s122, 99
        %s886 = sld [smem:[#allocation3 + %s885]]
        %s887 = scalar_lea.vmem [#allocation4], %s886
        %v888 = vld [vmem:[%s887] sm:$0x1]
        %s889 = sadd.s32 %s122, 100
        %s890 = sld [smem:[#allocation3 + %s889]]
        %s891 = scalar_lea.vmem [#allocation4], %s890
        %v892 = vld [vmem:[%s891] sm:$0x1]
        %s893 = sadd.s32 %s122, 101
        %s894 = sld [smem:[#allocation3 + %s893]]
        %s895 = scalar_lea.vmem [#allocation4], %s894
        %v896 = vld [vmem:[%s895] sm:$0x1]
        %s897 = sadd.s32 %s122, 102
        %s898 = sld [smem:[#allocation3 + %s897]]
        %s899 = scalar_lea.vmem [#allocation4], %s898
        %v900 = vld [vmem:[%s899] sm:$0x1]
        %s901 = sadd.s32 %s122, 103
        %s902 = sld [smem:[#allocation3 + %s901]]
        %s903 = scalar_lea.vmem [#allocation4], %s902
        %v904 = vld [vmem:[%s903] sm:$0x1]
        %v906 = vrot.slane %v880, 7
        %v909 = vrot.slane %v884, 6
        %v912 = vrot.slane %v888, 5
        %v915 = vrot.slane %v892, 4
        %v918 = vrot.slane %v896, 3
        %v921 = vrot.slane %v900, 2
        %v924 = vrot.slane %v904, 1
        %v926 = vsel %vm175, %v876, %v906
        %v927 = vsel %vm177, %v926, %v909
        %v928 = vsel %vm179, %v927, %v912
        %v929 = vsel %vm181, %v928, %v915
        %v930 = vsel %vm183, %v929, %v918
        %v931 = vsel %vm185, %v930, %v921
        %v932 = vsel %vm187, %v931, %v924
        %v933 = vtanh.pop %v932
        %934 = vst [vmem:[%s120 + $0x60] sm:$0xff] %v933
        %s935 = sadd.s32 %s122, 104
        %s936 = sld [smem:[#allocation3 + %s935]]
        %s937 = scalar_lea.vmem [#allocation4], %s936
        %v938 = vld [vmem:[%s937] sm:$0x1]
        %s939 = sadd.s32 %s122, 105
        %s940 = sld [smem:[#allocation3 + %s939]]
        %s941 = scalar_lea.vmem [#allocation4], %s940
        %v942 = vld [vmem:[%s941] sm:$0x1]
        %s943 = sadd.s32 %s122, 106
        %s944 = sld [smem:[#allocation3 + %s943]]
        %s945 = scalar_lea.vmem [#allocation4], %s944
        %v946 = vld [vmem:[%s945] sm:$0x1]
        %s947 = sadd.s32 %s122, 107
        %s948 = sld [smem:[#allocation3 + %s947]]
        %s949 = scalar_lea.vmem [#allocation4], %s948
        %v950 = vld [vmem:[%s949] sm:$0x1]
        %s951 = sadd.s32 %s122, 108
        %s952 = sld [smem:[#allocation3 + %s951]]
        %s953 = scalar_lea.vmem [#allocation4], %s952
        %v954 = vld [vmem:[%s953] sm:$0x1]
        %s955 = sadd.s32 %s122, 109
        %s956 = sld [smem:[#allocation3 + %s955]]
        %s957 = scalar_lea.vmem [#allocation4], %s956
        %v958 = vld [vmem:[%s957] sm:$0x1]
        %s959 = sadd.s32 %s122, 110
        %s960 = sld [smem:[#allocation3 + %s959]]
        %s961 = scalar_lea.vmem [#allocation4], %s960
        %v962 = vld [vmem:[%s961] sm:$0x1]
        %s963 = sadd.s32 %s122, 111
        %s964 = sld [smem:[#allocation3 + %s963]]
        %s965 = scalar_lea.vmem [#allocation4], %s964
        %v966 = vld [vmem:[%s965] sm:$0x1]
        %v968 = vrot.slane %v942, 7
        %v971 = vrot.slane %v946, 6
        %v974 = vrot.slane %v950, 5
        %v977 = vrot.slane %v954, 4
        %v980 = vrot.slane %v958, 3
        %v983 = vrot.slane %v962, 2
        %v986 = vrot.slane %v966, 1
        %v988 = vsel %vm175, %v938, %v968
        %v989 = vsel %vm177, %v988, %v971
        %v990 = vsel %vm179, %v989, %v974
        %v991 = vsel %vm181, %v990, %v977
        %v992 = vsel %vm183, %v991, %v980
        %v993 = vsel %vm185, %v992, %v983
        %v994 = vsel %vm187, %v993, %v986
        %v995 = vtanh.pop %v994
        %996 = vst [vmem:[%s120 + $0x68] sm:$0xff] %v995
        %s997 = sadd.s32 %s122, 112
        %s998 = sld [smem:[#allocation3 + %s997]]
        %s999 = scalar_lea.vmem [#allocation4], %s998
        %v1000 = vld [vmem:[%s999] sm:$0x1]
        %s1001 = sadd.s32 %s122, 113
        %s1002 = sld [smem:[#allocation3 + %s1001]]
        %s1003 = scalar_lea.vmem [#allocation4], %s1002
        %v1004 = vld [vmem:[%s1003] sm:$0x1]
        %s1005 = sadd.s32 %s122, 114
        %s1006 = sld [smem:[#allocation3 + %s1005]]
        %s1007 = scalar_lea.vmem [#allocation4], %s1006
        %v1008 = vld [vmem:[%s1007] sm:$0x1]
        %s1009 = sadd.s32 %s122, 115
        %s1010 = sld [smem:[#allocation3 + %s1009]]
        %s1011 = scalar_lea.vmem [#allocation4], %s1010
        %v1012 = vld [vmem:[%s1011] sm:$0x1]
        %s1013 = sadd.s32 %s122, 116
        %s1014 = sld [smem:[#allocation3 + %s1013]]
        %s1015 = scalar_lea.vmem [#allocation4], %s1014
        %v1016 = vld [vmem:[%s1015] sm:$0x1]
        %s1017 = sadd.s32 %s122, 117
        %s1018 = sld [smem:[#allocation3 + %s1017]]
        %s1019 = scalar_lea.vmem [#allocation4], %s1018
        %v1020 = vld [vmem:[%s1019] sm:$0x1]
        %s1021 = sadd.s32 %s122, 118
        %s1022 = sld [smem:[#allocation3 + %s1021]]
        %s1023 = scalar_lea.vmem [#allocation4], %s1022
        %v1024 = vld [vmem:[%s1023] sm:$0x1]
        %s1025 = sadd.s32 %s122, 119
        %s1026 = sld [smem:[#allocation3 + %s1025]]
        %s1027 = scalar_lea.vmem [#allocation4], %s1026
        %v1028 = vld [vmem:[%s1027] sm:$0x1]
        %v1030 = vrot.slane %v1004, 7
        %v1033 = vrot.slane %v1008, 6
        %v1036 = vrot.slane %v1012, 5
        %v1039 = vrot.slane %v1016, 4
        %v1042 = vrot.slane %v1020, 3
        %v1045 = vrot.slane %v1024, 2
        %v1048 = vrot.slane %v1028, 1
        %v1050 = vsel %vm175, %v1000, %v1030
        %v1051 = vsel %vm177, %v1050, %v1033
        %v1052 = vsel %vm179, %v1051, %v1036
        %v1053 = vsel %vm181, %v1052, %v1039
        %v1054 = vsel %vm183, %v1053, %v1042
        %v1055 = vsel %vm185, %v1054, %v1045
        %v1056 = vsel %vm187, %v1055, %v1048
        %v1057 = vtanh.pop %v1056
        %1058 = vst [vmem:[%s120 + $0x70] sm:$0xff] %v1057
        %s1059 = sadd.s32 %s122, 120
        %s1060 = sld [smem:[#allocation3 + %s1059]]
        %s1061 = scalar_lea.vmem [#allocation4], %s1060
        %v1062 = vld [vmem:[%s1061] sm:$0x1]
        %s1063 = sadd.s32 %s122, 121
        %s1064 = sld [smem:[#allocation3 + %s1063]]
        %s1065 = scalar_lea.vmem [#allocation4], %s1064
        %v1066 = vld [vmem:[%s1065] sm:$0x1]
        %s1067 = sadd.s32 %s122, 122
        %s1068 = sld [smem:[#allocation3 + %s1067]]
        %s1069 = scalar_lea.vmem [#allocation4], %s1068
        %v1070 = vld [vmem:[%s1069] sm:$0x1]
        %s1071 = sadd.s32 %s122, 123
        %s1072 = sld [smem:[#allocation3 + %s1071]]
        %s1073 = scalar_lea.vmem [#allocation4], %s1072
        %v1074 = vld [vmem:[%s1073] sm:$0x1]
        %s1075 = sadd.s32 %s122, 124
        %s1076 = sld [smem:[#allocation3 + %s1075]]
        %s1077 = scalar_lea.vmem [#allocation4], %s1076
        %v1078 = vld [vmem:[%s1077] sm:$0x1]
        %s1079 = sadd.s32 %s122, 125
        %s1080 = sld [smem:[#allocation3 + %s1079]]
        %s1081 = scalar_lea.vmem [#allocation4], %s1080
        %v1082 = vld [vmem:[%s1081] sm:$0x1]
        %s1083 = sadd.s32 %s122, 126
        %s1084 = sld [smem:[#allocation3 + %s1083]]
        %s1085 = scalar_lea.vmem [#allocation4], %s1084
        %v1086 = vld [vmem:[%s1085] sm:$0x1]
        %s1087 = sadd.s32 %s122, 127
        %s1088 = sld [smem:[#allocation3 + %s1087]]
        %s1089 = scalar_lea.vmem [#allocation4], %s1088
        %v1090 = vld [vmem:[%s1089] sm:$0x1]
        %v1092 = vrot.slane %v1066, 7
        %v1095 = vrot.slane %v1070, 6
        %v1098 = vrot.slane %v1074, 5
        %v1101 = vrot.slane %v1078, 4
        %v1104 = vrot.slane %v1082, 3
        %v1107 = vrot.slane %v1086, 2
        %v1110 = vrot.slane %v1090, 1
        %v1112 = vsel %vm175, %v1062, %v1092
        %v1113 = vsel %vm177, %v1112, %v1095
        %v1114 = vsel %vm179, %v1113, %v1098
        %v1115 = vsel %vm181, %v1114, %v1101
        %v1116 = vsel %vm183, %v1115, %v1104
        %v1117 = vsel %vm185, %v1116, %v1107
        %v1118 = vsel %vm187, %v1117, %v1110
        %v1119 = vtanh.pop %v1118
        %1120 = vst [vmem:[%s120 + $0x78] sm:$0xff] %v1119
        %s1121 = sadd.s32 %s122, 128
        %s1122 = sld [smem:[#allocation3 + %s1121]]
        %s1123 = scalar_lea.vmem [#allocation4], %s1122
        %v1124 = vld [vmem:[%s1123] sm:$0x1]
        %s1125 = sadd.s32 %s122, 129
        %s1126 = sld [smem:[#allocation3 + %s1125]]
        %s1127 = scalar_lea.vmem [#allocation4], %s1126
        %v1128 = vld [vmem:[%s1127] sm:$0x1]
        %s1129 = sadd.s32 %s122, 130
        %s1130 = sld [smem:[#allocation3 + %s1129]]
        %s1131 = scalar_lea.vmem [#allocation4], %s1130
        %v1132 = vld [vmem:[%s1131] sm:$0x1]
        %s1133 = sadd.s32 %s122, 131
        %s1134 = sld [smem:[#allocation3 + %s1133]]
        %s1135 = scalar_lea.vmem [#allocation4], %s1134
        %v1136 = vld [vmem:[%s1135] sm:$0x1]
        %s1137 = sadd.s32 %s122, 132
        %s1138 = sld [smem:[#allocation3 + %s1137]]
        %s1139 = scalar_lea.vmem [#allocation4], %s1138
        %v1140 = vld [vmem:[%s1139] sm:$0x1]
        %s1141 = sadd.s32 %s122, 133
        %s1142 = sld [smem:[#allocation3 + %s1141]]
        %s1143 = scalar_lea.vmem [#allocation4], %s1142
        %v1144 = vld [vmem:[%s1143] sm:$0x1]
        %s1145 = sadd.s32 %s122, 134
        %s1146 = sld [smem:[#allocation3 + %s1145]]
        %s1147 = scalar_lea.vmem [#allocation4], %s1146
        %v1148 = vld [vmem:[%s1147] sm:$0x1]
        %s1149 = sadd.s32 %s122, 135
        %s1150 = sld [smem:[#allocation3 + %s1149]]
        %s1151 = scalar_lea.vmem [#allocation4], %s1150
        %v1152 = vld [vmem:[%s1151] sm:$0x1]
        %v1154 = vrot.slane %v1128, 7
        %v1157 = vrot.slane %v1132, 6
        %v1160 = vrot.slane %v1136, 5
        %v1163 = vrot.slane %v1140, 4
        %v1166 = vrot.slane %v1144, 3
        %v1169 = vrot.slane %v1148, 2
        %v1172 = vrot.slane %v1152, 1
        %v1174 = vsel %vm175, %v1124, %v1154
        %v1175 = vsel %vm177, %v1174, %v1157
        %v1176 = vsel %vm179, %v1175, %v1160
        %v1177 = vsel %vm181, %v1176, %v1163
        %v1178 = vsel %vm183, %v1177, %v1166
        %v1179 = vsel %vm185, %v1178, %v1169
        %v1180 = vsel %vm187, %v1179, %v1172
        %v1181 = vtanh.pop %v1180
        %1182 = vst [vmem:[%s120 + $0x80] sm:$0xff] %v1181
        %s1183 = sadd.s32 %s122, 136
        %s1184 = sld [smem:[#allocation3 + %s1183]]
        %s1185 = scalar_lea.vmem [#allocation4], %s1184
        %v1186 = vld [vmem:[%s1185] sm:$0x1]
        %s1187 = sadd.s32 %s122, 137
        %s1188 = sld [smem:[#allocation3 + %s1187]]
        %s1189 = scalar_lea.vmem [#allocation4], %s1188
        %v1190 = vld [vmem:[%s1189] sm:$0x1]
        %s1191 = sadd.s32 %s122, 138
        %s1192 = sld [smem:[#allocation3 + %s1191]]
        %s1193 = scalar_lea.vmem [#allocation4], %s1192
        %v1194 = vld [vmem:[%s1193] sm:$0x1]
        %s1195 = sadd.s32 %s122, 139
        %s1196 = sld [smem:[#allocation3 + %s1195]]
        %s1197 = scalar_lea.vmem [#allocation4], %s1196
        %v1198 = vld [vmem:[%s1197] sm:$0x1]
        %s1199 = sadd.s32 %s122, 140
        %s1200 = sld [smem:[#allocation3 + %s1199]]
        %s1201 = scalar_lea.vmem [#allocation4], %s1200
        %v1202 = vld [vmem:[%s1201] sm:$0x1]
        %s1203 = sadd.s32 %s122, 141
        %s1204 = sld [smem:[#allocation3 + %s1203]]
        %s1205 = scalar_lea.vmem [#allocation4], %s1204
        %v1206 = vld [vmem:[%s1205] sm:$0x1]
        %s1207 = sadd.s32 %s122, 142
        %s1208 = sld [smem:[#allocation3 + %s1207]]
        %s1209 = scalar_lea.vmem [#allocation4], %s1208
        %v1210 = vld [vmem:[%s1209] sm:$0x1]
        %s1211 = sadd.s32 %s122, 143
        %s1212 = sld [smem:[#allocation3 + %s1211]]
        %s1213 = scalar_lea.vmem [#allocation4], %s1212
        %v1214 = vld [vmem:[%s1213] sm:$0x1]
        %v1216 = vrot.slane %v1190, 7
        %v1219 = vrot.slane %v1194, 6
        %v1222 = vrot.slane %v1198, 5
        %v1225 = vrot.slane %v1202, 4
        %v1228 = vrot.slane %v1206, 3
        %v1231 = vrot.slane %v1210, 2
        %v1234 = vrot.slane %v1214, 1
        %v1236 = vsel %vm175, %v1186, %v1216
        %v1237 = vsel %vm177, %v1236, %v1219
        %v1238 = vsel %vm179, %v1237, %v1222
        %v1239 = vsel %vm181, %v1238, %v1225
        %v1240 = vsel %vm183, %v1239, %v1228
        %v1241 = vsel %vm185, %v1240, %v1231
        %v1242 = vsel %vm187, %v1241, %v1234
        %v1243 = vtanh.pop %v1242
        %1244 = vst [vmem:[%s120 + $0x88] sm:$0xff] %v1243
        %s1245 = sadd.s32 %s122, 144
        %s1246 = sld [smem:[#allocation3 + %s1245]]
        %s1247 = scalar_lea.vmem [#allocation4], %s1246
        %v1248 = vld [vmem:[%s1247] sm:$0x1]
        %s1249 = sadd.s32 %s122, 145
        %s1250 = sld [smem:[#allocation3 + %s1249]]
        %s1251 = scalar_lea.vmem [#allocation4], %s1250
        %v1252 = vld [vmem:[%s1251] sm:$0x1]
        %s1253 = sadd.s32 %s122, 146
        %s1254 = sld [smem:[#allocation3 + %s1253]]
        %s1255 = scalar_lea.vmem [#allocation4], %s1254
        %v1256 = vld [vmem:[%s1255] sm:$0x1]
        %s1257 = sadd.s32 %s122, 147
        %s1258 = sld [smem:[#allocation3 + %s1257]]
        %s1259 = scalar_lea.vmem [#allocation4], %s1258
        %v1260 = vld [vmem:[%s1259] sm:$0x1]
        %s1261 = sadd.s32 %s122, 148
        %s1262 = sld [smem:[#allocation3 + %s1261]]
        %s1263 = scalar_lea.vmem [#allocation4], %s1262
        %v1264 = vld [vmem:[%s1263] sm:$0x1]
        %s1265 = sadd.s32 %s122, 149
        %s1266 = sld [smem:[#allocation3 + %s1265]]
        %s1267 = scalar_lea.vmem [#allocation4], %s1266
        %v1268 = vld [vmem:[%s1267] sm:$0x1]
        %s1269 = sadd.s32 %s122, 150
        %s1270 = sld [smem:[#allocation3 + %s1269]]
        %s1271 = scalar_lea.vmem [#allocation4], %s1270
        %v1272 = vld [vmem:[%s1271] sm:$0x1]
        %s1273 = sadd.s32 %s122, 151
        %s1274 = sld [smem:[#allocation3 + %s1273]]
        %s1275 = scalar_lea.vmem [#allocation4], %s1274
        %v1276 = vld [vmem:[%s1275] sm:$0x1]
        %v1278 = vrot.slane %v1252, 7
        %v1281 = vrot.slane %v1256, 6
        %v1284 = vrot.slane %v1260, 5
        %v1287 = vrot.slane %v1264, 4
        %v1290 = vrot.slane %v1268, 3
        %v1293 = vrot.slane %v1272, 2
        %v1296 = vrot.slane %v1276, 1
        %v1298 = vsel %vm175, %v1248, %v1278
        %v1299 = vsel %vm177, %v1298, %v1281
        %v1300 = vsel %vm179, %v1299, %v1284
        %v1301 = vsel %vm181, %v1300, %v1287
        %v1302 = vsel %vm183, %v1301, %v1290
        %v1303 = vsel %vm185, %v1302, %v1293
        %v1304 = vsel %vm187, %v1303, %v1296
        %v1305 = vtanh.pop %v1304
        %1306 = vst [vmem:[%s120 + $0x90] sm:$0xff] %v1305
        %s1307 = sadd.s32 %s122, 152
        %s1308 = sld [smem:[#allocation3 + %s1307]]
        %s1309 = scalar_lea.vmem [#allocation4], %s1308
        %v1310 = vld [vmem:[%s1309] sm:$0x1]
        %s1311 = sadd.s32 %s122, 153
        %s1312 = sld [smem:[#allocation3 + %s1311]]
        %s1313 = scalar_lea.vmem [#allocation4], %s1312
        %v1314 = vld [vmem:[%s1313] sm:$0x1]
        %s1315 = sadd.s32 %s122, 154
        %s1316 = sld [smem:[#allocation3 + %s1315]]
        %s1317 = scalar_lea.vmem [#allocation4], %s1316
        %v1318 = vld [vmem:[%s1317] sm:$0x1]
        %s1319 = sadd.s32 %s122, 155
        %s1320 = sld [smem:[#allocation3 + %s1319]]
        %s1321 = scalar_lea.vmem [#allocation4], %s1320
        %v1322 = vld [vmem:[%s1321] sm:$0x1]
        %s1323 = sadd.s32 %s122, 156
        %s1324 = sld [smem:[#allocation3 + %s1323]]
        %s1325 = scalar_lea.vmem [#allocation4], %s1324
        %v1326 = vld [vmem:[%s1325] sm:$0x1]
        %s1327 = sadd.s32 %s122, 157
        %s1328 = sld [smem:[#allocation3 + %s1327]]
        %s1329 = scalar_lea.vmem [#allocation4], %s1328
        %v1330 = vld [vmem:[%s1329] sm:$0x1]
        %s1331 = sadd.s32 %s122, 158
        %s1332 = sld [smem:[#allocation3 + %s1331]]
        %s1333 = scalar_lea.vmem [#allocation4], %s1332
        %v1334 = vld [vmem:[%s1333] sm:$0x1]
        %s1335 = sadd.s32 %s122, 159
        %s1336 = sld [smem:[#allocation3 + %s1335]]
        %s1337 = scalar_lea.vmem [#allocation4], %s1336
        %v1338 = vld [vmem:[%s1337] sm:$0x1]
        %v1340 = vrot.slane %v1314, 7
        %v1343 = vrot.slane %v1318, 6
        %v1346 = vrot.slane %v1322, 5
        %v1349 = vrot.slane %v1326, 4
        %v1352 = vrot.slane %v1330, 3
        %v1355 = vrot.slane %v1334, 2
        %v1358 = vrot.slane %v1338, 1
        %v1360 = vsel %vm175, %v1310, %v1340
        %v1361 = vsel %vm177, %v1360, %v1343
        %v1362 = vsel %vm179, %v1361, %v1346
        %v1363 = vsel %vm181, %v1362, %v1349
        %v1364 = vsel %vm183, %v1363, %v1352
        %v1365 = vsel %vm185, %v1364, %v1355
        %v1366 = vsel %vm187, %v1365, %v1358
        %v1367 = vtanh.pop %v1366
        %1368 = vst [vmem:[%s120 + $0x98] sm:$0xff] %v1367
        %s1369 = sadd.s32 %s122, 160
        %s1370 = sld [smem:[#allocation3 + %s1369]]
        %s1371 = scalar_lea.vmem [#allocation4], %s1370
        %v1372 = vld [vmem:[%s1371] sm:$0x1]
        %s1373 = sadd.s32 %s122, 161
        %s1374 = sld [smem:[#allocation3 + %s1373]]
        %s1375 = scalar_lea.vmem [#allocation4], %s1374
        %v1376 = vld [vmem:[%s1375] sm:$0x1]
        %s1377 = sadd.s32 %s122, 162
        %s1378 = sld [smem:[#allocation3 + %s1377]]
        %s1379 = scalar_lea.vmem [#allocation4], %s1378
        %v1380 = vld [vmem:[%s1379] sm:$0x1]
        %s1381 = sadd.s32 %s122, 163
        %s1382 = sld [smem:[#allocation3 + %s1381]]
        %s1383 = scalar_lea.vmem [#allocation4], %s1382
        %v1384 = vld [vmem:[%s1383] sm:$0x1]
        %s1385 = sadd.s32 %s122, 164
        %s1386 = sld [smem:[#allocation3 + %s1385]]
        %s1387 = scalar_lea.vmem [#allocation4], %s1386
        %v1388 = vld [vmem:[%s1387] sm:$0x1]
        %s1389 = sadd.s32 %s122, 165
        %s1390 = sld [smem:[#allocation3 + %s1389]]
        %s1391 = scalar_lea.vmem [#allocation4], %s1390
        %v1392 = vld [vmem:[%s1391] sm:$0x1]
        %s1393 = sadd.s32 %s122, 166
        %s1394 = sld [smem:[#allocation3 + %s1393]]
        %s1395 = scalar_lea.vmem [#allocation4], %s1394
        %v1396 = vld [vmem:[%s1395] sm:$0x1]
        %s1397 = sadd.s32 %s122, 167
        %s1398 = sld [smem:[#allocation3 + %s1397]]
        %s1399 = scalar_lea.vmem [#allocation4], %s1398
        %v1400 = vld [vmem:[%s1399] sm:$0x1]
        %v1402 = vrot.slane %v1376, 7
        %v1405 = vrot.slane %v1380, 6
        %v1408 = vrot.slane %v1384, 5
        %v1411 = vrot.slane %v1388, 4
        %v1414 = vrot.slane %v1392, 3
        %v1417 = vrot.slane %v1396, 2
        %v1420 = vrot.slane %v1400, 1
        %v1422 = vsel %vm175, %v1372, %v1402
        %v1423 = vsel %vm177, %v1422, %v1405
        %v1424 = vsel %vm179, %v1423, %v1408
        %v1425 = vsel %vm181, %v1424, %v1411
        %v1426 = vsel %vm183, %v1425, %v1414
        %v1427 = vsel %vm185, %v1426, %v1417
        %v1428 = vsel %vm187, %v1427, %v1420
        %v1429 = vtanh.pop %v1428
        %1430 = vst [vmem:[%s120 + $0xa0] sm:$0xff] %v1429
        %s1431 = sadd.s32 %s122, 168
        %s1432 = sld [smem:[#allocation3 + %s1431]]
        %s1433 = scalar_lea.vmem [#allocation4], %s1432
        %v1434 = vld [vmem:[%s1433] sm:$0x1]
        %s1435 = sadd.s32 %s122, 169
        %s1436 = sld [smem:[#allocation3 + %s1435]]
        %s1437 = scalar_lea.vmem [#allocation4], %s1436
        %v1438 = vld [vmem:[%s1437] sm:$0x1]
        %s1439 = sadd.s32 %s122, 170
        %s1440 = sld [smem:[#allocation3 + %s1439]]
        %s1441 = scalar_lea.vmem [#allocation4], %s1440
        %v1442 = vld [vmem:[%s1441] sm:$0x1]
        %s1443 = sadd.s32 %s122, 171
        %s1444 = sld [smem:[#allocation3 + %s1443]]
        %s1445 = scalar_lea.vmem [#allocation4], %s1444
        %v1446 = vld [vmem:[%s1445] sm:$0x1]
        %s1447 = sadd.s32 %s122, 172
        %s1448 = sld [smem:[#allocation3 + %s1447]]
        %s1449 = scalar_lea.vmem [#allocation4], %s1448
        %v1450 = vld [vmem:[%s1449] sm:$0x1]
        %s1451 = sadd.s32 %s122, 173
        %s1452 = sld [smem:[#allocation3 + %s1451]]
        %s1453 = scalar_lea.vmem [#allocation4], %s1452
        %v1454 = vld [vmem:[%s1453] sm:$0x1]
        %s1455 = sadd.s32 %s122, 174
        %s1456 = sld [smem:[#allocation3 + %s1455]]
        %s1457 = scalar_lea.vmem [#allocation4], %s1456
        %v1458 = vld [vmem:[%s1457] sm:$0x1]
        %s1459 = sadd.s32 %s122, 175
        %s1460 = sld [smem:[#allocation3 + %s1459]]
        %s1461 = scalar_lea.vmem [#allocation4], %s1460
        %v1462 = vld [vmem:[%s1461] sm:$0x1]
        %v1464 = vrot.slane %v1438, 7
        %v1467 = vrot.slane %v1442, 6
        %v1470 = vrot.slane %v1446, 5
        %v1473 = vrot.slane %v1450, 4
        %v1476 = vrot.slane %v1454, 3
        %v1479 = vrot.slane %v1458, 2
        %v1482 = vrot.slane %v1462, 1
        %v1484 = vsel %vm175, %v1434, %v1464
        %v1485 = vsel %vm177, %v1484, %v1467
        %v1486 = vsel %vm179, %v1485, %v1470
        %v1487 = vsel %vm181, %v1486, %v1473
        %v1488 = vsel %vm183, %v1487, %v1476
        %v1489 = vsel %vm185, %v1488, %v1479
        %v1490 = vsel %vm187, %v1489, %v1482
        %v1491 = vtanh.pop %v1490
        %1492 = vst [vmem:[%s120 + $0xa8] sm:$0xff] %v1491
        %s1493 = sadd.s32 %s122, 176
        %s1494 = sld [smem:[#allocation3 + %s1493]]
        %s1495 = scalar_lea.vmem [#allocation4], %s1494
        %v1496 = vld [vmem:[%s1495] sm:$0x1]
        %s1497 = sadd.s32 %s122, 177
        %s1498 = sld [smem:[#allocation3 + %s1497]]
        %s1499 = scalar_lea.vmem [#allocation4], %s1498
        %v1500 = vld [vmem:[%s1499] sm:$0x1]
        %s1501 = sadd.s32 %s122, 178
        %s1502 = sld [smem:[#allocation3 + %s1501]]
        %s1503 = scalar_lea.vmem [#allocation4], %s1502
        %v1504 = vld [vmem:[%s1503] sm:$0x1]
        %s1505 = sadd.s32 %s122, 179
        %s1506 = sld [smem:[#allocation3 + %s1505]]
        %s1507 = scalar_lea.vmem [#allocation4], %s1506
        %v1508 = vld [vmem:[%s1507] sm:$0x1]
        %s1509 = sadd.s32 %s122, 180
        %s1510 = sld [smem:[#allocation3 + %s1509]]
        %s1511 = scalar_lea.vmem [#allocation4], %s1510
        %v1512 = vld [vmem:[%s1511] sm:$0x1]
        %s1513 = sadd.s32 %s122, 181
        %s1514 = sld [smem:[#allocation3 + %s1513]]
        %s1515 = scalar_lea.vmem [#allocation4], %s1514
        %v1516 = vld [vmem:[%s1515] sm:$0x1]
        %s1517 = sadd.s32 %s122, 182
        %s1518 = sld [smem:[#allocation3 + %s1517]]
        %s1519 = scalar_lea.vmem [#allocation4], %s1518
        %v1520 = vld [vmem:[%s1519] sm:$0x1]
        %s1521 = sadd.s32 %s122, 183
        %s1522 = sld [smem:[#allocation3 + %s1521]]
        %s1523 = scalar_lea.vmem [#allocation4], %s1522
        %v1524 = vld [vmem:[%s1523] sm:$0x1]
        %v1526 = vrot.slane %v1500, 7
        %v1529 = vrot.slane %v1504, 6
        %v1532 = vrot.slane %v1508, 5
        %v1535 = vrot.slane %v1512, 4
        %v1538 = vrot.slane %v1516, 3
        %v1541 = vrot.slane %v1520, 2
        %v1544 = vrot.slane %v1524, 1
        %v1546 = vsel %vm175, %v1496, %v1526
        %v1547 = vsel %vm177, %v1546, %v1529
        %v1548 = vsel %vm179, %v1547, %v1532
        %v1549 = vsel %vm181, %v1548, %v1535
        %v1550 = vsel %vm183, %v1549, %v1538
        %v1551 = vsel %vm185, %v1550, %v1541
        %v1552 = vsel %vm187, %v1551, %v1544
        %v1553 = vtanh.pop %v1552
        %1554 = vst [vmem:[%s120 + $0xb0] sm:$0xff] %v1553
        %s1555 = sadd.s32 %s122, 184
        %s1556 = sld [smem:[#allocation3 + %s1555]]
        %s1557 = scalar_lea.vmem [#allocation4], %s1556
        %v1558 = vld [vmem:[%s1557] sm:$0x1]
        %s1559 = sadd.s32 %s122, 185
        %s1560 = sld [smem:[#allocation3 + %s1559]]
        %s1561 = scalar_lea.vmem [#allocation4], %s1560
        %v1562 = vld [vmem:[%s1561] sm:$0x1]
        %s1563 = sadd.s32 %s122, 186
        %s1564 = sld [smem:[#allocation3 + %s1563]]
        %s1565 = scalar_lea.vmem [#allocation4], %s1564
        %v1566 = vld [vmem:[%s1565] sm:$0x1]
        %s1567 = sadd.s32 %s122, 187
        %s1568 = sld [smem:[#allocation3 + %s1567]]
        %s1569 = scalar_lea.vmem [#allocation4], %s1568
        %v1570 = vld [vmem:[%s1569] sm:$0x1]
        %s1571 = sadd.s32 %s122, 188
        %s1572 = sld [smem:[#allocation3 + %s1571]]
        %s1573 = scalar_lea.vmem [#allocation4], %s1572
        %v1574 = vld [vmem:[%s1573] sm:$0x1]
        %s1575 = sadd.s32 %s122, 189
        %s1576 = sld [smem:[#allocation3 + %s1575]]
        %s1577 = scalar_lea.vmem [#allocation4], %s1576
        %v1578 = vld [vmem:[%s1577] sm:$0x1]
        %s1579 = sadd.s32 %s122, 190
        %s1580 = sld [smem:[#allocation3 + %s1579]]
        %s1581 = scalar_lea.vmem [#allocation4], %s1580
        %v1582 = vld [vmem:[%s1581] sm:$0x1]
        %s1583 = sadd.s32 %s122, 191
        %s1584 = sld [smem:[#allocation3 + %s1583]]
        %s1585 = scalar_lea.vmem [#allocation4], %s1584
        %v1586 = vld [vmem:[%s1585] sm:$0x1]
        %v1588 = vrot.slane %v1562, 7
        %v1591 = vrot.slane %v1566, 6
        %v1594 = vrot.slane %v1570, 5
        %v1597 = vrot.slane %v1574, 4
        %v1600 = vrot.slane %v1578, 3
        %v1603 = vrot.slane %v1582, 2
        %v1606 = vrot.slane %v1586, 1
        %v1608 = vsel %vm175, %v1558, %v1588
        %v1609 = vsel %vm177, %v1608, %v1591
        %v1610 = vsel %vm179, %v1609, %v1594
        %v1611 = vsel %vm181, %v1610, %v1597
        %v1612 = vsel %vm183, %v1611, %v1600
        %v1613 = vsel %vm185, %v1612, %v1603
        %v1614 = vsel %vm187, %v1613, %v1606
        %v1615 = vtanh.pop %v1614
        %1616 = vst [vmem:[%s120 + $0xb8] sm:$0xff] %v1615
        %s1617 = sadd.s32 %s122, 192
        %s1618 = sld [smem:[#allocation3 + %s1617]]
        %s1619 = scalar_lea.vmem [#allocation4], %s1618
        %v1620 = vld [vmem:[%s1619] sm:$0x1]
        %s1621 = sadd.s32 %s122, 193
        %s1622 = sld [smem:[#allocation3 + %s1621]]
        %s1623 = scalar_lea.vmem [#allocation4], %s1622
        %v1624 = vld [vmem:[%s1623] sm:$0x1]
        %s1625 = sadd.s32 %s122, 194
        %s1626 = sld [smem:[#allocation3 + %s1625]]
        %s1627 = scalar_lea.vmem [#allocation4], %s1626
        %v1628 = vld [vmem:[%s1627] sm:$0x1]
        %s1629 = sadd.s32 %s122, 195
        %s1630 = sld [smem:[#allocation3 + %s1629]]
        %s1631 = scalar_lea.vmem [#allocation4], %s1630
        %v1632 = vld [vmem:[%s1631] sm:$0x1]
        %s1633 = sadd.s32 %s122, 196
        %s1634 = sld [smem:[#allocation3 + %s1633]]
        %s1635 = scalar_lea.vmem [#allocation4], %s1634
        %v1636 = vld [vmem:[%s1635] sm:$0x1]
        %s1637 = sadd.s32 %s122, 197
        %s1638 = sld [smem:[#allocation3 + %s1637]]
        %s1639 = scalar_lea.vmem [#allocation4], %s1638
        %v1640 = vld [vmem:[%s1639] sm:$0x1]
        %s1641 = sadd.s32 %s122, 198
        %s1642 = sld [smem:[#allocation3 + %s1641]]
        %s1643 = scalar_lea.vmem [#allocation4], %s1642
        %v1644 = vld [vmem:[%s1643] sm:$0x1]
        %s1645 = sadd.s32 %s122, 199
        %s1646 = sld [smem:[#allocation3 + %s1645]]
        %s1647 = scalar_lea.vmem [#allocation4], %s1646
        %v1648 = vld [vmem:[%s1647] sm:$0x1]
        %v1650 = vrot.slane %v1624, 7
        %v1653 = vrot.slane %v1628, 6
        %v1656 = vrot.slane %v1632, 5
        %v1659 = vrot.slane %v1636, 4
        %v1662 = vrot.slane %v1640, 3
        %v1665 = vrot.slane %v1644, 2
        %v1668 = vrot.slane %v1648, 1
        %v1670 = vsel %vm175, %v1620, %v1650
        %v1671 = vsel %vm177, %v1670, %v1653
        %v1672 = vsel %vm179, %v1671, %v1656
        %v1673 = vsel %vm181, %v1672, %v1659
        %v1674 = vsel %vm183, %v1673, %v1662
        %v1675 = vsel %vm185, %v1674, %v1665
        %v1676 = vsel %vm187, %v1675, %v1668
        %v1677 = vtanh.pop %v1676
        %1678 = vst [vmem:[%s120 + $0xc0] sm:$0xff] %v1677
        %s1679 = sadd.s32 %s122, 200
        %s1680 = sld [smem:[#allocation3 + %s1679]]
        %s1681 = scalar_lea.vmem [#allocation4], %s1680
        %v1682 = vld [vmem:[%s1681] sm:$0x1]
        %s1683 = sadd.s32 %s122, 201
        %s1684 = sld [smem:[#allocation3 + %s1683]]
        %s1685 = scalar_lea.vmem [#allocation4], %s1684
        %v1686 = vld [vmem:[%s1685] sm:$0x1]
        %s1687 = sadd.s32 %s122, 202
        %s1688 = sld [smem:[#allocation3 + %s1687]]
        %s1689 = scalar_lea.vmem [#allocation4], %s1688
        %v1690 = vld [vmem:[%s1689] sm:$0x1]
        %s1691 = sadd.s32 %s122, 203
        %s1692 = sld [smem:[#allocation3 + %s1691]]
        %s1693 = scalar_lea.vmem [#allocation4], %s1692
        %v1694 = vld [vmem:[%s1693] sm:$0x1]
        %s1695 = sadd.s32 %s122, 204
        %s1696 = sld [smem:[#allocation3 + %s1695]]
        %s1697 = scalar_lea.vmem [#allocation4], %s1696
        %v1698 = vld [vmem:[%s1697] sm:$0x1]
        %s1699 = sadd.s32 %s122, 205
        %s1700 = sld [smem:[#allocation3 + %s1699]]
        %s1701 = scalar_lea.vmem [#allocation4], %s1700
        %v1702 = vld [vmem:[%s1701] sm:$0x1]
        %s1703 = sadd.s32 %s122, 206
        %s1704 = sld [smem:[#allocation3 + %s1703]]
        %s1705 = scalar_lea.vmem [#allocation4], %s1704
        %v1706 = vld [vmem:[%s1705] sm:$0x1]
        %s1707 = sadd.s32 %s122, 207
        %s1708 = sld [smem:[#allocation3 + %s1707]]
        %s1709 = scalar_lea.vmem [#allocation4], %s1708
        %v1710 = vld [vmem:[%s1709] sm:$0x1]
        %v1712 = vrot.slane %v1686, 7
        %v1715 = vrot.slane %v1690, 6
        %v1718 = vrot.slane %v1694, 5
        %v1721 = vrot.slane %v1698, 4
        %v1724 = vrot.slane %v1702, 3
        %v1727 = vrot.slane %v1706, 2
        %v1730 = vrot.slane %v1710, 1
        %v1732 = vsel %vm175, %v1682, %v1712
        %v1733 = vsel %vm177, %v1732, %v1715
        %v1734 = vsel %vm179, %v1733, %v1718
        %v1735 = vsel %vm181, %v1734, %v1721
        %v1736 = vsel %vm183, %v1735, %v1724
        %v1737 = vsel %vm185, %v1736, %v1727
        %v1738 = vsel %vm187, %v1737, %v1730
        %v1739 = vtanh.pop %v1738
        %1740 = vst [vmem:[%s120 + $0xc8] sm:$0xff] %v1739
        %s1741 = sadd.s32 %s122, 208
        %s1742 = sld [smem:[#allocation3 + %s1741]]
        %s1743 = scalar_lea.vmem [#allocation4], %s1742
        %v1744 = vld [vmem:[%s1743] sm:$0x1]
        %s1745 = sadd.s32 %s122, 209
        %s1746 = sld [smem:[#allocation3 + %s1745]]
        %s1747 = scalar_lea.vmem [#allocation4], %s1746
        %v1748 = vld [vmem:[%s1747] sm:$0x1]
        %s1749 = sadd.s32 %s122, 210
        %s1750 = sld [smem:[#allocation3 + %s1749]]
        %s1751 = scalar_lea.vmem [#allocation4], %s1750
        %v1752 = vld [vmem:[%s1751] sm:$0x1]
        %s1753 = sadd.s32 %s122, 211
        %s1754 = sld [smem:[#allocation3 + %s1753]]
        %s1755 = scalar_lea.vmem [#allocation4], %s1754
        %v1756 = vld [vmem:[%s1755] sm:$0x1]
        %s1757 = sadd.s32 %s122, 212
        %s1758 = sld [smem:[#allocation3 + %s1757]]
        %s1759 = scalar_lea.vmem [#allocation4], %s1758
        %v1760 = vld [vmem:[%s1759] sm:$0x1]
        %s1761 = sadd.s32 %s122, 213
        %s1762 = sld [smem:[#allocation3 + %s1761]]
        %s1763 = scalar_lea.vmem [#allocation4], %s1762
        %v1764 = vld [vmem:[%s1763] sm:$0x1]
        %s1765 = sadd.s32 %s122, 214
        %s1766 = sld [smem:[#allocation3 + %s1765]]
        %s1767 = scalar_lea.vmem [#allocation4], %s1766
        %v1768 = vld [vmem:[%s1767] sm:$0x1]
        %s1769 = sadd.s32 %s122, 215
        %s1770 = sld [smem:[#allocation3 + %s1769]]
        %s1771 = scalar_lea.vmem [#allocation4], %s1770
        %v1772 = vld [vmem:[%s1771] sm:$0x1]
        %v1774 = vrot.slane %v1748, 7
        %v1777 = vrot.slane %v1752, 6
        %v1780 = vrot.slane %v1756, 5
        %v1783 = vrot.slane %v1760, 4
        %v1786 = vrot.slane %v1764, 3
        %v1789 = vrot.slane %v1768, 2
        %v1792 = vrot.slane %v1772, 1
        %v1794 = vsel %vm175, %v1744, %v1774
        %v1795 = vsel %vm177, %v1794, %v1777
        %v1796 = vsel %vm179, %v1795, %v1780
        %v1797 = vsel %vm181, %v1796, %v1783
        %v1798 = vsel %vm183, %v1797, %v1786
        %v1799 = vsel %vm185, %v1798, %v1789
        %v1800 = vsel %vm187, %v1799, %v1792
        %v1801 = vtanh.pop %v1800
        %1802 = vst [vmem:[%s120 + $0xd0] sm:$0xff] %v1801
        %s1803 = sadd.s32 %s122, 216
        %s1804 = sld [smem:[#allocation3 + %s1803]]
        %s1805 = scalar_lea.vmem [#allocation4], %s1804
        %v1806 = vld [vmem:[%s1805] sm:$0x1]
        %s1807 = sadd.s32 %s122, 217
        %s1808 = sld [smem:[#allocation3 + %s1807]]
        %s1809 = scalar_lea.vmem [#allocation4], %s1808
        %v1810 = vld [vmem:[%s1809] sm:$0x1]
        %s1811 = sadd.s32 %s122, 218
        %s1812 = sld [smem:[#allocation3 + %s1811]]
        %s1813 = scalar_lea.vmem [#allocation4], %s1812
        %v1814 = vld [vmem:[%s1813] sm:$0x1]
        %s1815 = sadd.s32 %s122, 219
        %s1816 = sld [smem:[#allocation3 + %s1815]]
        %s1817 = scalar_lea.vmem [#allocation4], %s1816
        %v1818 = vld [vmem:[%s1817] sm:$0x1]
        %s1819 = sadd.s32 %s122, 220
        %s1820 = sld [smem:[#allocation3 + %s1819]]
        %s1821 = scalar_lea.vmem [#allocation4], %s1820
        %v1822 = vld [vmem:[%s1821] sm:$0x1]
        %s1823 = sadd.s32 %s122, 221
        %s1824 = sld [smem:[#allocation3 + %s1823]]
        %s1825 = scalar_lea.vmem [#allocation4], %s1824
        %v1826 = vld [vmem:[%s1825] sm:$0x1]
        %s1827 = sadd.s32 %s122, 222
        %s1828 = sld [smem:[#allocation3 + %s1827]]
        %s1829 = scalar_lea.vmem [#allocation4], %s1828
        %v1830 = vld [vmem:[%s1829] sm:$0x1]
        %s1831 = sadd.s32 %s122, 223
        %s1832 = sld [smem:[#allocation3 + %s1831]]
        %s1833 = scalar_lea.vmem [#allocation4], %s1832
        %v1834 = vld [vmem:[%s1833] sm:$0x1]
        %v1836 = vrot.slane %v1810, 7
        %v1839 = vrot.slane %v1814, 6
        %v1842 = vrot.slane %v1818, 5
        %v1845 = vrot.slane %v1822, 4
        %v1848 = vrot.slane %v1826, 3
        %v1851 = vrot.slane %v1830, 2
        %v1854 = vrot.slane %v1834, 1
        %v1856 = vsel %vm175, %v1806, %v1836
        %v1857 = vsel %vm177, %v1856, %v1839
        %v1858 = vsel %vm179, %v1857, %v1842
        %v1859 = vsel %vm181, %v1858, %v1845
        %v1860 = vsel %vm183, %v1859, %v1848
        %v1861 = vsel %vm185, %v1860, %v1851
        %v1862 = vsel %vm187, %v1861, %v1854
        %v1863 = vtanh.pop %v1862
        %1864 = vst [vmem:[%s120 + $0xd8] sm:$0xff] %v1863
        %s1865 = sadd.s32 %s122, 224
        %s1866 = sld [smem:[#allocation3 + %s1865]]
        %s1867 = scalar_lea.vmem [#allocation4], %s1866
        %v1868 = vld [vmem:[%s1867] sm:$0x1]
        %s1869 = sadd.s32 %s122, 225
        %s1870 = sld [smem:[#allocation3 + %s1869]]
        %s1871 = scalar_lea.vmem [#allocation4], %s1870
        %v1872 = vld [vmem:[%s1871] sm:$0x1]
        %s1873 = sadd.s32 %s122, 226
        %s1874 = sld [smem:[#allocation3 + %s1873]]
        %s1875 = scalar_lea.vmem [#allocation4], %s1874
        %v1876 = vld [vmem:[%s1875] sm:$0x1]
        %s1877 = sadd.s32 %s122, 227
        %s1878 = sld [smem:[#allocation3 + %s1877]]
        %s1879 = scalar_lea.vmem [#allocation4], %s1878
        %v1880 = vld [vmem:[%s1879] sm:$0x1]
        %s1881 = sadd.s32 %s122, 228
        %s1882 = sld [smem:[#allocation3 + %s1881]]
        %s1883 = scalar_lea.vmem [#allocation4], %s1882
        %v1884 = vld [vmem:[%s1883] sm:$0x1]
        %s1885 = sadd.s32 %s122, 229
        %s1886 = sld [smem:[#allocation3 + %s1885]]
        %s1887 = scalar_lea.vmem [#allocation4], %s1886
        %v1888 = vld [vmem:[%s1887] sm:$0x1]
        %s1889 = sadd.s32 %s122, 230
        %s1890 = sld [smem:[#allocation3 + %s1889]]
        %s1891 = scalar_lea.vmem [#allocation4], %s1890
        %v1892 = vld [vmem:[%s1891] sm:$0x1]
        %s1893 = sadd.s32 %s122, 231
        %s1894 = sld [smem:[#allocation3 + %s1893]]
        %s1895 = scalar_lea.vmem [#allocation4], %s1894
        %v1896 = vld [vmem:[%s1895] sm:$0x1]
        %v1898 = vrot.slane %v1872, 7
        %v1901 = vrot.slane %v1876, 6
        %v1904 = vrot.slane %v1880, 5
        %v1907 = vrot.slane %v1884, 4
        %v1910 = vrot.slane %v1888, 3
        %v1913 = vrot.slane %v1892, 2
        %v1916 = vrot.slane %v1896, 1
        %v1918 = vsel %vm175, %v1868, %v1898
        %v1919 = vsel %vm177, %v1918, %v1901
        %v1920 = vsel %vm179, %v1919, %v1904
        %v1921 = vsel %vm181, %v1920, %v1907
        %v1922 = vsel %vm183, %v1921, %v1910
        %v1923 = vsel %vm185, %v1922, %v1913
        %v1924 = vsel %vm187, %v1923, %v1916
        %v1925 = vtanh.pop %v1924
        %1926 = vst [vmem:[%s120 + $0xe0] sm:$0xff] %v1925
        %s1927 = sadd.s32 %s122, 232
        %s1928 = sld [smem:[#allocation3 + %s1927]]
        %s1929 = scalar_lea.vmem [#allocation4], %s1928
        %v1930 = vld [vmem:[%s1929] sm:$0x1]
        %s1931 = sadd.s32 %s122, 233
        %s1932 = sld [smem:[#allocation3 + %s1931]]
        %s1933 = scalar_lea.vmem [#allocation4], %s1932
        %v1934 = vld [vmem:[%s1933] sm:$0x1]
        %s1935 = sadd.s32 %s122, 234
        %s1936 = sld [smem:[#allocation3 + %s1935]]
        %s1937 = scalar_lea.vmem [#allocation4], %s1936
        %v1938 = vld [vmem:[%s1937] sm:$0x1]
        %s1939 = sadd.s32 %s122, 235
        %s1940 = sld [smem:[#allocation3 + %s1939]]
        %s1941 = scalar_lea.vmem [#allocation4], %s1940
        %v1942 = vld [vmem:[%s1941] sm:$0x1]
        %s1943 = sadd.s32 %s122, 236
        %s1944 = sld [smem:[#allocation3 + %s1943]]
        %s1945 = scalar_lea.vmem [#allocation4], %s1944
        %v1946 = vld [vmem:[%s1945] sm:$0x1]
        %s1947 = sadd.s32 %s122, 237
        %s1948 = sld [smem:[#allocation3 + %s1947]]
        %s1949 = scalar_lea.vmem [#allocation4], %s1948
        %v1950 = vld [vmem:[%s1949] sm:$0x1]
        %s1951 = sadd.s32 %s122, 238
        %s1952 = sld [smem:[#allocation3 + %s1951]]
        %s1953 = scalar_lea.vmem [#allocation4], %s1952
        %v1954 = vld [vmem:[%s1953] sm:$0x1]
        %s1955 = sadd.s32 %s122, 239
        %s1956 = sld [smem:[#allocation3 + %s1955]]
        %s1957 = scalar_lea.vmem [#allocation4], %s1956
        %v1958 = vld [vmem:[%s1957] sm:$0x1]
        %v1960 = vrot.slane %v1934, 7
        %v1963 = vrot.slane %v1938, 6
        %v1966 = vrot.slane %v1942, 5
        %v1969 = vrot.slane %v1946, 4
        %v1972 = vrot.slane %v1950, 3
        %v1975 = vrot.slane %v1954, 2
        %v1978 = vrot.slane %v1958, 1
        %v1980 = vsel %vm175, %v1930, %v1960
        %v1981 = vsel %vm177, %v1980, %v1963
        %v1982 = vsel %vm179, %v1981, %v1966
        %v1983 = vsel %vm181, %v1982, %v1969
        %v1984 = vsel %vm183, %v1983, %v1972
        %v1985 = vsel %vm185, %v1984, %v1975
        %v1986 = vsel %vm187, %v1985, %v1978
        %v1987 = vtanh.pop %v1986
        %1988 = vst [vmem:[%s120 + $0xe8] sm:$0xff] %v1987
        %s1989 = sadd.s32 %s122, 240
        %s1990 = sld [smem:[#allocation3 + %s1989]]
        %s1991 = scalar_lea.vmem [#allocation4], %s1990
        %v1992 = vld [vmem:[%s1991] sm:$0x1]
        %s1993 = sadd.s32 %s122, 241
        %s1994 = sld [smem:[#allocation3 + %s1993]]
        %s1995 = scalar_lea.vmem [#allocation4], %s1994
        %v1996 = vld [vmem:[%s1995] sm:$0x1]
        %s1997 = sadd.s32 %s122, 242
        %s1998 = sld [smem:[#allocation3 + %s1997]]
        %s1999 = scalar_lea.vmem [#allocation4], %s1998
        %v2000 = vld [vmem:[%s1999] sm:$0x1]
        %s2001 = sadd.s32 %s122, 243
        %s2002 = sld [smem:[#allocation3 + %s2001]]
        %s2003 = scalar_lea.vmem [#allocation4], %s2002
        %v2004 = vld [vmem:[%s2003] sm:$0x1]
        %s2005 = sadd.s32 %s122, 244
        %s2006 = sld [smem:[#allocation3 + %s2005]]
        %s2007 = scalar_lea.vmem [#allocation4], %s2006
        %v2008 = vld [vmem:[%s2007] sm:$0x1]
        %s2009 = sadd.s32 %s122, 245
        %s2010 = sld [smem:[#allocation3 + %s2009]]
        %s2011 = scalar_lea.vmem [#allocation4], %s2010
        %v2012 = vld [vmem:[%s2011] sm:$0x1]
        %s2013 = sadd.s32 %s122, 246
        %s2014 = sld [smem:[#allocation3 + %s2013]]
        %s2015 = scalar_lea.vmem [#allocation4], %s2014
        %v2016 = vld [vmem:[%s2015] sm:$0x1]
        %s2017 = sadd.s32 %s122, 247
        %s2018 = sld [smem:[#allocation3 + %s2017]]
        %s2019 = scalar_lea.vmem [#allocation4], %s2018
        %v2020 = vld [vmem:[%s2019] sm:$0x1]
        %v2022 = vrot.slane %v1996, 7
        %v2025 = vrot.slane %v2000, 6
        %v2028 = vrot.slane %v2004, 5
        %v2031 = vrot.slane %v2008, 4
        %v2034 = vrot.slane %v2012, 3
        %v2037 = vrot.slane %v2016, 2
        %v2040 = vrot.slane %v2020, 1
        %v2042 = vsel %vm175, %v1992, %v2022
        %v2043 = vsel %vm177, %v2042, %v2025
        %v2044 = vsel %vm179, %v2043, %v2028
        %v2045 = vsel %vm181, %v2044, %v2031
        %v2046 = vsel %vm183, %v2045, %v2034
        %v2047 = vsel %vm185, %v2046, %v2037
        %v2048 = vsel %vm187, %v2047, %v2040
        %v2049 = vtanh.pop %v2048
        %2050 = vst [vmem:[%s120 + $0xf0] sm:$0xff] %v2049
        %s2051 = sadd.s32 %s122, 248
        %s2052 = sld [smem:[#allocation3 + %s2051]]
        %s2053 = scalar_lea.vmem [#allocation4], %s2052
        %v2054 = vld [vmem:[%s2053] sm:$0x1]
        %s2055 = sadd.s32 %s122, 249
        %s2056 = sld [smem:[#allocation3 + %s2055]]
        %s2057 = scalar_lea.vmem [#allocation4], %s2056
        %v2058 = vld [vmem:[%s2057] sm:$0x1]
        %s2059 = sadd.s32 %s122, 250
        %s2060 = sld [smem:[#allocation3 + %s2059]]
        %s2061 = scalar_lea.vmem [#allocation4], %s2060
        %v2062 = vld [vmem:[%s2061] sm:$0x1]
        %s2063 = sadd.s32 %s122, 251
        %s2064 = sld [smem:[#allocation3 + %s2063]]
        %s2065 = scalar_lea.vmem [#allocation4], %s2064
        %v2066 = vld [vmem:[%s2065] sm:$0x1]
        %s2067 = sadd.s32 %s122, 252
        %s2068 = sld [smem:[#allocation3 + %s2067]]
        %s2069 = scalar_lea.vmem [#allocation4], %s2068
        %v2070 = vld [vmem:[%s2069] sm:$0x1]
        %s2071 = sadd.s32 %s122, 253
        %s2072 = sld [smem:[#allocation3 + %s2071]]
        %s2073 = scalar_lea.vmem [#allocation4], %s2072
        %v2074 = vld [vmem:[%s2073] sm:$0x1]
        %s2075 = sadd.s32 %s122, 254
        %s2076 = sld [smem:[#allocation3 + %s2075]]
        %s2077 = scalar_lea.vmem [#allocation4], %s2076
        %v2078 = vld [vmem:[%s2077] sm:$0x1]
        %s2079 = sadd.s32 %s122, 255
        %s2080 = sld [smem:[#allocation3 + %s2079]]
        %s2081 = scalar_lea.vmem [#allocation4], %s2080
        %v2082 = vld [vmem:[%s2081] sm:$0x1]
        %v2084 = vrot.slane %v2058, 7
        %v2087 = vrot.slane %v2062, 6
        %v2090 = vrot.slane %v2066, 5
        %v2093 = vrot.slane %v2070, 4
        %v2096 = vrot.slane %v2074, 3
        %v2099 = vrot.slane %v2078, 2
        %v2102 = vrot.slane %v2082, 1
        %v2104 = vsel %vm175, %v2054, %v2084
        %v2105 = vsel %vm177, %v2104, %v2087
        %v2106 = vsel %vm179, %v2105, %v2090
        %v2107 = vsel %vm181, %v2106, %v2093
        %v2108 = vsel %vm183, %v2107, %v2096
        %v2109 = vsel %vm185, %v2108, %v2099
        %v2110 = vsel %vm187, %v2109, %v2102
        %v2111 = vtanh.pop %v2110
        %2112 = vst [vmem:[%s120 + $0xf8] sm:$0xff] %v2111
        %s2113 = sand.u32 %s54, 1
        %s2114 = scalar_lea.sflag [#allocation6], %s2113
        %s2115 = sand.u32 %s54, 1
        %s2116 = smul.addr %s2115, 256
        %s2117 = scalar_lea.vmem [#allocation7], %s2116
        // Predicated region
        $region29: #{tpu_custom_call.1} parent=23 // pred_check
          %p2118 = pneg %p64
        $region30: #{tpu_custom_call.1} parent=23 // pred_check_branch
          %2120 = sbr.rel (%p2118) target = $region32
        $region31: #{tpu_custom_call.1} parent=23 // pred_region
          %s2121 = smul.u32 32, %s25
          %2123 = vsyncadd %s2114, 0
          %s2124 = smul.addr %s2121, 8
          %s2125 = scalar_lea.hbm %s2, %s2124
          %s2126 = sshll.u32 %s2117, 4
          %s2127 = int_to_ptr.vmem [resolvable:$true] %s2126
          %s2128 = sshll.u32 %s2125, 4
          %s2129 = int_to_ptr.hbm [resolvable:$true] %s2128
          %2134 = dma.vmem_to_hbm [thread:$0]  %s2127, 4096, %s2129, %s2114, 128, 128, 8
        $region32: #{tpu_custom_call.1} parent=23 // pred_fallthru
          _
      $region24: #{tpu_custom_call.1} parent=5 // pred_fallthru
        _
      %p2135 = scmp.le.s32.totalorder 2, %s20
      // Predicated region
      $region33: #{tpu_custom_call.1} parent=5 // pred_check
        %p2136 = pneg %p2135
      $region34: #{tpu_custom_call.1} parent=5 // pred_check_branch
        %2138 = sbr.rel (%p2136) target = $region36
      $region35: #{tpu_custom_call.1} parent=5 // pred_region
        %s2139 = ssub.s32 %s20, 2
        // Predicated region
        $region37: #{tpu_custom_call.1} parent=35 // pred_check
          %p2140 = pneg %p70
        $region38: #{tpu_custom_call.1} parent=35 // pred_check_branch
          %2142 = sbr.rel (%p2140) target = $region40
        $region39: #{tpu_custom_call.1} parent=35 // pred_region
          %s2143 = sand.u32 %s55, 1
          %s2144 = scalar_lea.sflag [#allocation6], %s2143
          %s2145 = sand.u32 %s55, 1
          %s2146 = smul.addr %s2145, 256
          %s2147 = scalar_lea.vmem [#allocation7], %s2146
          %2149 = dma.done %s2144, 4096
        $region40: #{tpu_custom_call.1} parent=35 // pred_fallthru
          _
      $region36: #{tpu_custom_call.1} parent=5 // pred_fallthru
        _
    $region6: #{tpu_custom_call.1} parent=1 // loop_footer
      %s24 = sadd.s32 1, %s20
    $region7: #{tpu_custom_call.1} parent=1 // loop_footer_branch
      %19 = sbr.rel target = $region3
    $region8: #{tpu_custom_call.1} parent=1 // loop_exit
      _
    %2150 = vsyncpa [#allocation5], 1
    %s2151 = scalar_lea.sflag [#allocation5], 1
    %2152 = vsyncpa %s2151, 1
    %2153 = vsyncpa [#allocation6], 1
    %s2154 = scalar_lea.sflag [#allocation6], 1
    %2155 = vsyncpa %s2154, 1

</llo_original>
